<compile_context>
chip_gen: v5e
topology: v5e:2x2
jax: 0.10.0
libtpu: 0.0.40
codegen_flags: <defaults>
</compile_context>

<pallas_src>
import jax
import jax.numpy as jnp
from jax import lax
from jax.experimental import pallas as pl
from jax.experimental.pallas import tpu as pltpu

IN_FEATURES = 256 * 256 * 3    # 196608
OUT_FEATURES = 2
LANES = 128
SUBLANES = 8
VREG = SUBLANES * LANES        # 1024 f32 elements per (8, 128) vreg


def _svm_kernel(x_ref, w_ref, bias_ref, o_ref, acc_ref):
    """One (half, k) grid step of out[b, n] = sum_k x[b, k] * w[n, k] (+ bias).

    x_ref:    (B, c_blk, 8, 128)   activation chunk for this step
    w_ref:    (N, c_blk, 8, 128)   weight chunk for this step
    bias_ref: (1, N)               bias (added on half 0 only)
    o_ref:    (1, B, N)            per-half partial output
    acc_ref:  (B, N, 8, 128)       f32 VPU accumulator (VMEM scratch)
    """
    h = pl.program_id(0)   # K-half (parallel axis; one per TensorCore on v7x)
    k = pl.program_id(1)   # reduction steps within the half

    @pl.when(k == 0)
    def _():
        acc_ref[...] = jnp.zeros_like(acc_ref)

    n_batch = x_ref.shape[0]
    n_out = w_ref.shape[0]

    # Pure-VPU multiply-accumulate: for each (b, n) pair multiply the dense
    # (c_blk, 8, 128) chunk elementwise and vadd-reduce over the leading axis
    # onto one (8, 128) accumulator tile.  No MXU, no transposes.
    for b in range(n_batch):
        xb = x_ref[b]                               # (c_blk, 8, 128)
        for n in range(n_out):
            acc_ref[b, n] += (xb * w_ref[n]).sum(axis=0)

    @pl.when(k == pl.num_programs(1) - 1)
    def _():
        acc = acc_ref[...]                          # (B, N, 8, 128)
        tot = acc.sum(axis=-1).sum(axis=-1)         # (B, N): one xlane reduce
        # Fused bias add; only half 0 contributes it so the per-half partial
        # outputs sum to the correct result.
        bias_term = jnp.where(h == 0, bias_ref[...], 0.0)   # (1, N)
        o_ref[0] = tot + bias_term                  # (B, N)


def svm_forward(x, weight, bias, *, tk=IN_FEATURES // 2):
    """SVM.forward: flatten NCHW input, apply fc = Linear(196608, 2).

    Args:
      x:      (B, 3, 256, 256) float32
      weight: (OUT_FEATURES, IN_FEATURES) float32  (PyTorch nn.Linear layout)
      bias:   (OUT_FEATURES,) float32
      tk:     K elements processed per grid step (per half); multiple of 1024.
    Returns:
      (B, OUT_FEATURES) float32
    """
    B = x.shape[0]
    K = IN_FEATURES
    N = OUT_FEATURES
    assert x.ndim == 4 and x.shape[1:] == (3, 256, 256)
    assert weight.shape == (N, K) and bias.shape == (N,)
    assert tk % VREG == 0, "K tile must be a whole number of (8,128) vregs"
    assert (K // 2) % tk == 0, "each K-half must be a whole number of tiles"

    c_blk = tk // VREG             # (8,128) chunks per grid step
    n_chunks = K // VREG           # total chunks along K
    nk = (K // 2) // tk            # reduction steps per half (default: 1)

    # Free row-major relabels of contiguous HBM (no data movement).
    x4 = x.reshape(B, n_chunks, SUBLANES, LANES)
    w4 = weight.reshape(N, n_chunks, SUBLANES, LANES)
    bias2 = bias.reshape(1, N)

    partials = pl.pallas_call(
        _svm_kernel,
        out_shape=jax.ShapeDtypeStruct((2, B, N), jnp.float32),
        grid_spec=pltpu.PrefetchScalarGridSpec(
            num_scalar_prefetch=0,
            grid=(2, nk),
            in_specs=[
                # Dense activation chunk: no sublane padding, ~tk*B*4 bytes.
                pl.BlockSpec((B, c_blk, SUBLANES, LANES),
                             lambda h, k: (0, h * nk + k, 0, 0)),
                # Dense weight chunk, same K window.
                pl.BlockSpec((N, c_blk, SUBLANES, LANES),
                             lambda h, k: (0, h * nk + k, 0, 0)),
                # Tiny bias, same block every step.
                pl.BlockSpec((1, N), lambda h, k: (0, 0)),
            ],
            # One partial output block per K-half; resident across k (inner
            # reduction axis), written once in the epilogue.
            out_specs=pl.BlockSpec((1, B, N), lambda h, k: (h, 0, 0)),
            scratch_shapes=[pltpu.VMEM((B, N, SUBLANES, LANES), jnp.float32)],
        ),
        compiler_params=pltpu.CompilerParams(
            dimension_semantics=("parallel", "arbitrary"),
        ),
    )(x4, w4, bias2)

    # Combine the two K-halves (tiny (B, 2) add; bias already fused in-kernel).
    return partials[0] + partials[1]


if __name__ == "__main__":
    key = jax.random.PRNGKey(0)
    k_x, k_w, k_b = jax.random.split(key, 3)

    B = 2
    # The module hardcodes in_features = 3*256*256, so the input must be
    # (B, 3, 256, 256) for the flatten + Linear to be well-defined.
    x = jax.random.normal(k_x, (B, 3, 256, 256), dtype=jnp.float32)

    # Deterministic parameter init (uniform, ~ PyTorch nn.Linear default scale).
    bound = 1.0 / jnp.sqrt(jnp.float32(IN_FEATURES))
    weight = jax.random.uniform(
        k_w, (OUT_FEATURES, IN_FEATURES), minval=-bound, maxval=bound,
        dtype=jnp.float32)
    bias = jax.random.uniform(
        k_b, (OUT_FEATURES,), minval=-bound, maxval=bound, dtype=jnp.float32)

    fwd = jax.jit(svm_forward)
    out = jax.block_until_ready(fwd(x, weight, bias))

    # Sanity check against a full-precision plain-JAX reference.
    ref = jnp.matmul(x.reshape(B, -1), weight.T,
                     precision=lax.Precision.HIGHEST) + bias
    assert out.shape == (B, OUT_FEATURES)
    assert jnp.allclose(out, ref, atol=1e-3, rtol=1e-3)

    print("KERNEL_OK")
</pallas_src>

<mosaic_0001>
module attributes {stable_mosaic.version = 11 : i64} {
  func.func @_svm_kernel(%arg0: i32, %arg1: i32, %arg2: memref<2x96x8x128xf32, #tpu.memory_space<vmem>>, %arg3: memref<2x96x8x128xf32, #tpu.memory_space<vmem>>, %arg4: memref<1x2xf32, #tpu.memory_space<vmem>>, %arg5: memref<1x2x2xf32, #tpu.memory_space<vmem>>, %arg6: memref<2x2x8x128xf32, #tpu.memory_space<vmem>>) attributes {dimension_semantics = [#tpu.dimension_semantics<parallel>, #tpu.dimension_semantics<arbitrary>], iteration_bounds = array<i64: 2, 1>, scalar_prefetch = 0 : i64, scratch_operands = 1 : i64, tpu.core_type = #tpu.core_type<tc>, window_params = [{transform_indices = @transform_0, window_bounds = array<i64: 2, 96, 8, 128>}, {transform_indices = @transform_1, window_bounds = array<i64: 2, 96, 8, 128>}, {pipeline_mode = #tpu.pipeline_mode<synchronous>, transform_indices = @transform_2, window_bounds = array<i64: 1, 2>}, {transform_indices = @transform_3, window_bounds = array<i64: 1, 2, 2>}]} {
    %c0_i32 = arith.constant 0 : i32
    %0 = arith.cmpi eq, %arg1, %c0_i32 : i32
    %1 = arith.extui %0 : i1 to i32
    %c0_i32_0 = arith.constant 0 : i32
    %2 = arith.cmpi ne, %1, %c0_i32_0 : i32
    scf.if %2 {
      %cst_60 = arith.constant 0.000000e+00 : f32
      %50 = vector.broadcast %cst_60 : f32 to vector<2x2x8x128xf32>
      %c0_61 = arith.constant 0 : index
      %c0_62 = arith.constant 0 : index
      %c0_63 = arith.constant 0 : index
      %c0_64 = arith.constant 0 : index
      %51 = vector.load %arg6[%c0_61, %c0_62, %c0_63, %c0_64] : memref<2x2x8x128xf32, #tpu.memory_space<vmem>>, vector<2x2x8x128xf32>
      tpu.vector_store %arg6[%c0_61, %c0_62, %c0_63, %c0_64], %50 {strides = array<i32>} : memref<2x2x8x128xf32, #tpu.memory_space<vmem>>, vector<2x2x8x128xf32>,
    } else {
    }
    %c0 = arith.constant 0 : index
    %c0_1 = arith.constant 0 : index
    %c0_2 = arith.constant 0 : index
    %c0_3 = arith.constant 0 : index
    %3 = vector.load %arg2[%c0, %c0_1, %c0_2, %c0_3] : memref<2x96x8x128xf32, #tpu.memory_space<vmem>>, vector<1x96x8x128xf32>
    %4 = vector.shape_cast %3 : vector<1x96x8x128xf32> to vector<96x8x128xf32>
    %c0_4 = arith.constant 0 : index
    %c0_5 = arith.constant 0 : index
    %c0_6 = arith.constant 0 : index
    %c0_7 = arith.constant 0 : index
    %5 = vector.load %arg6[%c0_4, %c0_5, %c0_6, %c0_7] : memref<2x2x8x128xf32, #tpu.memory_space<vmem>>, vector<1x1x8x128xf32>
    %6 = vector.shape_cast %5 : vector<1x1x8x128xf32> to vector<8x128xf32>
    %c0_8 = arith.constant 0 : index
    %c0_9 = arith.constant 0 : index
    %c0_10 = arith.constant 0 : index
    %c0_11 = arith.constant 0 : index
    %7 = vector.load %arg3[%c0_8, %c0_9, %c0_10, %c0_11] : memref<2x96x8x128xf32, #tpu.memory_space<vmem>>, vector<1x96x8x128xf32>
    %8 = vector.shape_cast %7 : vector<1x96x8x128xf32> to vector<96x8x128xf32>
    %9 = arith.mulf %4, %8 : vector<96x8x128xf32>
    %cst = arith.constant dense<0.000000e+00> : vector<8x128xf32>
    %10 = vector.multi_reduction <add>, %9, %cst [0] : vector<96x8x128xf32> to vector<8x128xf32>
    %11 = arith.addf %6, %10 : vector<8x128xf32>
    %c0_12 = arith.constant 0 : index
    %c0_13 = arith.constant 0 : index
    %c0_14 = arith.constant 0 : index
    %c0_15 = arith.constant 0 : index
    %12 = vector.load %arg6[%c0_12, %c0_13, %c0_14, %c0_15] : memref<2x2x8x128xf32, #tpu.memory_space<vmem>>, vector<1x1x8x128xf32>
    %13 = vector.shape_cast %12 : vector<1x1x8x128xf32> to vector<8x128xf32>
    %14 = vector.shape_cast %11 : vector<8x128xf32> to vector<1x1x8x128xf32>
    tpu.vector_store %arg6[%c0_12, %c0_13, %c0_14, %c0_15], %14 {strides = array<i32>} : memref<2x2x8x128xf32, #tpu.memory_space<vmem>>, vector<1x1x8x128xf32>,
    %c0_16 = arith.constant 0 : index
    %c1 = arith.constant 1 : index
    %c0_17 = arith.constant 0 : index
    %c0_18 = arith.constant 0 : index
    %15 = vector.load %arg6[%c0_16, %c1, %c0_17, %c0_18] : memref<2x2x8x128xf32, #tpu.memory_space<vmem>>, vector<1x1x8x128xf32>
    %16 = vector.shape_cast %15 : vector<1x1x8x128xf32> to vector<8x128xf32>
    %c1_19 = arith.constant 1 : index
    %c0_20 = arith.constant 0 : index
    %c0_21 = arith.constant 0 : index
    %c0_22 = arith.constant 0 : index
    %17 = vector.load %arg3[%c1_19, %c0_20, %c0_21, %c0_22] : memref<2x96x8x128xf32, #tpu.memory_space<vmem>>, vector<1x96x8x128xf32>
    %18 = vector.shape_cast %17 : vector<1x96x8x128xf32> to vector<96x8x128xf32>
    %19 = arith.mulf %4, %18 : vector<96x8x128xf32>
    %cst_23 = arith.constant dense<0.000000e+00> : vector<8x128xf32>
    %20 = vector.multi_reduction <add>, %19, %cst_23 [0] : vector<96x8x128xf32> to vector<8x128xf32>
    %21 = arith.addf %16, %20 : vector<8x128xf32>
    %c0_24 = arith.constant 0 : index
    %c1_25 = arith.constant 1 : index
    %c0_26 = arith.constant 0 : index
    %c0_27 = arith.constant 0 : index
    %22 = vector.load %arg6[%c0_24, %c1_25, %c0_26, %c0_27] : memref<2x2x8x128xf32, #tpu.memory_space<vmem>>, vector<1x1x8x128xf32>
    %23 = vector.shape_cast %22 : vector<1x1x8x128xf32> to vector<8x128xf32>
    %24 = vector.shape_cast %21 : vector<8x128xf32> to vector<1x1x8x128xf32>
    tpu.vector_store %arg6[%c0_24, %c1_25, %c0_26, %c0_27], %24 {strides = array<i32>} : memref<2x2x8x128xf32, #tpu.memory_space<vmem>>, vector<1x1x8x128xf32>,
    %c1_28 = arith.constant 1 : index
    %c0_29 = arith.constant 0 : index
    %c0_30 = arith.constant 0 : index
    %c0_31 = arith.constant 0 : index
    %25 = vector.load %arg2[%c1_28, %c0_29, %c0_30, %c0_31] : memref<2x96x8x128xf32, #tpu.memory_space<vmem>>, vector<1x96x8x128xf32>
    %26 = vector.shape_cast %25 : vector<1x96x8x128xf32> to vector<96x8x128xf32>
    %c1_32 = arith.constant 1 : index
    %c0_33 = arith.constant 0 : index
    %c0_34 = arith.constant 0 : index
    %c0_35 = arith.constant 0 : index
    %27 = vector.load %arg6[%c1_32, %c0_33, %c0_34, %c0_35] : memref<2x2x8x128xf32, #tpu.memory_space<vmem>>, vector<1x1x8x128xf32>
    %28 = vector.shape_cast %27 : vector<1x1x8x128xf32> to vector<8x128xf32>
    %c0_36 = arith.constant 0 : index
    %c0_37 = arith.constant 0 : index
    %c0_38 = arith.constant 0 : index
    %c0_39 = arith.constant 0 : index
    %29 = vector.load %arg3[%c0_36, %c0_37, %c0_38, %c0_39] : memref<2x96x8x128xf32, #tpu.memory_space<vmem>>, vector<1x96x8x128xf32>
    %30 = vector.shape_cast %29 : vector<1x96x8x128xf32> to vector<96x8x128xf32>
    %31 = arith.mulf %26, %30 : vector<96x8x128xf32>
    %cst_40 = arith.constant dense<0.000000e+00> : vector<8x128xf32>
    %32 = vector.multi_reduction <add>, %31, %cst_40 [0] : vector<96x8x128xf32> to vector<8x128xf32>
    %33 = arith.addf %28, %32 : vector<8x128xf32>
    %c1_41 = arith.constant 1 : index
    %c0_42 = arith.constant 0 : index
    %c0_43 = arith.constant 0 : index
    %c0_44 = arith.constant 0 : index
    %34 = vector.load %arg6[%c1_41, %c0_42, %c0_43, %c0_44] : memref<2x2x8x128xf32, #tpu.memory_space<vmem>>, vector<1x1x8x128xf32>
    %35 = vector.shape_cast %34 : vector<1x1x8x128xf32> to vector<8x128xf32>
    %36 = vector.shape_cast %33 : vector<8x128xf32> to vector<1x1x8x128xf32>
    tpu.vector_store %arg6[%c1_41, %c0_42, %c0_43, %c0_44], %36 {strides = array<i32>} : memref<2x2x8x128xf32, #tpu.memory_space<vmem>>, vector<1x1x8x128xf32>,
    %c1_45 = arith.constant 1 : index
    %c1_46 = arith.constant 1 : index
    %c0_47 = arith.constant 0 : index
    %c0_48 = arith.constant 0 : index
    %37 = vector.load %arg6[%c1_45, %c1_46, %c0_47, %c0_48] : memref<2x2x8x128xf32, #tpu.memory_space<vmem>>, vector<1x1x8x128xf32>
    %38 = vector.shape_cast %37 : vector<1x1x8x128xf32> to vector<8x128xf32>
    %c1_49 = arith.constant 1 : index
    %c0_50 = arith.constant 0 : index
    %c0_51 = arith.constant 0 : index
    %c0_52 = arith.constant 0 : index
    %39 = vector.load %arg3[%c1_49, %c0_50, %c0_51, %c0_52] : memref<2x96x8x128xf32, #tpu.memory_space<vmem>>, vector<1x96x8x128xf32>
    %40 = vector.shape_cast %39 : vector<1x96x8x128xf32> to vector<96x8x128xf32>
    %41 = arith.mulf %26, %40 : vector<96x8x128xf32>
    %cst_53 = arith.constant dense<0.000000e+00> : vector<8x128xf32>
    %42 = vector.multi_reduction <add>, %41, %cst_53 [0] : vector<96x8x128xf32> to vector<8x128xf32>
    %43 = arith.addf %38, %42 : vector<8x128xf32>
    %c1_54 = arith.constant 1 : index
    %c1_55 = arith.constant 1 : index
    %c0_56 = arith.constant 0 : index
    %c0_57 = arith.constant 0 : index
    %44 = vector.load %arg6[%c1_54, %c1_55, %c0_56, %c0_57] : memref<2x2x8x128xf32, #tpu.memory_space<vmem>>, vector<1x1x8x128xf32>
    %45 = vector.shape_cast %44 : vector<1x1x8x128xf32> to vector<8x128xf32>
    %46 = vector.shape_cast %43 : vector<8x128xf32> to vector<1x1x8x128xf32>
    tpu.vector_store %arg6[%c1_54, %c1_55, %c0_56, %c0_57], %46 {strides = array<i32>} : memref<2x2x8x128xf32, #tpu.memory_space<vmem>>, vector<1x1x8x128xf32>,
    %c0_i32_58 = arith.constant 0 : i32
    %47 = arith.cmpi eq, %arg1, %c0_i32_58 : i32
    %48 = arith.extui %47 : i1 to i32
    %c0_i32_59 = arith.constant 0 : i32
    %49 = arith.cmpi ne, %48, %c0_i32_59 : i32
    scf.if %49 {
      %c0_60 = arith.constant 0 : index
      %c0_61 = arith.constant 0 : index
      %c0_62 = arith.constant 0 : index
      %c0_63 = arith.constant 0 : index
      %50 = vector.load %arg6[%c0_60, %c0_61, %c0_62, %c0_63] : memref<2x2x8x128xf32, #tpu.memory_space<vmem>>, vector<2x2x8x128xf32>
      %cst_64 = arith.constant dense<0.000000e+00> : vector<2x2x8xf32>
      %51 = vector.multi_reduction <add>, %50, %cst_64 [3] : vector<2x2x8x128xf32> to vector<2x2x8xf32>
      %cst_65 = arith.constant dense<0.000000e+00> : vector<2x2xf32>
      %52 = vector.multi_reduction <add>, %51, %cst_65 [2] : vector<2x2x8xf32> to vector<2x2xf32>
      %c0_i32_66 = arith.constant 0 : i32
      %53 = arith.cmpi eq, %arg0, %c0_i32_66 : i32
      %c0_67 = arith.constant 0 : index
      %c0_68 = arith.constant 0 : index
      %54 = vector.load %arg4[%c0_67, %c0_68] : memref<1x2xf32, #tpu.memory_space<vmem>>, vector<1x2xf32>
      %cst_69 = arith.constant 0.000000e+00 : f32
      %55 = vector.broadcast %cst_69 : f32 to vector<1x2xf32>
      %56 = arith.select %53, %54, %55 : vector<1x2xf32>
      %57 = vector.broadcast %56 : vector<1x2xf32> to vector<2x2xf32>
      %58 = arith.addf %52, %57 : vector<2x2xf32>
      %c0_70 = arith.constant 0 : index
      %c0_71 = arith.constant 0 : index
      %c0_72 = arith.constant 0 : index
      %59 = vector.load %arg5[%c0_70, %c0_71, %c0_72] : memref<1x2x2xf32, #tpu.memory_space<vmem>>, vector<1x2x2xf32>
      %60 = vector.shape_cast %59 : vector<1x2x2xf32> to vector<2x2xf32>
      %61 = vector.shape_cast %58 : vector<2x2xf32> to vector<1x2x2xf32>
      tpu.vector_store %arg5[%c0_70, %c0_71, %c0_72], %61 {strides = array<i32>} : memref<1x2x2xf32, #tpu.memory_space<vmem>>, vector<1x2x2xf32>,
    } else {
    }
    return
  }
  func.func @transform_0(%arg0: i32, %arg1: i32) -> (i32, i32, i32, i32) {
    %c1_i32 = arith.constant 1 : i32
    %0 = arith.muli %arg0, %c1_i32 : i32
    %1 = arith.addi %0, %arg1 : i32
    %c0_i32 = arith.constant 0 : i32
    %c0_i32_0 = arith.constant 0 : i32
    %c0_i32_1 = arith.constant 0 : i32
    %c0_i32_2 = arith.constant 0 : i32
    return %c0_i32, %1, %c0_i32_0, %c0_i32_1 : i32, i32, i32, i32
  }
  func.func @transform_1(%arg0: i32, %arg1: i32) -> (i32, i32, i32, i32) {
    %c1_i32 = arith.constant 1 : i32
    %0 = arith.muli %arg0, %c1_i32 : i32
    %1 = arith.addi %0, %arg1 : i32
    %c0_i32 = arith.constant 0 : i32
    %c0_i32_0 = arith.constant 0 : i32
    %c0_i32_1 = arith.constant 0 : i32
    %c0_i32_2 = arith.constant 0 : i32
    return %c0_i32, %1, %c0_i32_0, %c0_i32_1 : i32, i32, i32, i32
  }
  func.func @transform_2(%arg0: i32, %arg1: i32) -> (i32, i32) {
    %c0_i32 = arith.constant 0 : i32
    %c0_i32_0 = arith.constant 0 : i32
    %c0_i32_1 = arith.constant 0 : i32
    return %c0_i32, %c0_i32_0 : i32, i32
  }
  func.func @transform_3(%arg0: i32, %arg1: i32) -> (i32, i32, i32) {
    %c0_i32 = arith.constant 0 : i32
    %c0_i32_0 = arith.constant 0 : i32
    %c0_i32_1 = arith.constant 0 : i32
    return %arg0, %c0_i32, %c0_i32_0 : i32, i32, i32
  }
}

</mosaic_0001>

<llo_original>
// kernel: svm_forward.1
$region0: #{svm_forward.1}
  #allocation0 [shape = 'u32[]', space=smem, size = 0x4, offset = 0x4, fixed_abs, tag = 'smem constant byte address 0x4 - core index']
  #allocation1 [shape = 'u32[72,128]{1,0:T(1,128)}', space=vmem, size = 0x9000, scoped, tag = 'internal scratch']
  #allocation2 [shape = 'f32[2,2,8,128]{3,2,1,0:T(8,128)}', space=vmem, size = 0x4000, scoped, tag = 'scratch operand']
  %s0 = inlined_call_operand.vmem [shape: f32[2,192,8,128], index: 0, kind: input, shape index: {}]
  %s1 = inlined_call_operand.vmem [shape: f32[2,192,8,128], index: 1, kind: input, shape index: {}]
  %s2 = inlined_call_operand.vmem [shape: f32[1,2], index: 2, kind: input, shape index: {}]
  %s3 = inlined_call_operand.vmem [shape: f32[2,2,2], index: 3, kind: output, shape index: {}]
  %s4 = sld [smem:[#allocation0]]
  $region129: #{svm_forward.1} parent=0
    _
  %s6 = ssub.s32 1, %s4
  %s7 = scalar_select 0, %s6, %s4
  $region1: #{svm_forward.1} parent=0
    #allocation3 [shape = 'u8[1572864]{0}', space=vmem, size = 0x180000, scoped, tag = 'input window, operand 0']
    #allocation4 [shape = 'u8[1572864]{0}', space=vmem, size = 0x180000, scoped, tag = 'input window, operand 1']
    loop: start=0, step=1, limit=4
    $region2: #{svm_forward.1} parent=1 // loop_pre_header
      _
    $region3: #{svm_forward.1} parent=1 // loop_header
      %s9 = sphi 0, %s13
      %p10 = scmp.ge.s32.totalorder %s9, 4
      %s16 = sphi 0, %s28
      %s17 = sphi 0, %s24
      %s18 = sphi 0, %s16
      %s19 = sphi 0, %s17
      %s20 = sphi 0, %s18
      %s21 = sphi 0, %s19
      %s33 = sphi 0, %s35
      %s36 = sphi 0, %s33
      %s37 = sphi 0, %s36
      %s53 = sphi 0, %s37
      %s61 = sphi 0, %s63
      %s64 = sphi 0, %s61
      %s65 = sphi 0, %s64
      %s81 = sphi 0, %s65
      %s85 = sphi 0, %s85
      %s87 = sphi 0, %s85
      %s88 = sphi 0, %s87
      %s102 = sphi 0, %s88
      %s108 = sphi 0, %s110
      %s111 = sphi 0, %s108
      %s112 = sphi 0, %s111
      %s128 = sphi 0, %s112
    $region4: #{svm_forward.1} parent=1 // loop_header_branch
      %12 = sbr.rel (%p10) target = $region8
    $region5: #{svm_forward.1} parent=1 // loop_body
      %s14 = ssub.s32 %s9, 1
      %s15 = ssub.s32 %s9, 2
      %s22 = sadd.s32 1, %s17
      %p23 = scmp.ge.s32.totalorder %s22, 1
      %s24 = scalar_select %p23, 0, %s22
      %s25 = sadd.s32 1, %s16
      %s26 = scalar_select %p23, %s25, %s16
      %p27 = scmp.ge.s32.totalorder %s26, 2
      %s28 = scalar_select %p27, 0, %s26
      %s29 = sadd.s32 %s16, %s17
      %s30 = sadd.s32 %s28, %s24
      %s31 = ssub.s32 %s29, %s30
      %p32 = scmp.eq.s32.totalorder %s31, 0
      %s34 = sadd.s32 %s33, 1
      %s35 = scalar_select %p32, %s33, %s34
      %p38 = pneg %p32
      %p39 = scmp.eq.s32.totalorder %s9, 1
      %p40 = por %p38, %p39
      %p41 = scmp.ne.s32.totalorder %s33, %s36
      %p42 = scmp.eq.s32.totalorder %s9, 0
      %p43 = por %p41, %p42
      %p44 = scmp.ne.s32.totalorder %s33, %s36
      %p45 = scmp.eq.s32.totalorder %s14, 1
      %p46 = por %p44, %p45
      %p47 = scmp.ne.s32.totalorder %s36, %s37
      %p48 = scmp.eq.s32.totalorder %s14, 0
      %p49 = por %p47, %p48
      %p50 = scmp.ne.s32.totalorder %s36, %s37
      %p51 = scmp.eq.s32.totalorder %s15, 1
      %p52 = por %p50, %p51
      %p54 = scmp.ne.s32.totalorder %s37, %s53
      %p55 = scmp.eq.s32.totalorder %s15, 0
      %p56 = por %p54, %p55
      %s57 = sadd.s32 %s16, %s17
      %s58 = sadd.s32 %s28, %s24
      %s59 = ssub.s32 %s57, %s58
      %p60 = scmp.eq.s32.totalorder %s59, 0
      %s62 = sadd.s32 %s61, 1
      %s63 = scalar_select %p60, %s61, %s62
      %p66 = pneg %p60
      %p67 = scmp.eq.s32.totalorder %s9, 1
      %p68 = por %p66, %p67
      %p69 = scmp.ne.s32.totalorder %s61, %s64
      %p70 = scmp.eq.s32.totalorder %s9, 0
      %p71 = por %p69, %p70
      %p72 = scmp.ne.s32.totalorder %s61, %s64
      %p73 = scmp.eq.s32.totalorder %s14, 1
      %p74 = por %p72, %p73
      %p75 = scmp.ne.s32.totalorder %s64, %s65
      %p76 = scmp.eq.s32.totalorder %s14, 0
      %p77 = por %p75, %p76
      %p78 = scmp.ne.s32.totalorder %s64, %s65
      %p79 = scmp.eq.s32.totalorder %s15, 1
      %p80 = por %p78, %p79
      %p82 = scmp.ne.s32.totalorder %s65, %s81
      %p83 = scmp.eq.s32.totalorder %s15, 0
      %p84 = por %p82, %p83
      %s86 = sadd.s32 %s85, 1
      %p89 = scmp.eq.s32.totalorder %s9, 1
      %p90 = scmp.ne.s32.totalorder %s85, %s87
      %p91 = scmp.eq.s32.totalorder %s9, 0
      %p92 = por %p90, %p91
      %p93 = scmp.ne.s32.totalorder %s85, %s87
      %p94 = scmp.eq.s32.totalorder %s14, 1
      %p95 = por %p93, %p94
      %p96 = scmp.ne.s32.totalorder %s87, %s88
      %p97 = scmp.eq.s32.totalorder %s14, 0
      %p98 = por %p96, %p97
      %p99 = scmp.ne.s32.totalorder %s87, %s88
      %p100 = scmp.eq.s32.totalorder %s15, 1
      %p101 = por %p99, %p100
      %p103 = scmp.ne.s32.totalorder %s88, %s102
      %p104 = scmp.eq.s32.totalorder %s15, 0
      %p105 = por %p103, %p104
      %s106 = ssub.s32 %s16, %s28
      %p107 = scmp.eq.s32.totalorder %s106, 0
      %s109 = sadd.s32 %s108, 1
      %s110 = scalar_select %p107, %s108, %s109
      %p113 = pneg %p107
      %p114 = scmp.eq.s32.totalorder %s9, 1
      %p115 = por %p113, %p114
      %p116 = scmp.ne.s32.totalorder %s108, %s111
      %p117 = scmp.eq.s32.totalorder %s9, 0
      %p118 = por %p116, %p117
      %p119 = scmp.ne.s32.totalorder %s108, %s111
      %p120 = scmp.eq.s32.totalorder %s14, 1
      %p121 = por %p119, %p120
      %p122 = scmp.ne.s32.totalorder %s111, %s112
      %p123 = scmp.eq.s32.totalorder %s14, 0
      %p124 = por %p122, %p123
      %p125 = scmp.ne.s32.totalorder %s111, %s112
      %p126 = scmp.eq.s32.totalorder %s15, 1
      %p127 = por %p125, %p126
      %p129 = scmp.ne.s32.totalorder %s112, %s128
      %p130 = scmp.eq.s32.totalorder %s15, 0
      %p131 = por %p129, %p130
      %p132 = scmp.le.s32.totalorder 1, %s9
      %p133 = scmp.lt.s32.totalorder %s9, 3
      %p134 = pnand %p132, %p133
      %p135 = pneg %p134
      // Predicated region
      $region9: #{svm_forward.1} parent=5 // pred_check
        _
      $region10: #{svm_forward.1} parent=5 // pred_check_branch
        %137 = sbr.rel (%p134) target = $region12
      $region11: #{svm_forward.1} parent=5 // pred_region
        %s138 = ssub.s32 %s9, 1
        // Predicated region
        $region13: #{svm_forward.1} parent=11 // pred_check
          %p139 = pneg %p98
        $region14: #{svm_forward.1} parent=11 // pred_check_branch
          %141 = sbr.rel (%p139) target = $region16
        $region15: #{svm_forward.1} parent=11 // pred_region
          _
        $region16: #{svm_forward.1} parent=11 // pred_fallthru
          _
      $region12: #{svm_forward.1} parent=5 // pred_fallthru
        _
      %p142 = scmp.lt.s32.totalorder %s9, 2
      // Predicated region
      $region17: #{svm_forward.1} parent=5 // pred_check
        %p143 = pneg %p142
      $region18: #{svm_forward.1} parent=5 // pred_check_branch
        %145 = sbr.rel (%p143) target = $region20
      $region19: #{svm_forward.1} parent=5 // pred_region
        // Predicated region
        $region21: #{svm_forward.1} parent=19 // pred_check
          %p146 = pneg %p43
        $region22: #{svm_forward.1} parent=19 // pred_check_branch
          %148 = sbr.rel (%p146) target = $region24
        $region23: #{svm_forward.1} parent=19 // pred_region
          %s149 = sand.u32 %s33, 1
          %s150 = sand.u32 %s33, 1
          %s151 = smul.addr %s150, 1536
          %s152 = scalar_lea.vmem [#allocation3], %s151
          %s153 = sadd.s32 %s16, %s17
          %s154 = smul.u32 96, %s153
          %s155 = smul.addr %s154, 8
          %s156 = scalar_lea.vmem %s0, %s155
          // Predicated region
          $region25: #{svm_forward.1} parent=23 // pred_check
            _
          $region26: #{svm_forward.1} parent=23 // pred_check_branch
            %158 = sbr.rel (0) target = $region28
          $region27: #{svm_forward.1} parent=23 // pred_region
            // Predicated region
            $region29: #{svm_forward.1} parent=27 // pred_check
              _
            $region30: #{svm_forward.1} parent=27 // pred_check_branch
              %160 = sbr.rel (0) target = $region32
            $region31: #{svm_forward.1} parent=27 // pred_region
              // Predicated region
              $region44: #{svm_forward.1} parent=31 // pred_check
                _
              $region45: #{svm_forward.1} parent=31 // pred_check_branch
                %558 = sbr.rel (0) target = $region47
              $region46: #{svm_forward.1} parent=31 // pred_region
                loop: start=0, step=1, limit=1
                $region48: #{svm_forward.1} parent=46 // loop_pre_header
                  _
                $region49: #{svm_forward.1} parent=46 // loop_header
                  %s560 = sphi 0, %s564
                  %p561 = scmp.ge.s32.totalorder %s560, 1
                  %s565 = sphi %s156, %s156
                  %s566 = sphi %s152, %s152
                $region50: #{svm_forward.1} parent=46 // loop_header_branch
                  %563 = sbr.rel (%p561) target = $region54
                $region51: #{svm_forward.1} parent=46 // loop_body
                  %v567 = vld [vmem:[%s565] sm:$0xff]
                  %568 = vst [vmem:[%s566] sm:$0xff] %v567
                  %v569 = vld [vmem:[%s565 + $0x8] sm:$0xff]
                  %570 = vst [vmem:[%s566 + $0x8] sm:$0xff] %v569
                  %v571 = vld [vmem:[%s565 + $0x10] sm:$0xff]
                  %572 = vst [vmem:[%s566 + $0x10] sm:$0xff] %v571
                  %v573 = vld [vmem:[%s565 + $0x18] sm:$0xff]
                  %574 = vst [vmem:[%s566 + $0x18] sm:$0xff] %v573
                  %v575 = vld [vmem:[%s565 + $0x20] sm:$0xff]
                  %576 = vst [vmem:[%s566 + $0x20] sm:$0xff] %v575
                  %v577 = vld [vmem:[%s565 + $0x28] sm:$0xff]
                  %578 = vst [vmem:[%s566 + $0x28] sm:$0xff] %v577
                  %v579 = vld [vmem:[%s565 + $0x30] sm:$0xff]
                  %580 = vst [vmem:[%s566 + $0x30] sm:$0xff] %v579
                  %v581 = vld [vmem:[%s565 + $0x38] sm:$0xff]
                  %582 = vst [vmem:[%s566 + $0x38] sm:$0xff] %v581
                  %v583 = vld [vmem:[%s565 + $0x40] sm:$0xff]
                  %584 = vst [vmem:[%s566 + $0x40] sm:$0xff] %v583
                  %v585 = vld [vmem:[%s565 + $0x48] sm:$0xff]
                  %586 = vst [vmem:[%s566 + $0x48] sm:$0xff] %v585
                  %v587 = vld [vmem:[%s565 + $0x50] sm:$0xff]
                  %588 = vst [vmem:[%s566 + $0x50] sm:$0xff] %v587
                  %v589 = vld [vmem:[%s565 + $0x58] sm:$0xff]
                  %590 = vst [vmem:[%s566 + $0x58] sm:$0xff] %v589
                  %v591 = vld [vmem:[%s565 + $0x60] sm:$0xff]
                  %592 = vst [vmem:[%s566 + $0x60] sm:$0xff] %v591
                  %v593 = vld [vmem:[%s565 + $0x68] sm:$0xff]
                  %594 = vst [vmem:[%s566 + $0x68] sm:$0xff] %v593
                  %v595 = vld [vmem:[%s565 + $0x70] sm:$0xff]
                  %596 = vst [vmem:[%s566 + $0x70] sm:$0xff] %v595
                  %v597 = vld [vmem:[%s565 + $0x78] sm:$0xff]
                  %598 = vst [vmem:[%s566 + $0x78] sm:$0xff] %v597
                  %v599 = vld [vmem:[%s565 + $0x80] sm:$0xff]
                  %600 = vst [vmem:[%s566 + $0x80] sm:$0xff] %v599
                  %v601 = vld [vmem:[%s565 + $0x88] sm:$0xff]
                  %602 = vst [vmem:[%s566 + $0x88] sm:$0xff] %v601
                  %v603 = vld [vmem:[%s565 + $0x90] sm:$0xff]
                  %604 = vst [vmem:[%s566 + $0x90] sm:$0xff] %v603
                  %v605 = vld [vmem:[%s565 + $0x98] sm:$0xff]
                  %606 = vst [vmem:[%s566 + $0x98] sm:$0xff] %v605
                  %v607 = vld [vmem:[%s565 + $0xa0] sm:$0xff]
                  %608 = vst [vmem:[%s566 + $0xa0] sm:$0xff] %v607
                  %v609 = vld [vmem:[%s565 + $0xa8] sm:$0xff]
                  %610 = vst [vmem:[%s566 + $0xa8] sm:$0xff] %v609
                  %v611 = vld [vmem:[%s565 + $0xb0] sm:$0xff]
                  %612 = vst [vmem:[%s566 + $0xb0] sm:$0xff] %v611
                  %v613 = vld [vmem:[%s565 + $0xb8] sm:$0xff]
                  %614 = vst [vmem:[%s566 + $0xb8] sm:$0xff] %v613
                  %v615 = vld [vmem:[%s565 + $0xc0] sm:$0xff]
                  %616 = vst [vmem:[%s566 + $0xc0] sm:$0xff] %v615
                  %v617 = vld [vmem:[%s565 + $0xc8] sm:$0xff]
                  %618 = vst [vmem:[%s566 + $0xc8] sm:$0xff] %v617
                  %v619 = vld [vmem:[%s565 + $0xd0] sm:$0xff]
                  %620 = vst [vmem:[%s566 + $0xd0] sm:$0xff] %v619
                  %v621 = vld [vmem:[%s565 + $0xd8] sm:$0xff]
                  %622 = vst [vmem:[%s566 + $0xd8] sm:$0xff] %v621
                  %v623 = vld [vmem:[%s565 + $0xe0] sm:$0xff]
                  %624 = vst [vmem:[%s566 + $0xe0] sm:$0xff] %v623
                  %v625 = vld [vmem:[%s565 + $0xe8] sm:$0xff]
                  %626 = vst [vmem:[%s566 + $0xe8] sm:$0xff] %v625
                  %v627 = vld [vmem:[%s565 + $0xf0] sm:$0xff]
                  %628 = vst [vmem:[%s566 + $0xf0] sm:$0xff] %v627
                  %v629 = vld [vmem:[%s565 + $0xf8] sm:$0xff]
                  %630 = vst [vmem:[%s566 + $0xf8] sm:$0xff] %v629
                  %v631 = vld [vmem:[%s565 + $0x100] sm:$0xff]
                  %632 = vst [vmem:[%s566 + $0x100] sm:$0xff] %v631
                  %v633 = vld [vmem:[%s565 + $0x108] sm:$0xff]
                  %634 = vst [vmem:[%s566 + $0x108] sm:$0xff] %v633
                  %v635 = vld [vmem:[%s565 + $0x110] sm:$0xff]
                  %636 = vst [vmem:[%s566 + $0x110] sm:$0xff] %v635
                  %v637 = vld [vmem:[%s565 + $0x118] sm:$0xff]
                  %638 = vst [vmem:[%s566 + $0x118] sm:$0xff] %v637
                  %v639 = vld [vmem:[%s565 + $0x120] sm:$0xff]
                  %640 = vst [vmem:[%s566 + $0x120] sm:$0xff] %v639
                  %v641 = vld [vmem:[%s565 + $0x128] sm:$0xff]
                  %642 = vst [vmem:[%s566 + $0x128] sm:$0xff] %v641
                  %v643 = vld [vmem:[%s565 + $0x130] sm:$0xff]
                  %644 = vst [vmem:[%s566 + $0x130] sm:$0xff] %v643
                  %v645 = vld [vmem:[%s565 + $0x138] sm:$0xff]
                  %646 = vst [vmem:[%s566 + $0x138] sm:$0xff] %v645
                  %v647 = vld [vmem:[%s565 + $0x140] sm:$0xff]
                  %648 = vst [vmem:[%s566 + $0x140] sm:$0xff] %v647
                  %v649 = vld [vmem:[%s565 + $0x148] sm:$0xff]
                  %650 = vst [vmem:[%s566 + $0x148] sm:$0xff] %v649
                  %v651 = vld [vmem:[%s565 + $0x150] sm:$0xff]
                  %652 = vst [vmem:[%s566 + $0x150] sm:$0xff] %v651
                  %v653 = vld [vmem:[%s565 + $0x158] sm:$0xff]
                  %654 = vst [vmem:[%s566 + $0x158] sm:$0xff] %v653
                  %v655 = vld [vmem:[%s565 + $0x160] sm:$0xff]
                  %656 = vst [vmem:[%s566 + $0x160] sm:$0xff] %v655
                  %v657 = vld [vmem:[%s565 + $0x168] sm:$0xff]
                  %658 = vst [vmem:[%s566 + $0x168] sm:$0xff] %v657
                  %v659 = vld [vmem:[%s565 + $0x170] sm:$0xff]
                  %660 = vst [vmem:[%s566 + $0x170] sm:$0xff] %v659
                  %v661 = vld [vmem:[%s565 + $0x178] sm:$0xff]
                  %662 = vst [vmem:[%s566 + $0x178] sm:$0xff] %v661
                  %v663 = vld [vmem:[%s565 + $0x180] sm:$0xff]
                  %664 = vst [vmem:[%s566 + $0x180] sm:$0xff] %v663
                  %v665 = vld [vmem:[%s565 + $0x188] sm:$0xff]
                  %666 = vst [vmem:[%s566 + $0x188] sm:$0xff] %v665
                  %v667 = vld [vmem:[%s565 + $0x190] sm:$0xff]
                  %668 = vst [vmem:[%s566 + $0x190] sm:$0xff] %v667
                  %v669 = vld [vmem:[%s565 + $0x198] sm:$0xff]
                  %670 = vst [vmem:[%s566 + $0x198] sm:$0xff] %v669
                  %v671 = vld [vmem:[%s565 + $0x1a0] sm:$0xff]
                  %672 = vst [vmem:[%s566 + $0x1a0] sm:$0xff] %v671
                  %v673 = vld [vmem:[%s565 + $0x1a8] sm:$0xff]
                  %674 = vst [vmem:[%s566 + $0x1a8] sm:$0xff] %v673
                  %v675 = vld [vmem:[%s565 + $0x1b0] sm:$0xff]
                  %676 = vst [vmem:[%s566 + $0x1b0] sm:$0xff] %v675
                  %v677 = vld [vmem:[%s565 + $0x1b8] sm:$0xff]
                  %678 = vst [vmem:[%s566 + $0x1b8] sm:$0xff] %v677
                  %v679 = vld [vmem:[%s565 + $0x1c0] sm:$0xff]
                  %680 = vst [vmem:[%s566 + $0x1c0] sm:$0xff] %v679
                  %v681 = vld [vmem:[%s565 + $0x1c8] sm:$0xff]
                  %682 = vst [vmem:[%s566 + $0x1c8] sm:$0xff] %v681
                  %v683 = vld [vmem:[%s565 + $0x1d0] sm:$0xff]
                  %684 = vst [vmem:[%s566 + $0x1d0] sm:$0xff] %v683
                  %v685 = vld [vmem:[%s565 + $0x1d8] sm:$0xff]
                  %686 = vst [vmem:[%s566 + $0x1d8] sm:$0xff] %v685
                  %v687 = vld [vmem:[%s565 + $0x1e0] sm:$0xff]
                  %688 = vst [vmem:[%s566 + $0x1e0] sm:$0xff] %v687
                  %v689 = vld [vmem:[%s565 + $0x1e8] sm:$0xff]
                  %690 = vst [vmem:[%s566 + $0x1e8] sm:$0xff] %v689
                  %v691 = vld [vmem:[%s565 + $0x1f0] sm:$0xff]
                  %692 = vst [vmem:[%s566 + $0x1f0] sm:$0xff] %v691
                  %v693 = vld [vmem:[%s565 + $0x1f8] sm:$0xff]
                  %694 = vst [vmem:[%s566 + $0x1f8] sm:$0xff] %v693
                  %v695 = vld [vmem:[%s565 + $0x200] sm:$0xff]
                  %696 = vst [vmem:[%s566 + $0x200] sm:$0xff] %v695
                  %v697 = vld [vmem:[%s565 + $0x208] sm:$0xff]
                  %698 = vst [vmem:[%s566 + $0x208] sm:$0xff] %v697
                  %v699 = vld [vmem:[%s565 + $0x210] sm:$0xff]
                  %700 = vst [vmem:[%s566 + $0x210] sm:$0xff] %v699
                  %v701 = vld [vmem:[%s565 + $0x218] sm:$0xff]
                  %702 = vst [vmem:[%s566 + $0x218] sm:$0xff] %v701
                  %v703 = vld [vmem:[%s565 + $0x220] sm:$0xff]
                  %704 = vst [vmem:[%s566 + $0x220] sm:$0xff] %v703
                  %v705 = vld [vmem:[%s565 + $0x228] sm:$0xff]
                  %706 = vst [vmem:[%s566 + $0x228] sm:$0xff] %v705
                  %v707 = vld [vmem:[%s565 + $0x230] sm:$0xff]
                  %708 = vst [vmem:[%s566 + $0x230] sm:$0xff] %v707
                  %v709 = vld [vmem:[%s565 + $0x238] sm:$0xff]
                  %710 = vst [vmem:[%s566 + $0x238] sm:$0xff] %v709
                  %v711 = vld [vmem:[%s565 + $0x240] sm:$0xff]
                  %712 = vst [vmem:[%s566 + $0x240] sm:$0xff] %v711
                  %v713 = vld [vmem:[%s565 + $0x248] sm:$0xff]
                  %714 = vst [vmem:[%s566 + $0x248] sm:$0xff] %v713
                  %v715 = vld [vmem:[%s565 + $0x250] sm:$0xff]
                  %716 = vst [vmem:[%s566 + $0x250] sm:$0xff] %v715
                  %v717 = vld [vmem:[%s565 + $0x258] sm:$0xff]
                  %718 = vst [vmem:[%s566 + $0x258] sm:$0xff] %v717
                  %v719 = vld [vmem:[%s565 + $0x260] sm:$0xff]
                  %720 = vst [vmem:[%s566 + $0x260] sm:$0xff] %v719
                  %v721 = vld [vmem:[%s565 + $0x268] sm:$0xff]
                  %722 = vst [vmem:[%s566 + $0x268] sm:$0xff] %v721
                  %v723 = vld [vmem:[%s565 + $0x270] sm:$0xff]
                  %724 = vst [vmem:[%s566 + $0x270] sm:$0xff] %v723
                  %v725 = vld [vmem:[%s565 + $0x278] sm:$0xff]
                  %726 = vst [vmem:[%s566 + $0x278] sm:$0xff] %v725
                  %v727 = vld [vmem:[%s565 + $0x280] sm:$0xff]
                  %728 = vst [vmem:[%s566 + $0x280] sm:$0xff] %v727
                  %v729 = vld [vmem:[%s565 + $0x288] sm:$0xff]
                  %730 = vst [vmem:[%s566 + $0x288] sm:$0xff] %v729
                  %v731 = vld [vmem:[%s565 + $0x290] sm:$0xff]
                  %732 = vst [vmem:[%s566 + $0x290] sm:$0xff] %v731
                  %v733 = vld [vmem:[%s565 + $0x298] sm:$0xff]
                  %734 = vst [vmem:[%s566 + $0x298] sm:$0xff] %v733
                  %v735 = vld [vmem:[%s565 + $0x2a0] sm:$0xff]
                  %736 = vst [vmem:[%s566 + $0x2a0] sm:$0xff] %v735
                  %v737 = vld [vmem:[%s565 + $0x2a8] sm:$0xff]
                  %738 = vst [vmem:[%s566 + $0x2a8] sm:$0xff] %v737
                  %v739 = vld [vmem:[%s565 + $0x2b0] sm:$0xff]
                  %740 = vst [vmem:[%s566 + $0x2b0] sm:$0xff] %v739
                  %v741 = vld [vmem:[%s565 + $0x2b8] sm:$0xff]
                  %742 = vst [vmem:[%s566 + $0x2b8] sm:$0xff] %v741
                  %v743 = vld [vmem:[%s565 + $0x2c0] sm:$0xff]
                  %744 = vst [vmem:[%s566 + $0x2c0] sm:$0xff] %v743
                  %v745 = vld [vmem:[%s565 + $0x2c8] sm:$0xff]
                  %746 = vst [vmem:[%s566 + $0x2c8] sm:$0xff] %v745
                  %v747 = vld [vmem:[%s565 + $0x2d0] sm:$0xff]
                  %748 = vst [vmem:[%s566 + $0x2d0] sm:$0xff] %v747
                  %v749 = vld [vmem:[%s565 + $0x2d8] sm:$0xff]
                  %750 = vst [vmem:[%s566 + $0x2d8] sm:$0xff] %v749
                  %v751 = vld [vmem:[%s565 + $0x2e0] sm:$0xff]
                  %752 = vst [vmem:[%s566 + $0x2e0] sm:$0xff] %v751
                  %v753 = vld [vmem:[%s565 + $0x2e8] sm:$0xff]
                  %754 = vst [vmem:[%s566 + $0x2e8] sm:$0xff] %v753
                  %v755 = vld [vmem:[%s565 + $0x2f0] sm:$0xff]
                  %756 = vst [vmem:[%s566 + $0x2f0] sm:$0xff] %v755
                  %v757 = vld [vmem:[%s565 + $0x2f8] sm:$0xff]
                  %758 = vst [vmem:[%s566 + $0x2f8] sm:$0xff] %v757
                  %v759 = vld [vmem:[%s565 + $0x600] sm:$0xff]
                  %760 = vst [vmem:[%s566 + $0x300] sm:$0xff] %v759
                  %v761 = vld [vmem:[%s565 + $0x608] sm:$0xff]
                  %762 = vst [vmem:[%s566 + $0x308] sm:$0xff] %v761
                  %v763 = vld [vmem:[%s565 + $0x610] sm:$0xff]
                  %764 = vst [vmem:[%s566 + $0x310] sm:$0xff] %v763
                  %v765 = vld [vmem:[%s565 + $0x618] sm:$0xff]
                  %766 = vst [vmem:[%s566 + $0x318] sm:$0xff] %v765
                  %v767 = vld [vmem:[%s565 + $0x620] sm:$0xff]
                  %768 = vst [vmem:[%s566 + $0x320] sm:$0xff] %v767
                  %v769 = vld [vmem:[%s565 + $0x628] sm:$0xff]
                  %770 = vst [vmem:[%s566 + $0x328] sm:$0xff] %v769
                  %v771 = vld [vmem:[%s565 + $0x630] sm:$0xff]
                  %772 = vst [vmem:[%s566 + $0x330] sm:$0xff] %v771
                  %v773 = vld [vmem:[%s565 + $0x638] sm:$0xff]
                  %774 = vst [vmem:[%s566 + $0x338] sm:$0xff] %v773
                  %v775 = vld [vmem:[%s565 + $0x640] sm:$0xff]
                  %776 = vst [vmem:[%s566 + $0x340] sm:$0xff] %v775
                  %v777 = vld [vmem:[%s565 + $0x648] sm:$0xff]
                  %778 = vst [vmem:[%s566 + $0x348] sm:$0xff] %v777
                  %v779 = vld [vmem:[%s565 + $0x650] sm:$0xff]
                  %780 = vst [vmem:[%s566 + $0x350] sm:$0xff] %v779
                  %v781 = vld [vmem:[%s565 + $0x658] sm:$0xff]
                  %782 = vst [vmem:[%s566 + $0x358] sm:$0xff] %v781
                  %v783 = vld [vmem:[%s565 + $0x660] sm:$0xff]
                  %784 = vst [vmem:[%s566 + $0x360] sm:$0xff] %v783
                  %v785 = vld [vmem:[%s565 + $0x668] sm:$0xff]
                  %786 = vst [vmem:[%s566 + $0x368] sm:$0xff] %v785
                  %v787 = vld [vmem:[%s565 + $0x670] sm:$0xff]
                  %788 = vst [vmem:[%s566 + $0x370] sm:$0xff] %v787
                  %v789 = vld [vmem:[%s565 + $0x678] sm:$0xff]
                  %790 = vst [vmem:[%s566 + $0x378] sm:$0xff] %v789
                  %v791 = vld [vmem:[%s565 + $0x680] sm:$0xff]
                  %792 = vst [vmem:[%s566 + $0x380] sm:$0xff] %v791
                  %v793 = vld [vmem:[%s565 + $0x688] sm:$0xff]
                  %794 = vst [vmem:[%s566 + $0x388] sm:$0xff] %v793
                  %v795 = vld [vmem:[%s565 + $0x690] sm:$0xff]
                  %796 = vst [vmem:[%s566 + $0x390] sm:$0xff] %v795
                  %v797 = vld [vmem:[%s565 + $0x698] sm:$0xff]
                  %798 = vst [vmem:[%s566 + $0x398] sm:$0xff] %v797
                  %v799 = vld [vmem:[%s565 + $0x6a0] sm:$0xff]
                  %800 = vst [vmem:[%s566 + $0x3a0] sm:$0xff] %v799
                  %v801 = vld [vmem:[%s565 + $0x6a8] sm:$0xff]
                  %802 = vst [vmem:[%s566 + $0x3a8] sm:$0xff] %v801
                  %v803 = vld [vmem:[%s565 + $0x6b0] sm:$0xff]
                  %804 = vst [vmem:[%s566 + $0x3b0] sm:$0xff] %v803
                  %v805 = vld [vmem:[%s565 + $0x6b8] sm:$0xff]
                  %806 = vst [vmem:[%s566 + $0x3b8] sm:$0xff] %v805
                  %v807 = vld [vmem:[%s565 + $0x6c0] sm:$0xff]
                  %808 = vst [vmem:[%s566 + $0x3c0] sm:$0xff] %v807
                  %v809 = vld [vmem:[%s565 + $0x6c8] sm:$0xff]
                  %810 = vst [vmem:[%s566 + $0x3c8] sm:$0xff] %v809
                  %v811 = vld [vmem:[%s565 + $0x6d0] sm:$0xff]
                  %812 = vst [vmem:[%s566 + $0x3d0] sm:$0xff] %v811
                  %v813 = vld [vmem:[%s565 + $0x6d8] sm:$0xff]
                  %814 = vst [vmem:[%s566 + $0x3d8] sm:$0xff] %v813
                  %v815 = vld [vmem:[%s565 + $0x6e0] sm:$0xff]
                  %816 = vst [vmem:[%s566 + $0x3e0] sm:$0xff] %v815
                  %v817 = vld [vmem:[%s565 + $0x6e8] sm:$0xff]
                  %818 = vst [vmem:[%s566 + $0x3e8] sm:$0xff] %v817
                  %v819 = vld [vmem:[%s565 + $0x6f0] sm:$0xff]
                  %820 = vst [vmem:[%s566 + $0x3f0] sm:$0xff] %v819
                  %v821 = vld [vmem:[%s565 + $0x6f8] sm:$0xff]
                  %822 = vst [vmem:[%s566 + $0x3f8] sm:$0xff] %v821
                  %v823 = vld [vmem:[%s565 + $0x700] sm:$0xff]
                  %824 = vst [vmem:[%s566 + $0x400] sm:$0xff] %v823
                  %v825 = vld [vmem:[%s565 + $0x708] sm:$0xff]
                  %826 = vst [vmem:[%s566 + $0x408] sm:$0xff] %v825
                  %v827 = vld [vmem:[%s565 + $0x710] sm:$0xff]
                  %828 = vst [vmem:[%s566 + $0x410] sm:$0xff] %v827
                  %v829 = vld [vmem:[%s565 + $0x718] sm:$0xff]
                  %830 = vst [vmem:[%s566 + $0x418] sm:$0xff] %v829
                  %v831 = vld [vmem:[%s565 + $0x720] sm:$0xff]
                  %832 = vst [vmem:[%s566 + $0x420] sm:$0xff] %v831
                  %v833 = vld [vmem:[%s565 + $0x728] sm:$0xff]
                  %834 = vst [vmem:[%s566 + $0x428] sm:$0xff] %v833
                  %v835 = vld [vmem:[%s565 + $0x730] sm:$0xff]
                  %836 = vst [vmem:[%s566 + $0x430] sm:$0xff] %v835
                  %v837 = vld [vmem:[%s565 + $0x738] sm:$0xff]
                  %838 = vst [vmem:[%s566 + $0x438] sm:$0xff] %v837
                  %v839 = vld [vmem:[%s565 + $0x740] sm:$0xff]
                  %840 = vst [vmem:[%s566 + $0x440] sm:$0xff] %v839
                  %v841 = vld [vmem:[%s565 + $0x748] sm:$0xff]
                  %842 = vst [vmem:[%s566 + $0x448] sm:$0xff] %v841
                  %v843 = vld [vmem:[%s565 + $0x750] sm:$0xff]
                  %844 = vst [vmem:[%s566 + $0x450] sm:$0xff] %v843
                  %v845 = vld [vmem:[%s565 + $0x758] sm:$0xff]
                  %846 = vst [vmem:[%s566 + $0x458] sm:$0xff] %v845
                  %v847 = vld [vmem:[%s565 + $0x760] sm:$0xff]
                  %848 = vst [vmem:[%s566 + $0x460] sm:$0xff] %v847
                  %v849 = vld [vmem:[%s565 + $0x768] sm:$0xff]
                  %850 = vst [vmem:[%s566 + $0x468] sm:$0xff] %v849
                  %v851 = vld [vmem:[%s565 + $0x770] sm:$0xff]
                  %852 = vst [vmem:[%s566 + $0x470] sm:$0xff] %v851
                  %v853 = vld [vmem:[%s565 + $0x778] sm:$0xff]
                  %854 = vst [vmem:[%s566 + $0x478] sm:$0xff] %v853
                  %v855 = vld [vmem:[%s565 + $0x780] sm:$0xff]
                  %856 = vst [vmem:[%s566 + $0x480] sm:$0xff] %v855
                  %v857 = vld [vmem:[%s565 + $0x788] sm:$0xff]
                  %858 = vst [vmem:[%s566 + $0x488] sm:$0xff] %v857
                  %v859 = vld [vmem:[%s565 + $0x790] sm:$0xff]
                  %860 = vst [vmem:[%s566 + $0x490] sm:$0xff] %v859
                  %v861 = vld [vmem:[%s565 + $0x798] sm:$0xff]
                  %862 = vst [vmem:[%s566 + $0x498] sm:$0xff] %v861
                  %v863 = vld [vmem:[%s565 + $0x7a0] sm:$0xff]
                  %864 = vst [vmem:[%s566 + $0x4a0] sm:$0xff] %v863
                  %v865 = vld [vmem:[%s565 + $0x7a8] sm:$0xff]
                  %866 = vst [vmem:[%s566 + $0x4a8] sm:$0xff] %v865
                  %v867 = vld [vmem:[%s565 + $0x7b0] sm:$0xff]
                  %868 = vst [vmem:[%s566 + $0x4b0] sm:$0xff] %v867
                  %v869 = vld [vmem:[%s565 + $0x7b8] sm:$0xff]
                  %870 = vst [vmem:[%s566 + $0x4b8] sm:$0xff] %v869
                  %v871 = vld [vmem:[%s565 + $0x7c0] sm:$0xff]
                  %872 = vst [vmem:[%s566 + $0x4c0] sm:$0xff] %v871
                  %v873 = vld [vmem:[%s565 + $0x7c8] sm:$0xff]
                  %874 = vst [vmem:[%s566 + $0x4c8] sm:$0xff] %v873
                  %v875 = vld [vmem:[%s565 + $0x7d0] sm:$0xff]
                  %876 = vst [vmem:[%s566 + $0x4d0] sm:$0xff] %v875
                  %v877 = vld [vmem:[%s565 + $0x7d8] sm:$0xff]
                  %878 = vst [vmem:[%s566 + $0x4d8] sm:$0xff] %v877
                  %v879 = vld [vmem:[%s565 + $0x7e0] sm:$0xff]
                  %880 = vst [vmem:[%s566 + $0x4e0] sm:$0xff] %v879
                  %v881 = vld [vmem:[%s565 + $0x7e8] sm:$0xff]
                  %882 = vst [vmem:[%s566 + $0x4e8] sm:$0xff] %v881
                  %v883 = vld [vmem:[%s565 + $0x7f0] sm:$0xff]
                  %884 = vst [vmem:[%s566 + $0x4f0] sm:$0xff] %v883
                  %v885 = vld [vmem:[%s565 + $0x7f8] sm:$0xff]
                  %886 = vst [vmem:[%s566 + $0x4f8] sm:$0xff] %v885
                  %v887 = vld [vmem:[%s565 + $0x800] sm:$0xff]
                  %888 = vst [vmem:[%s566 + $0x500] sm:$0xff] %v887
                  %v889 = vld [vmem:[%s565 + $0x808] sm:$0xff]
                  %890 = vst [vmem:[%s566 + $0x508] sm:$0xff] %v889
                  %v891 = vld [vmem:[%s565 + $0x810] sm:$0xff]
                  %892 = vst [vmem:[%s566 + $0x510] sm:$0xff] %v891
                  %v893 = vld [vmem:[%s565 + $0x818] sm:$0xff]
                  %894 = vst [vmem:[%s566 + $0x518] sm:$0xff] %v893
                  %v895 = vld [vmem:[%s565 + $0x820] sm:$0xff]
                  %896 = vst [vmem:[%s566 + $0x520] sm:$0xff] %v895
                  %v897 = vld [vmem:[%s565 + $0x828] sm:$0xff]
                  %898 = vst [vmem:[%s566 + $0x528] sm:$0xff] %v897
                  %v899 = vld [vmem:[%s565 + $0x830] sm:$0xff]
                  %900 = vst [vmem:[%s566 + $0x530] sm:$0xff] %v899
                  %v901 = vld [vmem:[%s565 + $0x838] sm:$0xff]
                  %902 = vst [vmem:[%s566 + $0x538] sm:$0xff] %v901
                  %v903 = vld [vmem:[%s565 + $0x840] sm:$0xff]
                  %904 = vst [vmem:[%s566 + $0x540] sm:$0xff] %v903
                  %v905 = vld [vmem:[%s565 + $0x848] sm:$0xff]
                  %906 = vst [vmem:[%s566 + $0x548] sm:$0xff] %v905
                  %v907 = vld [vmem:[%s565 + $0x850] sm:$0xff]
                  %908 = vst [vmem:[%s566 + $0x550] sm:$0xff] %v907
                  %v909 = vld [vmem:[%s565 + $0x858] sm:$0xff]
                  %910 = vst [vmem:[%s566 + $0x558] sm:$0xff] %v909
                  %v911 = vld [vmem:[%s565 + $0x860] sm:$0xff]
                  %912 = vst [vmem:[%s566 + $0x560] sm:$0xff] %v911
                  %v913 = vld [vmem:[%s565 + $0x868] sm:$0xff]
                  %914 = vst [vmem:[%s566 + $0x568] sm:$0xff] %v913
                  %v915 = vld [vmem:[%s565 + $0x870] sm:$0xff]
                  %916 = vst [vmem:[%s566 + $0x570] sm:$0xff] %v915
                  %v917 = vld [vmem:[%s565 + $0x878] sm:$0xff]
                  %918 = vst [vmem:[%s566 + $0x578] sm:$0xff] %v917
                  %v919 = vld [vmem:[%s565 + $0x880] sm:$0xff]
                  %920 = vst [vmem:[%s566 + $0x580] sm:$0xff] %v919
                  %v921 = vld [vmem:[%s565 + $0x888] sm:$0xff]
                  %922 = vst [vmem:[%s566 + $0x588] sm:$0xff] %v921
                  %v923 = vld [vmem:[%s565 + $0x890] sm:$0xff]
                  %924 = vst [vmem:[%s566 + $0x590] sm:$0xff] %v923
                  %v925 = vld [vmem:[%s565 + $0x898] sm:$0xff]
                  %926 = vst [vmem:[%s566 + $0x598] sm:$0xff] %v925
                  %v927 = vld [vmem:[%s565 + $0x8a0] sm:$0xff]
                  %928 = vst [vmem:[%s566 + $0x5a0] sm:$0xff] %v927
                  %v929 = vld [vmem:[%s565 + $0x8a8] sm:$0xff]
                  %930 = vst [vmem:[%s566 + $0x5a8] sm:$0xff] %v929
                  %v931 = vld [vmem:[%s565 + $0x8b0] sm:$0xff]
                  %932 = vst [vmem:[%s566 + $0x5b0] sm:$0xff] %v931
                  %v933 = vld [vmem:[%s565 + $0x8b8] sm:$0xff]
                  %934 = vst [vmem:[%s566 + $0x5b8] sm:$0xff] %v933
                  %v935 = vld [vmem:[%s565 + $0x8c0] sm:$0xff]
                  %936 = vst [vmem:[%s566 + $0x5c0] sm:$0xff] %v935
                  %v937 = vld [vmem:[%s565 + $0x8c8] sm:$0xff]
                  %938 = vst [vmem:[%s566 + $0x5c8] sm:$0xff] %v937
                  %v939 = vld [vmem:[%s565 + $0x8d0] sm:$0xff]
                  %940 = vst [vmem:[%s566 + $0x5d0] sm:$0xff] %v939
                  %v941 = vld [vmem:[%s565 + $0x8d8] sm:$0xff]
                  %942 = vst [vmem:[%s566 + $0x5d8] sm:$0xff] %v941
                  %v943 = vld [vmem:[%s565 + $0x8e0] sm:$0xff]
                  %944 = vst [vmem:[%s566 + $0x5e0] sm:$0xff] %v943
                  %v945 = vld [vmem:[%s565 + $0x8e8] sm:$0xff]
                  %946 = vst [vmem:[%s566 + $0x5e8] sm:$0xff] %v945
                  %v947 = vld [vmem:[%s565 + $0x8f0] sm:$0xff]
                  %948 = vst [vmem:[%s566 + $0x5f0] sm:$0xff] %v947
                  %v949 = vld [vmem:[%s565 + $0x8f8] sm:$0xff]
                  %950 = vst [vmem:[%s566 + $0x5f8] sm:$0xff] %v949
                $region52: #{svm_forward.1} parent=46 // loop_footer
                  %s564 = sadd.s32 1, %s560
                $region53: #{svm_forward.1} parent=46 // loop_footer_branch
                  %559 = sbr.rel target = $region49
                $region54: #{svm_forward.1} parent=46 // loop_exit
                  _
              $region47: #{svm_forward.1} parent=31 // pred_fallthru
                _
              // Predicated region
              $region55: #{svm_forward.1} parent=31 // pred_check
                _
              $region56: #{svm_forward.1} parent=31 // pred_check_branch
                %952 = sbr.rel target = $region58
              $region57: #{svm_forward.1} parent=31 // pred_region
                _
              $region58: #{svm_forward.1} parent=31 // pred_fallthru
                _
            $region32: #{svm_forward.1} parent=27 // pred_fallthru
              _
            // Predicated region
            $region33: #{svm_forward.1} parent=27 // pred_check
              _
            $region34: #{svm_forward.1} parent=27 // pred_check_branch
              %162 = sbr.rel target = $region36
            $region35: #{svm_forward.1} parent=27 // pred_region
              %s164 = ssub.s32 256, 1
              loop: start=0, step=1, limit=1
              $region37: #{svm_forward.1} parent=35 // loop_pre_header
                _
              $region38: #{svm_forward.1} parent=35 // loop_header
                %s166 = sphi 0, %s170
                %p167 = scmp.ge.s32.totalorder %s166, 1
                %s171 = sphi %s156, %s156
                %s172 = sphi %s152, %s152
              $region39: #{svm_forward.1} parent=35 // loop_header_branch
                %169 = sbr.rel (%p167) target = $region43
              $region40: #{svm_forward.1} parent=35 // loop_body
                %v173 = vld [vmem:[%s171] sm:%s164]
                %174 = vst [vmem:[%s172] sm:%s164] %v173
                %v175 = vld [vmem:[%s171 + $0x8] sm:%s164]
                %176 = vst [vmem:[%s172 + $0x8] sm:%s164] %v175
                %v177 = vld [vmem:[%s171 + $0x10] sm:%s164]
                %178 = vst [vmem:[%s172 + $0x10] sm:%s164] %v177
                %v179 = vld [vmem:[%s171 + $0x18] sm:%s164]
                %180 = vst [vmem:[%s172 + $0x18] sm:%s164] %v179
                %v181 = vld [vmem:[%s171 + $0x20] sm:%s164]
                %182 = vst [vmem:[%s172 + $0x20] sm:%s164] %v181
                %v183 = vld [vmem:[%s171 + $0x28] sm:%s164]
                %184 = vst [vmem:[%s172 + $0x28] sm:%s164] %v183
                %v185 = vld [vmem:[%s171 + $0x30] sm:%s164]
                %186 = vst [vmem:[%s172 + $0x30] sm:%s164] %v185
                %v187 = vld [vmem:[%s171 + $0x38] sm:%s164]
                %188 = vst [vmem:[%s172 + $0x38] sm:%s164] %v187
                %v189 = vld [vmem:[%s171 + $0x40] sm:%s164]
                %190 = vst [vmem:[%s172 + $0x40] sm:%s164] %v189
                %v191 = vld [vmem:[%s171 + $0x48] sm:%s164]
                %192 = vst [vmem:[%s172 + $0x48] sm:%s164] %v191
                %v193 = vld [vmem:[%s171 + $0x50] sm:%s164]
                %194 = vst [vmem:[%s172 + $0x50] sm:%s164] %v193
                %v195 = vld [vmem:[%s171 + $0x58] sm:%s164]
                %196 = vst [vmem:[%s172 + $0x58] sm:%s164] %v195
                %v197 = vld [vmem:[%s171 + $0x60] sm:%s164]
                %198 = vst [vmem:[%s172 + $0x60] sm:%s164] %v197
                %v199 = vld [vmem:[%s171 + $0x68] sm:%s164]
                %200 = vst [vmem:[%s172 + $0x68] sm:%s164] %v199
                %v201 = vld [vmem:[%s171 + $0x70] sm:%s164]
                %202 = vst [vmem:[%s172 + $0x70] sm:%s164] %v201
                %v203 = vld [vmem:[%s171 + $0x78] sm:%s164]
                %204 = vst [vmem:[%s172 + $0x78] sm:%s164] %v203
                %v205 = vld [vmem:[%s171 + $0x80] sm:%s164]
                %206 = vst [vmem:[%s172 + $0x80] sm:%s164] %v205
                %v207 = vld [vmem:[%s171 + $0x88] sm:%s164]
                %208 = vst [vmem:[%s172 + $0x88] sm:%s164] %v207
                %v209 = vld [vmem:[%s171 + $0x90] sm:%s164]
                %210 = vst [vmem:[%s172 + $0x90] sm:%s164] %v209
                %v211 = vld [vmem:[%s171 + $0x98] sm:%s164]
                %212 = vst [vmem:[%s172 + $0x98] sm:%s164] %v211
                %v213 = vld [vmem:[%s171 + $0xa0] sm:%s164]
                %214 = vst [vmem:[%s172 + $0xa0] sm:%s164] %v213
                %v215 = vld [vmem:[%s171 + $0xa8] sm:%s164]
                %216 = vst [vmem:[%s172 + $0xa8] sm:%s164] %v215
                %v217 = vld [vmem:[%s171 + $0xb0] sm:%s164]
                %218 = vst [vmem:[%s172 + $0xb0] sm:%s164] %v217
                %v219 = vld [vmem:[%s171 + $0xb8] sm:%s164]
                %220 = vst [vmem:[%s172 + $0xb8] sm:%s164] %v219
                %v221 = vld [vmem:[%s171 + $0xc0] sm:%s164]
                %222 = vst [vmem:[%s172 + $0xc0] sm:%s164] %v221
                %v223 = vld [vmem:[%s171 + $0xc8] sm:%s164]
                %224 = vst [vmem:[%s172 + $0xc8] sm:%s164] %v223
                %v225 = vld [vmem:[%s171 + $0xd0] sm:%s164]
                %226 = vst [vmem:[%s172 + $0xd0] sm:%s164] %v225
                %v227 = vld [vmem:[%s171 + $0xd8] sm:%s164]
                %228 = vst [vmem:[%s172 + $0xd8] sm:%s164] %v227
                %v229 = vld [vmem:[%s171 + $0xe0] sm:%s164]
                %230 = vst [vmem:[%s172 + $0xe0] sm:%s164] %v229
                %v231 = vld [vmem:[%s171 + $0xe8] sm:%s164]
                %232 = vst [vmem:[%s172 + $0xe8] sm:%s164] %v231
                %v233 = vld [vmem:[%s171 + $0xf0] sm:%s164]
                %234 = vst [vmem:[%s172 + $0xf0] sm:%s164] %v233
                %v235 = vld [vmem:[%s171 + $0xf8] sm:%s164]
                %236 = vst [vmem:[%s172 + $0xf8] sm:%s164] %v235
                %v237 = vld [vmem:[%s171 + $0x100] sm:%s164]
                %238 = vst [vmem:[%s172 + $0x100] sm:%s164] %v237
                %v239 = vld [vmem:[%s171 + $0x108] sm:%s164]
                %240 = vst [vmem:[%s172 + $0x108] sm:%s164] %v239
                %v241 = vld [vmem:[%s171 + $0x110] sm:%s164]
                %242 = vst [vmem:[%s172 + $0x110] sm:%s164] %v241
                %v243 = vld [vmem:[%s171 + $0x118] sm:%s164]
                %244 = vst [vmem:[%s172 + $0x118] sm:%s164] %v243
                %v245 = vld [vmem:[%s171 + $0x120] sm:%s164]
                %246 = vst [vmem:[%s172 + $0x120] sm:%s164] %v245
                %v247 = vld [vmem:[%s171 + $0x128] sm:%s164]
                %248 = vst [vmem:[%s172 + $0x128] sm:%s164] %v247
                %v249 = vld [vmem:[%s171 + $0x130] sm:%s164]
                %250 = vst [vmem:[%s172 + $0x130] sm:%s164] %v249
                %v251 = vld [vmem:[%s171 + $0x138] sm:%s164]
                %252 = vst [vmem:[%s172 + $0x138] sm:%s164] %v251
                %v253 = vld [vmem:[%s171 + $0x140] sm:%s164]
                %254 = vst [vmem:[%s172 + $0x140] sm:%s164] %v253
                %v255 = vld [vmem:[%s171 + $0x148] sm:%s164]
                %256 = vst [vmem:[%s172 + $0x148] sm:%s164] %v255
                %v257 = vld [vmem:[%s171 + $0x150] sm:%s164]
                %258 = vst [vmem:[%s172 + $0x150] sm:%s164] %v257
                %v259 = vld [vmem:[%s171 + $0x158] sm:%s164]
                %260 = vst [vmem:[%s172 + $0x158] sm:%s164] %v259
                %v261 = vld [vmem:[%s171 + $0x160] sm:%s164]
                %262 = vst [vmem:[%s172 + $0x160] sm:%s164] %v261
                %v263 = vld [vmem:[%s171 + $0x168] sm:%s164]
                %264 = vst [vmem:[%s172 + $0x168] sm:%s164] %v263
                %v265 = vld [vmem:[%s171 + $0x170] sm:%s164]
                %266 = vst [vmem:[%s172 + $0x170] sm:%s164] %v265
                %v267 = vld [vmem:[%s171 + $0x178] sm:%s164]
                %268 = vst [vmem:[%s172 + $0x178] sm:%s164] %v267
                %v269 = vld [vmem:[%s171 + $0x180] sm:%s164]
                %270 = vst [vmem:[%s172 + $0x180] sm:%s164] %v269
                %v271 = vld [vmem:[%s171 + $0x188] sm:%s164]
                %272 = vst [vmem:[%s172 + $0x188] sm:%s164] %v271
                %v273 = vld [vmem:[%s171 + $0x190] sm:%s164]
                %274 = vst [vmem:[%s172 + $0x190] sm:%s164] %v273
                %v275 = vld [vmem:[%s171 + $0x198] sm:%s164]
                %276 = vst [vmem:[%s172 + $0x198] sm:%s164] %v275
                %v277 = vld [vmem:[%s171 + $0x1a0] sm:%s164]
                %278 = vst [vmem:[%s172 + $0x1a0] sm:%s164] %v277
                %v279 = vld [vmem:[%s171 + $0x1a8] sm:%s164]
                %280 = vst [vmem:[%s172 + $0x1a8] sm:%s164] %v279
                %v281 = vld [vmem:[%s171 + $0x1b0] sm:%s164]
                %282 = vst [vmem:[%s172 + $0x1b0] sm:%s164] %v281
                %v283 = vld [vmem:[%s171 + $0x1b8] sm:%s164]
                %284 = vst [vmem:[%s172 + $0x1b8] sm:%s164] %v283
                %v285 = vld [vmem:[%s171 + $0x1c0] sm:%s164]
                %286 = vst [vmem:[%s172 + $0x1c0] sm:%s164] %v285
                %v287 = vld [vmem:[%s171 + $0x1c8] sm:%s164]
                %288 = vst [vmem:[%s172 + $0x1c8] sm:%s164] %v287
                %v289 = vld [vmem:[%s171 + $0x1d0] sm:%s164]
                %290 = vst [vmem:[%s172 + $0x1d0] sm:%s164] %v289
                %v291 = vld [vmem:[%s171 + $0x1d8] sm:%s164]
                %292 = vst [vmem:[%s172 + $0x1d8] sm:%s164] %v291
                %v293 = vld [vmem:[%s171 + $0x1e0] sm:%s164]
                %294 = vst [vmem:[%s172 + $0x1e0] sm:%s164] %v293
                %v295 = vld [vmem:[%s171 + $0x1e8] sm:%s164]
                %296 = vst [vmem:[%s172 + $0x1e8] sm:%s164] %v295
                %v297 = vld [vmem:[%s171 + $0x1f0] sm:%s164]
                %298 = vst [vmem:[%s172 + $0x1f0] sm:%s164] %v297
                %v299 = vld [vmem:[%s171 + $0x1f8] sm:%s164]
                %300 = vst [vmem:[%s172 + $0x1f8] sm:%s164] %v299
                %v301 = vld [vmem:[%s171 + $0x200] sm:%s164]
                %302 = vst [vmem:[%s172 + $0x200] sm:%s164] %v301
                %v303 = vld [vmem:[%s171 + $0x208] sm:%s164]
                %304 = vst [vmem:[%s172 + $0x208] sm:%s164] %v303
                %v305 = vld [vmem:[%s171 + $0x210] sm:%s164]
                %306 = vst [vmem:[%s172 + $0x210] sm:%s164] %v305
                %v307 = vld [vmem:[%s171 + $0x218] sm:%s164]
                %308 = vst [vmem:[%s172 + $0x218] sm:%s164] %v307
                %v309 = vld [vmem:[%s171 + $0x220] sm:%s164]
                %310 = vst [vmem:[%s172 + $0x220] sm:%s164] %v309
                %v311 = vld [vmem:[%s171 + $0x228] sm:%s164]
                %312 = vst [vmem:[%s172 + $0x228] sm:%s164] %v311
                %v313 = vld [vmem:[%s171 + $0x230] sm:%s164]
                %314 = vst [vmem:[%s172 + $0x230] sm:%s164] %v313
                %v315 = vld [vmem:[%s171 + $0x238] sm:%s164]
                %316 = vst [vmem:[%s172 + $0x238] sm:%s164] %v315
                %v317 = vld [vmem:[%s171 + $0x240] sm:%s164]
                %318 = vst [vmem:[%s172 + $0x240] sm:%s164] %v317
                %v319 = vld [vmem:[%s171 + $0x248] sm:%s164]
                %320 = vst [vmem:[%s172 + $0x248] sm:%s164] %v319
                %v321 = vld [vmem:[%s171 + $0x250] sm:%s164]
                %322 = vst [vmem:[%s172 + $0x250] sm:%s164] %v321
                %v323 = vld [vmem:[%s171 + $0x258] sm:%s164]
                %324 = vst [vmem:[%s172 + $0x258] sm:%s164] %v323
                %v325 = vld [vmem:[%s171 + $0x260] sm:%s164]
                %326 = vst [vmem:[%s172 + $0x260] sm:%s164] %v325
                %v327 = vld [vmem:[%s171 + $0x268] sm:%s164]
                %328 = vst [vmem:[%s172 + $0x268] sm:%s164] %v327
                %v329 = vld [vmem:[%s171 + $0x270] sm:%s164]
                %330 = vst [vmem:[%s172 + $0x270] sm:%s164] %v329
                %v331 = vld [vmem:[%s171 + $0x278] sm:%s164]
                %332 = vst [vmem:[%s172 + $0x278] sm:%s164] %v331
                %v333 = vld [vmem:[%s171 + $0x280] sm:%s164]
                %334 = vst [vmem:[%s172 + $0x280] sm:%s164] %v333
                %v335 = vld [vmem:[%s171 + $0x288] sm:%s164]
                %336 = vst [vmem:[%s172 + $0x288] sm:%s164] %v335
                %v337 = vld [vmem:[%s171 + $0x290] sm:%s164]
                %338 = vst [vmem:[%s172 + $0x290] sm:%s164] %v337
                %v339 = vld [vmem:[%s171 + $0x298] sm:%s164]
                %340 = vst [vmem:[%s172 + $0x298] sm:%s164] %v339
                %v341 = vld [vmem:[%s171 + $0x2a0] sm:%s164]
                %342 = vst [vmem:[%s172 + $0x2a0] sm:%s164] %v341
                %v343 = vld [vmem:[%s171 + $0x2a8] sm:%s164]
                %344 = vst [vmem:[%s172 + $0x2a8] sm:%s164] %v343
                %v345 = vld [vmem:[%s171 + $0x2b0] sm:%s164]
                %346 = vst [vmem:[%s172 + $0x2b0] sm:%s164] %v345
                %v347 = vld [vmem:[%s171 + $0x2b8] sm:%s164]
                %348 = vst [vmem:[%s172 + $0x2b8] sm:%s164] %v347
                %v349 = vld [vmem:[%s171 + $0x2c0] sm:%s164]
                %350 = vst [vmem:[%s172 + $0x2c0] sm:%s164] %v349
                %v351 = vld [vmem:[%s171 + $0x2c8] sm:%s164]
                %352 = vst [vmem:[%s172 + $0x2c8] sm:%s164] %v351
                %v353 = vld [vmem:[%s171 + $0x2d0] sm:%s164]
                %354 = vst [vmem:[%s172 + $0x2d0] sm:%s164] %v353
                %v355 = vld [vmem:[%s171 + $0x2d8] sm:%s164]
                %356 = vst [vmem:[%s172 + $0x2d8] sm:%s164] %v355
                %v357 = vld [vmem:[%s171 + $0x2e0] sm:%s164]
                %358 = vst [vmem:[%s172 + $0x2e0] sm:%s164] %v357
                %v359 = vld [vmem:[%s171 + $0x2e8] sm:%s164]
                %360 = vst [vmem:[%s172 + $0x2e8] sm:%s164] %v359
                %v361 = vld [vmem:[%s171 + $0x2f0] sm:%s164]
                %362 = vst [vmem:[%s172 + $0x2f0] sm:%s164] %v361
                %v363 = vld [vmem:[%s171 + $0x2f8] sm:%s164]
                %364 = vst [vmem:[%s172 + $0x2f8] sm:%s164] %v363
                %v365 = vld [vmem:[%s171 + $0x600] sm:%s164]
                %366 = vst [vmem:[%s172 + $0x300] sm:%s164] %v365
                %v367 = vld [vmem:[%s171 + $0x608] sm:%s164]
                %368 = vst [vmem:[%s172 + $0x308] sm:%s164] %v367
                %v369 = vld [vmem:[%s171 + $0x610] sm:%s164]
                %370 = vst [vmem:[%s172 + $0x310] sm:%s164] %v369
                %v371 = vld [vmem:[%s171 + $0x618] sm:%s164]
                %372 = vst [vmem:[%s172 + $0x318] sm:%s164] %v371
                %v373 = vld [vmem:[%s171 + $0x620] sm:%s164]
                %374 = vst [vmem:[%s172 + $0x320] sm:%s164] %v373
                %v375 = vld [vmem:[%s171 + $0x628] sm:%s164]
                %376 = vst [vmem:[%s172 + $0x328] sm:%s164] %v375
                %v377 = vld [vmem:[%s171 + $0x630] sm:%s164]
                %378 = vst [vmem:[%s172 + $0x330] sm:%s164] %v377
                %v379 = vld [vmem:[%s171 + $0x638] sm:%s164]
                %380 = vst [vmem:[%s172 + $0x338] sm:%s164] %v379
                %v381 = vld [vmem:[%s171 + $0x640] sm:%s164]
                %382 = vst [vmem:[%s172 + $0x340] sm:%s164] %v381
                %v383 = vld [vmem:[%s171 + $0x648] sm:%s164]
                %384 = vst [vmem:[%s172 + $0x348] sm:%s164] %v383
                %v385 = vld [vmem:[%s171 + $0x650] sm:%s164]
                %386 = vst [vmem:[%s172 + $0x350] sm:%s164] %v385
                %v387 = vld [vmem:[%s171 + $0x658] sm:%s164]
                %388 = vst [vmem:[%s172 + $0x358] sm:%s164] %v387
                %v389 = vld [vmem:[%s171 + $0x660] sm:%s164]
                %390 = vst [vmem:[%s172 + $0x360] sm:%s164] %v389
                %v391 = vld [vmem:[%s171 + $0x668] sm:%s164]
                %392 = vst [vmem:[%s172 + $0x368] sm:%s164] %v391
                %v393 = vld [vmem:[%s171 + $0x670] sm:%s164]
                %394 = vst [vmem:[%s172 + $0x370] sm:%s164] %v393
                %v395 = vld [vmem:[%s171 + $0x678] sm:%s164]
                %396 = vst [vmem:[%s172 + $0x378] sm:%s164] %v395
                %v397 = vld [vmem:[%s171 + $0x680] sm:%s164]
                %398 = vst [vmem:[%s172 + $0x380] sm:%s164] %v397
                %v399 = vld [vmem:[%s171 + $0x688] sm:%s164]
                %400 = vst [vmem:[%s172 + $0x388] sm:%s164] %v399
                %v401 = vld [vmem:[%s171 + $0x690] sm:%s164]
                %402 = vst [vmem:[%s172 + $0x390] sm:%s164] %v401
                %v403 = vld [vmem:[%s171 + $0x698] sm:%s164]
                %404 = vst [vmem:[%s172 + $0x398] sm:%s164] %v403
                %v405 = vld [vmem:[%s171 + $0x6a0] sm:%s164]
                %406 = vst [vmem:[%s172 + $0x3a0] sm:%s164] %v405
                %v407 = vld [vmem:[%s171 + $0x6a8] sm:%s164]
                %408 = vst [vmem:[%s172 + $0x3a8] sm:%s164] %v407
                %v409 = vld [vmem:[%s171 + $0x6b0] sm:%s164]
                %410 = vst [vmem:[%s172 + $0x3b0] sm:%s164] %v409
                %v411 = vld [vmem:[%s171 + $0x6b8] sm:%s164]
                %412 = vst [vmem:[%s172 + $0x3b8] sm:%s164] %v411
                %v413 = vld [vmem:[%s171 + $0x6c0] sm:%s164]
                %414 = vst [vmem:[%s172 + $0x3c0] sm:%s164] %v413
                %v415 = vld [vmem:[%s171 + $0x6c8] sm:%s164]
                %416 = vst [vmem:[%s172 + $0x3c8] sm:%s164] %v415
                %v417 = vld [vmem:[%s171 + $0x6d0] sm:%s164]
                %418 = vst [vmem:[%s172 + $0x3d0] sm:%s164] %v417
                %v419 = vld [vmem:[%s171 + $0x6d8] sm:%s164]
                %420 = vst [vmem:[%s172 + $0x3d8] sm:%s164] %v419
                %v421 = vld [vmem:[%s171 + $0x6e0] sm:%s164]
                %422 = vst [vmem:[%s172 + $0x3e0] sm:%s164] %v421
                %v423 = vld [vmem:[%s171 + $0x6e8] sm:%s164]
                %424 = vst [vmem:[%s172 + $0x3e8] sm:%s164] %v423
                %v425 = vld [vmem:[%s171 + $0x6f0] sm:%s164]
                %426 = vst [vmem:[%s172 + $0x3f0] sm:%s164] %v425
                %v427 = vld [vmem:[%s171 + $0x6f8] sm:%s164]
                %428 = vst [vmem:[%s172 + $0x3f8] sm:%s164] %v427
                %v429 = vld [vmem:[%s171 + $0x700] sm:%s164]
                %430 = vst [vmem:[%s172 + $0x400] sm:%s164] %v429
                %v431 = vld [vmem:[%s171 + $0x708] sm:%s164]
                %432 = vst [vmem:[%s172 + $0x408] sm:%s164] %v431
                %v433 = vld [vmem:[%s171 + $0x710] sm:%s164]
                %434 = vst [vmem:[%s172 + $0x410] sm:%s164] %v433
                %v435 = vld [vmem:[%s171 + $0x718] sm:%s164]
                %436 = vst [vmem:[%s172 + $0x418] sm:%s164] %v435
                %v437 = vld [vmem:[%s171 + $0x720] sm:%s164]
                %438 = vst [vmem:[%s172 + $0x420] sm:%s164] %v437
                %v439 = vld [vmem:[%s171 + $0x728] sm:%s164]
                %440 = vst [vmem:[%s172 + $0x428] sm:%s164] %v439
                %v441 = vld [vmem:[%s171 + $0x730] sm:%s164]
                %442 = vst [vmem:[%s172 + $0x430] sm:%s164] %v441
                %v443 = vld [vmem:[%s171 + $0x738] sm:%s164]
                %444 = vst [vmem:[%s172 + $0x438] sm:%s164] %v443
                %v445 = vld [vmem:[%s171 + $0x740] sm:%s164]
                %446 = vst [vmem:[%s172 + $0x440] sm:%s164] %v445
                %v447 = vld [vmem:[%s171 + $0x748] sm:%s164]
                %448 = vst [vmem:[%s172 + $0x448] sm:%s164] %v447
                %v449 = vld [vmem:[%s171 + $0x750] sm:%s164]
                %450 = vst [vmem:[%s172 + $0x450] sm:%s164] %v449
                %v451 = vld [vmem:[%s171 + $0x758] sm:%s164]
                %452 = vst [vmem:[%s172 + $0x458] sm:%s164] %v451
                %v453 = vld [vmem:[%s171 + $0x760] sm:%s164]
                %454 = vst [vmem:[%s172 + $0x460] sm:%s164] %v453
                %v455 = vld [vmem:[%s171 + $0x768] sm:%s164]
                %456 = vst [vmem:[%s172 + $0x468] sm:%s164] %v455
                %v457 = vld [vmem:[%s171 + $0x770] sm:%s164]
                %458 = vst [vmem:[%s172 + $0x470] sm:%s164] %v457
                %v459 = vld [vmem:[%s171 + $0x778] sm:%s164]
                %460 = vst [vmem:[%s172 + $0x478] sm:%s164] %v459
                %v461 = vld [vmem:[%s171 + $0x780] sm:%s164]
                %462 = vst [vmem:[%s172 + $0x480] sm:%s164] %v461
                %v463 = vld [vmem:[%s171 + $0x788] sm:%s164]
                %464 = vst [vmem:[%s172 + $0x488] sm:%s164] %v463
                %v465 = vld [vmem:[%s171 + $0x790] sm:%s164]
                %466 = vst [vmem:[%s172 + $0x490] sm:%s164] %v465
                %v467 = vld [vmem:[%s171 + $0x798] sm:%s164]
                %468 = vst [vmem:[%s172 + $0x498] sm:%s164] %v467
                %v469 = vld [vmem:[%s171 + $0x7a0] sm:%s164]
                %470 = vst [vmem:[%s172 + $0x4a0] sm:%s164] %v469
                %v471 = vld [vmem:[%s171 + $0x7a8] sm:%s164]
                %472 = vst [vmem:[%s172 + $0x4a8] sm:%s164] %v471
                %v473 = vld [vmem:[%s171 + $0x7b0] sm:%s164]
                %474 = vst [vmem:[%s172 + $0x4b0] sm:%s164] %v473
                %v475 = vld [vmem:[%s171 + $0x7b8] sm:%s164]
                %476 = vst [vmem:[%s172 + $0x4b8] sm:%s164] %v475
                %v477 = vld [vmem:[%s171 + $0x7c0] sm:%s164]
                %478 = vst [vmem:[%s172 + $0x4c0] sm:%s164] %v477
                %v479 = vld [vmem:[%s171 + $0x7c8] sm:%s164]
                %480 = vst [vmem:[%s172 + $0x4c8] sm:%s164] %v479
                %v481 = vld [vmem:[%s171 + $0x7d0] sm:%s164]
                %482 = vst [vmem:[%s172 + $0x4d0] sm:%s164] %v481
                %v483 = vld [vmem:[%s171 + $0x7d8] sm:%s164]
                %484 = vst [vmem:[%s172 + $0x4d8] sm:%s164] %v483
                %v485 = vld [vmem:[%s171 + $0x7e0] sm:%s164]
                %486 = vst [vmem:[%s172 + $0x4e0] sm:%s164] %v485
                %v487 = vld [vmem:[%s171 + $0x7e8] sm:%s164]
                %488 = vst [vmem:[%s172 + $0x4e8] sm:%s164] %v487
                %v489 = vld [vmem:[%s171 + $0x7f0] sm:%s164]
                %490 = vst [vmem:[%s172 + $0x4f0] sm:%s164] %v489
                %v491 = vld [vmem:[%s171 + $0x7f8] sm:%s164]
                %492 = vst [vmem:[%s172 + $0x4f8] sm:%s164] %v491
                %v493 = vld [vmem:[%s171 + $0x800] sm:%s164]
                %494 = vst [vmem:[%s172 + $0x500] sm:%s164] %v493
                %v495 = vld [vmem:[%s171 + $0x808] sm:%s164]
                %496 = vst [vmem:[%s172 + $0x508] sm:%s164] %v495
                %v497 = vld [vmem:[%s171 + $0x810] sm:%s164]
                %498 = vst [vmem:[%s172 + $0x510] sm:%s164] %v497
                %v499 = vld [vmem:[%s171 + $0x818] sm:%s164]
                %500 = vst [vmem:[%s172 + $0x518] sm:%s164] %v499
                %v501 = vld [vmem:[%s171 + $0x820] sm:%s164]
                %502 = vst [vmem:[%s172 + $0x520] sm:%s164] %v501
                %v503 = vld [vmem:[%s171 + $0x828] sm:%s164]
                %504 = vst [vmem:[%s172 + $0x528] sm:%s164] %v503
                %v505 = vld [vmem:[%s171 + $0x830] sm:%s164]
                %506 = vst [vmem:[%s172 + $0x530] sm:%s164] %v505
                %v507 = vld [vmem:[%s171 + $0x838] sm:%s164]
                %508 = vst [vmem:[%s172 + $0x538] sm:%s164] %v507
                %v509 = vld [vmem:[%s171 + $0x840] sm:%s164]
                %510 = vst [vmem:[%s172 + $0x540] sm:%s164] %v509
                %v511 = vld [vmem:[%s171 + $0x848] sm:%s164]
                %512 = vst [vmem:[%s172 + $0x548] sm:%s164] %v511
                %v513 = vld [vmem:[%s171 + $0x850] sm:%s164]
                %514 = vst [vmem:[%s172 + $0x550] sm:%s164] %v513
                %v515 = vld [vmem:[%s171 + $0x858] sm:%s164]
                %516 = vst [vmem:[%s172 + $0x558] sm:%s164] %v515
                %v517 = vld [vmem:[%s171 + $0x860] sm:%s164]
                %518 = vst [vmem:[%s172 + $0x560] sm:%s164] %v517
                %v519 = vld [vmem:[%s171 + $0x868] sm:%s164]
                %520 = vst [vmem:[%s172 + $0x568] sm:%s164] %v519
                %v521 = vld [vmem:[%s171 + $0x870] sm:%s164]
                %522 = vst [vmem:[%s172 + $0x570] sm:%s164] %v521
                %v523 = vld [vmem:[%s171 + $0x878] sm:%s164]
                %524 = vst [vmem:[%s172 + $0x578] sm:%s164] %v523
                %v525 = vld [vmem:[%s171 + $0x880] sm:%s164]
                %526 = vst [vmem:[%s172 + $0x580] sm:%s164] %v525
                %v527 = vld [vmem:[%s171 + $0x888] sm:%s164]
                %528 = vst [vmem:[%s172 + $0x588] sm:%s164] %v527
                %v529 = vld [vmem:[%s171 + $0x890] sm:%s164]
                %530 = vst [vmem:[%s172 + $0x590] sm:%s164] %v529
                %v531 = vld [vmem:[%s171 + $0x898] sm:%s164]
                %532 = vst [vmem:[%s172 + $0x598] sm:%s164] %v531
                %v533 = vld [vmem:[%s171 + $0x8a0] sm:%s164]
                %534 = vst [vmem:[%s172 + $0x5a0] sm:%s164] %v533
                %v535 = vld [vmem:[%s171 + $0x8a8] sm:%s164]
                %536 = vst [vmem:[%s172 + $0x5a8] sm:%s164] %v535
                %v537 = vld [vmem:[%s171 + $0x8b0] sm:%s164]
                %538 = vst [vmem:[%s172 + $0x5b0] sm:%s164] %v537
                %v539 = vld [vmem:[%s171 + $0x8b8] sm:%s164]
                %540 = vst [vmem:[%s172 + $0x5b8] sm:%s164] %v539
                %v541 = vld [vmem:[%s171 + $0x8c0] sm:%s164]
                %542 = vst [vmem:[%s172 + $0x5c0] sm:%s164] %v541
                %v543 = vld [vmem:[%s171 + $0x8c8] sm:%s164]
                %544 = vst [vmem:[%s172 + $0x5c8] sm:%s164] %v543
                %v545 = vld [vmem:[%s171 + $0x8d0] sm:%s164]
                %546 = vst [vmem:[%s172 + $0x5d0] sm:%s164] %v545
                %v547 = vld [vmem:[%s171 + $0x8d8] sm:%s164]
                %548 = vst [vmem:[%s172 + $0x5d8] sm:%s164] %v547
                %v549 = vld [vmem:[%s171 + $0x8e0] sm:%s164]
                %550 = vst [vmem:[%s172 + $0x5e0] sm:%s164] %v549
                %v551 = vld [vmem:[%s171 + $0x8e8] sm:%s164]
                %552 = vst [vmem:[%s172 + $0x5e8] sm:%s164] %v551
                %v553 = vld [vmem:[%s171 + $0x8f0] sm:%s164]
                %554 = vst [vmem:[%s172 + $0x5f0] sm:%s164] %v553
                %v555 = vld [vmem:[%s171 + $0x8f8] sm:%s164]
                %556 = vst [vmem:[%s172 + $0x5f8] sm:%s164] %v555
              $region41: #{svm_forward.1} parent=35 // loop_footer
                %s170 = sadd.s32 1, %s166
              $region42: #{svm_forward.1} parent=35 // loop_footer_branch
                %165 = sbr.rel target = $region38
              $region43: #{svm_forward.1} parent=35 // loop_exit
                _
            $region36: #{svm_forward.1} parent=27 // pred_fallthru
              _
          $region28: #{svm_forward.1} parent=23 // pred_fallthru
            _
          %953 = vnop
        $region24: #{svm_forward.1} parent=19 // pred_fallthru
          _
        // Predicated region
        $region59: #{svm_forward.1} parent=19 // pred_check
          %p954 = pneg %p71
        $region60: #{svm_forward.1} parent=19 // pred_check_branch
          %956 = sbr.rel (%p954) target = $region62
        $region61: #{svm_forward.1} parent=19 // pred_region
          %s957 = sand.u32 %s61, 1
          %s958 = sand.u32 %s61, 1
          %s959 = smul.addr %s958, 1536
          %s960 = scalar_lea.vmem [#allocation4], %s959
          %s961 = sadd.s32 %s16, %s17
          %s962 = smul.u32 96, %s961
          %s963 = smul.addr %s962, 8
          %s964 = scalar_lea.vmem %s1, %s963
          // Predicated region
          $region63: #{svm_forward.1} parent=61 // pred_check
            _
          $region64: #{svm_forward.1} parent=61 // pred_check_branch
            %966 = sbr.rel (0) target = $region66
          $region65: #{svm_forward.1} parent=61 // pred_region
            // Predicated region
            $region67: #{svm_forward.1} parent=65 // pred_check
              _
            $region68: #{svm_forward.1} parent=65 // pred_check_branch
              %968 = sbr.rel (0) target = $region70
            $region69: #{svm_forward.1} parent=65 // pred_region
              // Predicated region
              $region82: #{svm_forward.1} parent=69 // pred_check
                _
              $region83: #{svm_forward.1} parent=69 // pred_check_branch
                %1366 = sbr.rel (0) target = $region85
              $region84: #{svm_forward.1} parent=69 // pred_region
                loop: start=0, step=1, limit=1
                $region86: #{svm_forward.1} parent=84 // loop_pre_header
                  _
                $region87: #{svm_forward.1} parent=84 // loop_header
                  %s1368 = sphi 0, %s1372
                  %p1369 = scmp.ge.s32.totalorder %s1368, 1
                  %s1373 = sphi %s964, %s964
                  %s1374 = sphi %s960, %s960
                $region88: #{svm_forward.1} parent=84 // loop_header_branch
                  %1371 = sbr.rel (%p1369) target = $region92
                $region89: #{svm_forward.1} parent=84 // loop_body
                  %v1375 = vld [vmem:[%s1373] sm:$0xff]
                  %1376 = vst [vmem:[%s1374] sm:$0xff] %v1375
                  %v1377 = vld [vmem:[%s1373 + $0x8] sm:$0xff]
                  %1378 = vst [vmem:[%s1374 + $0x8] sm:$0xff] %v1377
                  %v1379 = vld [vmem:[%s1373 + $0x10] sm:$0xff]
                  %1380 = vst [vmem:[%s1374 + $0x10] sm:$0xff] %v1379
                  %v1381 = vld [vmem:[%s1373 + $0x18] sm:$0xff]
                  %1382 = vst [vmem:[%s1374 + $0x18] sm:$0xff] %v1381
                  %v1383 = vld [vmem:[%s1373 + $0x20] sm:$0xff]
                  %1384 = vst [vmem:[%s1374 + $0x20] sm:$0xff] %v1383
                  %v1385 = vld [vmem:[%s1373 + $0x28] sm:$0xff]
                  %1386 = vst [vmem:[%s1374 + $0x28] sm:$0xff] %v1385
                  %v1387 = vld [vmem:[%s1373 + $0x30] sm:$0xff]
                  %1388 = vst [vmem:[%s1374 + $0x30] sm:$0xff] %v1387
                  %v1389 = vld [vmem:[%s1373 + $0x38] sm:$0xff]
                  %1390 = vst [vmem:[%s1374 + $0x38] sm:$0xff] %v1389
                  %v1391 = vld [vmem:[%s1373 + $0x40] sm:$0xff]
                  %1392 = vst [vmem:[%s1374 + $0x40] sm:$0xff] %v1391
                  %v1393 = vld [vmem:[%s1373 + $0x48] sm:$0xff]
                  %1394 = vst [vmem:[%s1374 + $0x48] sm:$0xff] %v1393
                  %v1395 = vld [vmem:[%s1373 + $0x50] sm:$0xff]
                  %1396 = vst [vmem:[%s1374 + $0x50] sm:$0xff] %v1395
                  %v1397 = vld [vmem:[%s1373 + $0x58] sm:$0xff]
                  %1398 = vst [vmem:[%s1374 + $0x58] sm:$0xff] %v1397
                  %v1399 = vld [vmem:[%s1373 + $0x60] sm:$0xff]
                  %1400 = vst [vmem:[%s1374 + $0x60] sm:$0xff] %v1399
                  %v1401 = vld [vmem:[%s1373 + $0x68] sm:$0xff]
                  %1402 = vst [vmem:[%s1374 + $0x68] sm:$0xff] %v1401
                  %v1403 = vld [vmem:[%s1373 + $0x70] sm:$0xff]
                  %1404 = vst [vmem:[%s1374 + $0x70] sm:$0xff] %v1403
                  %v1405 = vld [vmem:[%s1373 + $0x78] sm:$0xff]
                  %1406 = vst [vmem:[%s1374 + $0x78] sm:$0xff] %v1405
                  %v1407 = vld [vmem:[%s1373 + $0x80] sm:$0xff]
                  %1408 = vst [vmem:[%s1374 + $0x80] sm:$0xff] %v1407
                  %v1409 = vld [vmem:[%s1373 + $0x88] sm:$0xff]
                  %1410 = vst [vmem:[%s1374 + $0x88] sm:$0xff] %v1409
                  %v1411 = vld [vmem:[%s1373 + $0x90] sm:$0xff]
                  %1412 = vst [vmem:[%s1374 + $0x90] sm:$0xff] %v1411
                  %v1413 = vld [vmem:[%s1373 + $0x98] sm:$0xff]
                  %1414 = vst [vmem:[%s1374 + $0x98] sm:$0xff] %v1413
                  %v1415 = vld [vmem:[%s1373 + $0xa0] sm:$0xff]
                  %1416 = vst [vmem:[%s1374 + $0xa0] sm:$0xff] %v1415
                  %v1417 = vld [vmem:[%s1373 + $0xa8] sm:$0xff]
                  %1418 = vst [vmem:[%s1374 + $0xa8] sm:$0xff] %v1417
                  %v1419 = vld [vmem:[%s1373 + $0xb0] sm:$0xff]
                  %1420 = vst [vmem:[%s1374 + $0xb0] sm:$0xff] %v1419
                  %v1421 = vld [vmem:[%s1373 + $0xb8] sm:$0xff]
                  %1422 = vst [vmem:[%s1374 + $0xb8] sm:$0xff] %v1421
                  %v1423 = vld [vmem:[%s1373 + $0xc0] sm:$0xff]
                  %1424 = vst [vmem:[%s1374 + $0xc0] sm:$0xff] %v1423
                  %v1425 = vld [vmem:[%s1373 + $0xc8] sm:$0xff]
                  %1426 = vst [vmem:[%s1374 + $0xc8] sm:$0xff] %v1425
                  %v1427 = vld [vmem:[%s1373 + $0xd0] sm:$0xff]
                  %1428 = vst [vmem:[%s1374 + $0xd0] sm:$0xff] %v1427
                  %v1429 = vld [vmem:[%s1373 + $0xd8] sm:$0xff]
                  %1430 = vst [vmem:[%s1374 + $0xd8] sm:$0xff] %v1429
                  %v1431 = vld [vmem:[%s1373 + $0xe0] sm:$0xff]
                  %1432 = vst [vmem:[%s1374 + $0xe0] sm:$0xff] %v1431
                  %v1433 = vld [vmem:[%s1373 + $0xe8] sm:$0xff]
                  %1434 = vst [vmem:[%s1374 + $0xe8] sm:$0xff] %v1433
                  %v1435 = vld [vmem:[%s1373 + $0xf0] sm:$0xff]
                  %1436 = vst [vmem:[%s1374 + $0xf0] sm:$0xff] %v1435
                  %v1437 = vld [vmem:[%s1373 + $0xf8] sm:$0xff]
                  %1438 = vst [vmem:[%s1374 + $0xf8] sm:$0xff] %v1437
                  %v1439 = vld [vmem:[%s1373 + $0x100] sm:$0xff]
                  %1440 = vst [vmem:[%s1374 + $0x100] sm:$0xff] %v1439
                  %v1441 = vld [vmem:[%s1373 + $0x108] sm:$0xff]
                  %1442 = vst [vmem:[%s1374 + $0x108] sm:$0xff] %v1441
                  %v1443 = vld [vmem:[%s1373 + $0x110] sm:$0xff]
                  %1444 = vst [vmem:[%s1374 + $0x110] sm:$0xff] %v1443
                  %v1445 = vld [vmem:[%s1373 + $0x118] sm:$0xff]
                  %1446 = vst [vmem:[%s1374 + $0x118] sm:$0xff] %v1445
                  %v1447 = vld [vmem:[%s1373 + $0x120] sm:$0xff]
                  %1448 = vst [vmem:[%s1374 + $0x120] sm:$0xff] %v1447
                  %v1449 = vld [vmem:[%s1373 + $0x128] sm:$0xff]
                  %1450 = vst [vmem:[%s1374 + $0x128] sm:$0xff] %v1449
                  %v1451 = vld [vmem:[%s1373 + $0x130] sm:$0xff]
                  %1452 = vst [vmem:[%s1374 + $0x130] sm:$0xff] %v1451
                  %v1453 = vld [vmem:[%s1373 + $0x138] sm:$0xff]
                  %1454 = vst [vmem:[%s1374 + $0x138] sm:$0xff] %v1453
                  %v1455 = vld [vmem:[%s1373 + $0x140] sm:$0xff]
                  %1456 = vst [vmem:[%s1374 + $0x140] sm:$0xff] %v1455
                  %v1457 = vld [vmem:[%s1373 + $0x148] sm:$0xff]
                  %1458 = vst [vmem:[%s1374 + $0x148] sm:$0xff] %v1457
                  %v1459 = vld [vmem:[%s1373 + $0x150] sm:$0xff]
                  %1460 = vst [vmem:[%s1374 + $0x150] sm:$0xff] %v1459
                  %v1461 = vld [vmem:[%s1373 + $0x158] sm:$0xff]
                  %1462 = vst [vmem:[%s1374 + $0x158] sm:$0xff] %v1461
                  %v1463 = vld [vmem:[%s1373 + $0x160] sm:$0xff]
                  %1464 = vst [vmem:[%s1374 + $0x160] sm:$0xff] %v1463
                  %v1465 = vld [vmem:[%s1373 + $0x168] sm:$0xff]
                  %1466 = vst [vmem:[%s1374 + $0x168] sm:$0xff] %v1465
                  %v1467 = vld [vmem:[%s1373 + $0x170] sm:$0xff]
                  %1468 = vst [vmem:[%s1374 + $0x170] sm:$0xff] %v1467
                  %v1469 = vld [vmem:[%s1373 + $0x178] sm:$0xff]
                  %1470 = vst [vmem:[%s1374 + $0x178] sm:$0xff] %v1469
                  %v1471 = vld [vmem:[%s1373 + $0x180] sm:$0xff]
                  %1472 = vst [vmem:[%s1374 + $0x180] sm:$0xff] %v1471
                  %v1473 = vld [vmem:[%s1373 + $0x188] sm:$0xff]
                  %1474 = vst [vmem:[%s1374 + $0x188] sm:$0xff] %v1473
                  %v1475 = vld [vmem:[%s1373 + $0x190] sm:$0xff]
                  %1476 = vst [vmem:[%s1374 + $0x190] sm:$0xff] %v1475
                  %v1477 = vld [vmem:[%s1373 + $0x198] sm:$0xff]
                  %1478 = vst [vmem:[%s1374 + $0x198] sm:$0xff] %v1477
                  %v1479 = vld [vmem:[%s1373 + $0x1a0] sm:$0xff]
                  %1480 = vst [vmem:[%s1374 + $0x1a0] sm:$0xff] %v1479
                  %v1481 = vld [vmem:[%s1373 + $0x1a8] sm:$0xff]
                  %1482 = vst [vmem:[%s1374 + $0x1a8] sm:$0xff] %v1481
                  %v1483 = vld [vmem:[%s1373 + $0x1b0] sm:$0xff]
                  %1484 = vst [vmem:[%s1374 + $0x1b0] sm:$0xff] %v1483
                  %v1485 = vld [vmem:[%s1373 + $0x1b8] sm:$0xff]
                  %1486 = vst [vmem:[%s1374 + $0x1b8] sm:$0xff] %v1485
                  %v1487 = vld [vmem:[%s1373 + $0x1c0] sm:$0xff]
                  %1488 = vst [vmem:[%s1374 + $0x1c0] sm:$0xff] %v1487
                  %v1489 = vld [vmem:[%s1373 + $0x1c8] sm:$0xff]
                  %1490 = vst [vmem:[%s1374 + $0x1c8] sm:$0xff] %v1489
                  %v1491 = vld [vmem:[%s1373 + $0x1d0] sm:$0xff]
                  %1492 = vst [vmem:[%s1374 + $0x1d0] sm:$0xff] %v1491
                  %v1493 = vld [vmem:[%s1373 + $0x1d8] sm:$0xff]
                  %1494 = vst [vmem:[%s1374 + $0x1d8] sm:$0xff] %v1493
                  %v1495 = vld [vmem:[%s1373 + $0x1e0] sm:$0xff]
                  %1496 = vst [vmem:[%s1374 + $0x1e0] sm:$0xff] %v1495
                  %v1497 = vld [vmem:[%s1373 + $0x1e8] sm:$0xff]
                  %1498 = vst [vmem:[%s1374 + $0x1e8] sm:$0xff] %v1497
                  %v1499 = vld [vmem:[%s1373 + $0x1f0] sm:$0xff]
                  %1500 = vst [vmem:[%s1374 + $0x1f0] sm:$0xff] %v1499
                  %v1501 = vld [vmem:[%s1373 + $0x1f8] sm:$0xff]
                  %1502 = vst [vmem:[%s1374 + $0x1f8] sm:$0xff] %v1501
                  %v1503 = vld [vmem:[%s1373 + $0x200] sm:$0xff]
                  %1504 = vst [vmem:[%s1374 + $0x200] sm:$0xff] %v1503
                  %v1505 = vld [vmem:[%s1373 + $0x208] sm:$0xff]
                  %1506 = vst [vmem:[%s1374 + $0x208] sm:$0xff] %v1505
                  %v1507 = vld [vmem:[%s1373 + $0x210] sm:$0xff]
                  %1508 = vst [vmem:[%s1374 + $0x210] sm:$0xff] %v1507
                  %v1509 = vld [vmem:[%s1373 + $0x218] sm:$0xff]
                  %1510 = vst [vmem:[%s1374 + $0x218] sm:$0xff] %v1509
                  %v1511 = vld [vmem:[%s1373 + $0x220] sm:$0xff]
                  %1512 = vst [vmem:[%s1374 + $0x220] sm:$0xff] %v1511
                  %v1513 = vld [vmem:[%s1373 + $0x228] sm:$0xff]
                  %1514 = vst [vmem:[%s1374 + $0x228] sm:$0xff] %v1513
                  %v1515 = vld [vmem:[%s1373 + $0x230] sm:$0xff]
                  %1516 = vst [vmem:[%s1374 + $0x230] sm:$0xff] %v1515
                  %v1517 = vld [vmem:[%s1373 + $0x238] sm:$0xff]
                  %1518 = vst [vmem:[%s1374 + $0x238] sm:$0xff] %v1517
                  %v1519 = vld [vmem:[%s1373 + $0x240] sm:$0xff]
                  %1520 = vst [vmem:[%s1374 + $0x240] sm:$0xff] %v1519
                  %v1521 = vld [vmem:[%s1373 + $0x248] sm:$0xff]
                  %1522 = vst [vmem:[%s1374 + $0x248] sm:$0xff] %v1521
                  %v1523 = vld [vmem:[%s1373 + $0x250] sm:$0xff]
                  %1524 = vst [vmem:[%s1374 + $0x250] sm:$0xff] %v1523
                  %v1525 = vld [vmem:[%s1373 + $0x258] sm:$0xff]
                  %1526 = vst [vmem:[%s1374 + $0x258] sm:$0xff] %v1525
                  %v1527 = vld [vmem:[%s1373 + $0x260] sm:$0xff]
                  %1528 = vst [vmem:[%s1374 + $0x260] sm:$0xff] %v1527
                  %v1529 = vld [vmem:[%s1373 + $0x268] sm:$0xff]
                  %1530 = vst [vmem:[%s1374 + $0x268] sm:$0xff] %v1529
                  %v1531 = vld [vmem:[%s1373 + $0x270] sm:$0xff]
                  %1532 = vst [vmem:[%s1374 + $0x270] sm:$0xff] %v1531
                  %v1533 = vld [vmem:[%s1373 + $0x278] sm:$0xff]
                  %1534 = vst [vmem:[%s1374 + $0x278] sm:$0xff] %v1533
                  %v1535 = vld [vmem:[%s1373 + $0x280] sm:$0xff]
                  %1536 = vst [vmem:[%s1374 + $0x280] sm:$0xff] %v1535
                  %v1537 = vld [vmem:[%s1373 + $0x288] sm:$0xff]
                  %1538 = vst [vmem:[%s1374 + $0x288] sm:$0xff] %v1537
                  %v1539 = vld [vmem:[%s1373 + $0x290] sm:$0xff]
                  %1540 = vst [vmem:[%s1374 + $0x290] sm:$0xff] %v1539
                  %v1541 = vld [vmem:[%s1373 + $0x298] sm:$0xff]
                  %1542 = vst [vmem:[%s1374 + $0x298] sm:$0xff] %v1541
                  %v1543 = vld [vmem:[%s1373 + $0x2a0] sm:$0xff]
                  %1544 = vst [vmem:[%s1374 + $0x2a0] sm:$0xff] %v1543
                  %v1545 = vld [vmem:[%s1373 + $0x2a8] sm:$0xff]
                  %1546 = vst [vmem:[%s1374 + $0x2a8] sm:$0xff] %v1545
                  %v1547 = vld [vmem:[%s1373 + $0x2b0] sm:$0xff]
                  %1548 = vst [vmem:[%s1374 + $0x2b0] sm:$0xff] %v1547
                  %v1549 = vld [vmem:[%s1373 + $0x2b8] sm:$0xff]
                  %1550 = vst [vmem:[%s1374 + $0x2b8] sm:$0xff] %v1549
                  %v1551 = vld [vmem:[%s1373 + $0x2c0] sm:$0xff]
                  %1552 = vst [vmem:[%s1374 + $0x2c0] sm:$0xff] %v1551
                  %v1553 = vld [vmem:[%s1373 + $0x2c8] sm:$0xff]
                  %1554 = vst [vmem:[%s1374 + $0x2c8] sm:$0xff] %v1553
                  %v1555 = vld [vmem:[%s1373 + $0x2d0] sm:$0xff]
                  %1556 = vst [vmem:[%s1374 + $0x2d0] sm:$0xff] %v1555
                  %v1557 = vld [vmem:[%s1373 + $0x2d8] sm:$0xff]
                  %1558 = vst [vmem:[%s1374 + $0x2d8] sm:$0xff] %v1557
                  %v1559 = vld [vmem:[%s1373 + $0x2e0] sm:$0xff]
                  %1560 = vst [vmem:[%s1374 + $0x2e0] sm:$0xff] %v1559
                  %v1561 = vld [vmem:[%s1373 + $0x2e8] sm:$0xff]
                  %1562 = vst [vmem:[%s1374 + $0x2e8] sm:$0xff] %v1561
                  %v1563 = vld [vmem:[%s1373 + $0x2f0] sm:$0xff]
                  %1564 = vst [vmem:[%s1374 + $0x2f0] sm:$0xff] %v1563
                  %v1565 = vld [vmem:[%s1373 + $0x2f8] sm:$0xff]
                  %1566 = vst [vmem:[%s1374 + $0x2f8] sm:$0xff] %v1565
                  %v1567 = vld [vmem:[%s1373 + $0x600] sm:$0xff]
                  %1568 = vst [vmem:[%s1374 + $0x300] sm:$0xff] %v1567
                  %v1569 = vld [vmem:[%s1373 + $0x608] sm:$0xff]
                  %1570 = vst [vmem:[%s1374 + $0x308] sm:$0xff] %v1569
                  %v1571 = vld [vmem:[%s1373 + $0x610] sm:$0xff]
                  %1572 = vst [vmem:[%s1374 + $0x310] sm:$0xff] %v1571
                  %v1573 = vld [vmem:[%s1373 + $0x618] sm:$0xff]
                  %1574 = vst [vmem:[%s1374 + $0x318] sm:$0xff] %v1573
                  %v1575 = vld [vmem:[%s1373 + $0x620] sm:$0xff]
                  %1576 = vst [vmem:[%s1374 + $0x320] sm:$0xff] %v1575
                  %v1577 = vld [vmem:[%s1373 + $0x628] sm:$0xff]
                  %1578 = vst [vmem:[%s1374 + $0x328] sm:$0xff] %v1577
                  %v1579 = vld [vmem:[%s1373 + $0x630] sm:$0xff]
                  %1580 = vst [vmem:[%s1374 + $0x330] sm:$0xff] %v1579
                  %v1581 = vld [vmem:[%s1373 + $0x638] sm:$0xff]
                  %1582 = vst [vmem:[%s1374 + $0x338] sm:$0xff] %v1581
                  %v1583 = vld [vmem:[%s1373 + $0x640] sm:$0xff]
                  %1584 = vst [vmem:[%s1374 + $0x340] sm:$0xff] %v1583
                  %v1585 = vld [vmem:[%s1373 + $0x648] sm:$0xff]
                  %1586 = vst [vmem:[%s1374 + $0x348] sm:$0xff] %v1585
                  %v1587 = vld [vmem:[%s1373 + $0x650] sm:$0xff]
                  %1588 = vst [vmem:[%s1374 + $0x350] sm:$0xff] %v1587
                  %v1589 = vld [vmem:[%s1373 + $0x658] sm:$0xff]
                  %1590 = vst [vmem:[%s1374 + $0x358] sm:$0xff] %v1589
                  %v1591 = vld [vmem:[%s1373 + $0x660] sm:$0xff]
                  %1592 = vst [vmem:[%s1374 + $0x360] sm:$0xff] %v1591
                  %v1593 = vld [vmem:[%s1373 + $0x668] sm:$0xff]
                  %1594 = vst [vmem:[%s1374 + $0x368] sm:$0xff] %v1593
                  %v1595 = vld [vmem:[%s1373 + $0x670] sm:$0xff]
                  %1596 = vst [vmem:[%s1374 + $0x370] sm:$0xff] %v1595
                  %v1597 = vld [vmem:[%s1373 + $0x678] sm:$0xff]
                  %1598 = vst [vmem:[%s1374 + $0x378] sm:$0xff] %v1597
                  %v1599 = vld [vmem:[%s1373 + $0x680] sm:$0xff]
                  %1600 = vst [vmem:[%s1374 + $0x380] sm:$0xff] %v1599
                  %v1601 = vld [vmem:[%s1373 + $0x688] sm:$0xff]
                  %1602 = vst [vmem:[%s1374 + $0x388] sm:$0xff] %v1601
                  %v1603 = vld [vmem:[%s1373 + $0x690] sm:$0xff]
                  %1604 = vst [vmem:[%s1374 + $0x390] sm:$0xff] %v1603
                  %v1605 = vld [vmem:[%s1373 + $0x698] sm:$0xff]
                  %1606 = vst [vmem:[%s1374 + $0x398] sm:$0xff] %v1605
                  %v1607 = vld [vmem:[%s1373 + $0x6a0] sm:$0xff]
                  %1608 = vst [vmem:[%s1374 + $0x3a0] sm:$0xff] %v1607
                  %v1609 = vld [vmem:[%s1373 + $0x6a8] sm:$0xff]
                  %1610 = vst [vmem:[%s1374 + $0x3a8] sm:$0xff] %v1609
                  %v1611 = vld [vmem:[%s1373 + $0x6b0] sm:$0xff]
                  %1612 = vst [vmem:[%s1374 + $0x3b0] sm:$0xff] %v1611
                  %v1613 = vld [vmem:[%s1373 + $0x6b8] sm:$0xff]
                  %1614 = vst [vmem:[%s1374 + $0x3b8] sm:$0xff] %v1613
                  %v1615 = vld [vmem:[%s1373 + $0x6c0] sm:$0xff]
                  %1616 = vst [vmem:[%s1374 + $0x3c0] sm:$0xff] %v1615
                  %v1617 = vld [vmem:[%s1373 + $0x6c8] sm:$0xff]
                  %1618 = vst [vmem:[%s1374 + $0x3c8] sm:$0xff] %v1617
                  %v1619 = vld [vmem:[%s1373 + $0x6d0] sm:$0xff]
                  %1620 = vst [vmem:[%s1374 + $0x3d0] sm:$0xff] %v1619
                  %v1621 = vld [vmem:[%s1373 + $0x6d8] sm:$0xff]
                  %1622 = vst [vmem:[%s1374 + $0x3d8] sm:$0xff] %v1621
                  %v1623 = vld [vmem:[%s1373 + $0x6e0] sm:$0xff]
                  %1624 = vst [vmem:[%s1374 + $0x3e0] sm:$0xff] %v1623
                  %v1625 = vld [vmem:[%s1373 + $0x6e8] sm:$0xff]
                  %1626 = vst [vmem:[%s1374 + $0x3e8] sm:$0xff] %v1625
                  %v1627 = vld [vmem:[%s1373 + $0x6f0] sm:$0xff]
                  %1628 = vst [vmem:[%s1374 + $0x3f0] sm:$0xff] %v1627
                  %v1629 = vld [vmem:[%s1373 + $0x6f8] sm:$0xff]
                  %1630 = vst [vmem:[%s1374 + $0x3f8] sm:$0xff] %v1629
                  %v1631 = vld [vmem:[%s1373 + $0x700] sm:$0xff]
                  %1632 = vst [vmem:[%s1374 + $0x400] sm:$0xff] %v1631
                  %v1633 = vld [vmem:[%s1373 + $0x708] sm:$0xff]
                  %1634 = vst [vmem:[%s1374 + $0x408] sm:$0xff] %v1633
                  %v1635 = vld [vmem:[%s1373 + $0x710] sm:$0xff]
                  %1636 = vst [vmem:[%s1374 + $0x410] sm:$0xff] %v1635
                  %v1637 = vld [vmem:[%s1373 + $0x718] sm:$0xff]
                  %1638 = vst [vmem:[%s1374 + $0x418] sm:$0xff] %v1637
                  %v1639 = vld [vmem:[%s1373 + $0x720] sm:$0xff]
                  %1640 = vst [vmem:[%s1374 + $0x420] sm:$0xff] %v1639
                  %v1641 = vld [vmem:[%s1373 + $0x728] sm:$0xff]
                  %1642 = vst [vmem:[%s1374 + $0x428] sm:$0xff] %v1641
                  %v1643 = vld [vmem:[%s1373 + $0x730] sm:$0xff]
                  %1644 = vst [vmem:[%s1374 + $0x430] sm:$0xff] %v1643
                  %v1645 = vld [vmem:[%s1373 + $0x738] sm:$0xff]
                  %1646 = vst [vmem:[%s1374 + $0x438] sm:$0xff] %v1645
                  %v1647 = vld [vmem:[%s1373 + $0x740] sm:$0xff]
                  %1648 = vst [vmem:[%s1374 + $0x440] sm:$0xff] %v1647
                  %v1649 = vld [vmem:[%s1373 + $0x748] sm:$0xff]
                  %1650 = vst [vmem:[%s1374 + $0x448] sm:$0xff] %v1649
                  %v1651 = vld [vmem:[%s1373 + $0x750] sm:$0xff]
                  %1652 = vst [vmem:[%s1374 + $0x450] sm:$0xff] %v1651
                  %v1653 = vld [vmem:[%s1373 + $0x758] sm:$0xff]
                  %1654 = vst [vmem:[%s1374 + $0x458] sm:$0xff] %v1653
                  %v1655 = vld [vmem:[%s1373 + $0x760] sm:$0xff]
                  %1656 = vst [vmem:[%s1374 + $0x460] sm:$0xff] %v1655
                  %v1657 = vld [vmem:[%s1373 + $0x768] sm:$0xff]
                  %1658 = vst [vmem:[%s1374 + $0x468] sm:$0xff] %v1657
                  %v1659 = vld [vmem:[%s1373 + $0x770] sm:$0xff]
                  %1660 = vst [vmem:[%s1374 + $0x470] sm:$0xff] %v1659
                  %v1661 = vld [vmem:[%s1373 + $0x778] sm:$0xff]
                  %1662 = vst [vmem:[%s1374 + $0x478] sm:$0xff] %v1661
                  %v1663 = vld [vmem:[%s1373 + $0x780] sm:$0xff]
                  %1664 = vst [vmem:[%s1374 + $0x480] sm:$0xff] %v1663
                  %v1665 = vld [vmem:[%s1373 + $0x788] sm:$0xff]
                  %1666 = vst [vmem:[%s1374 + $0x488] sm:$0xff] %v1665
                  %v1667 = vld [vmem:[%s1373 + $0x790] sm:$0xff]
                  %1668 = vst [vmem:[%s1374 + $0x490] sm:$0xff] %v1667
                  %v1669 = vld [vmem:[%s1373 + $0x798] sm:$0xff]
                  %1670 = vst [vmem:[%s1374 + $0x498] sm:$0xff] %v1669
                  %v1671 = vld [vmem:[%s1373 + $0x7a0] sm:$0xff]
                  %1672 = vst [vmem:[%s1374 + $0x4a0] sm:$0xff] %v1671
                  %v1673 = vld [vmem:[%s1373 + $0x7a8] sm:$0xff]
                  %1674 = vst [vmem:[%s1374 + $0x4a8] sm:$0xff] %v1673
                  %v1675 = vld [vmem:[%s1373 + $0x7b0] sm:$0xff]
                  %1676 = vst [vmem:[%s1374 + $0x4b0] sm:$0xff] %v1675
                  %v1677 = vld [vmem:[%s1373 + $0x7b8] sm:$0xff]
                  %1678 = vst [vmem:[%s1374 + $0x4b8] sm:$0xff] %v1677
                  %v1679 = vld [vmem:[%s1373 + $0x7c0] sm:$0xff]
                  %1680 = vst [vmem:[%s1374 + $0x4c0] sm:$0xff] %v1679
                  %v1681 = vld [vmem:[%s1373 + $0x7c8] sm:$0xff]
                  %1682 = vst [vmem:[%s1374 + $0x4c8] sm:$0xff] %v1681
                  %v1683 = vld [vmem:[%s1373 + $0x7d0] sm:$0xff]
                  %1684 = vst [vmem:[%s1374 + $0x4d0] sm:$0xff] %v1683
                  %v1685 = vld [vmem:[%s1373 + $0x7d8] sm:$0xff]
                  %1686 = vst [vmem:[%s1374 + $0x4d8] sm:$0xff] %v1685
                  %v1687 = vld [vmem:[%s1373 + $0x7e0] sm:$0xff]
                  %1688 = vst [vmem:[%s1374 + $0x4e0] sm:$0xff] %v1687
                  %v1689 = vld [vmem:[%s1373 + $0x7e8] sm:$0xff]
                  %1690 = vst [vmem:[%s1374 + $0x4e8] sm:$0xff] %v1689
                  %v1691 = vld [vmem:[%s1373 + $0x7f0] sm:$0xff]
                  %1692 = vst [vmem:[%s1374 + $0x4f0] sm:$0xff] %v1691
                  %v1693 = vld [vmem:[%s1373 + $0x7f8] sm:$0xff]
                  %1694 = vst [vmem:[%s1374 + $0x4f8] sm:$0xff] %v1693
                  %v1695 = vld [vmem:[%s1373 + $0x800] sm:$0xff]
                  %1696 = vst [vmem:[%s1374 + $0x500] sm:$0xff] %v1695
                  %v1697 = vld [vmem:[%s1373 + $0x808] sm:$0xff]
                  %1698 = vst [vmem:[%s1374 + $0x508] sm:$0xff] %v1697
                  %v1699 = vld [vmem:[%s1373 + $0x810] sm:$0xff]
                  %1700 = vst [vmem:[%s1374 + $0x510] sm:$0xff] %v1699
                  %v1701 = vld [vmem:[%s1373 + $0x818] sm:$0xff]
                  %1702 = vst [vmem:[%s1374 + $0x518] sm:$0xff] %v1701
                  %v1703 = vld [vmem:[%s1373 + $0x820] sm:$0xff]
                  %1704 = vst [vmem:[%s1374 + $0x520] sm:$0xff] %v1703
                  %v1705 = vld [vmem:[%s1373 + $0x828] sm:$0xff]
                  %1706 = vst [vmem:[%s1374 + $0x528] sm:$0xff] %v1705
                  %v1707 = vld [vmem:[%s1373 + $0x830] sm:$0xff]
                  %1708 = vst [vmem:[%s1374 + $0x530] sm:$0xff] %v1707
                  %v1709 = vld [vmem:[%s1373 + $0x838] sm:$0xff]
                  %1710 = vst [vmem:[%s1374 + $0x538] sm:$0xff] %v1709
                  %v1711 = vld [vmem:[%s1373 + $0x840] sm:$0xff]
                  %1712 = vst [vmem:[%s1374 + $0x540] sm:$0xff] %v1711
                  %v1713 = vld [vmem:[%s1373 + $0x848] sm:$0xff]
                  %1714 = vst [vmem:[%s1374 + $0x548] sm:$0xff] %v1713
                  %v1715 = vld [vmem:[%s1373 + $0x850] sm:$0xff]
                  %1716 = vst [vmem:[%s1374 + $0x550] sm:$0xff] %v1715
                  %v1717 = vld [vmem:[%s1373 + $0x858] sm:$0xff]
                  %1718 = vst [vmem:[%s1374 + $0x558] sm:$0xff] %v1717
                  %v1719 = vld [vmem:[%s1373 + $0x860] sm:$0xff]
                  %1720 = vst [vmem:[%s1374 + $0x560] sm:$0xff] %v1719
                  %v1721 = vld [vmem:[%s1373 + $0x868] sm:$0xff]
                  %1722 = vst [vmem:[%s1374 + $0x568] sm:$0xff] %v1721
                  %v1723 = vld [vmem:[%s1373 + $0x870] sm:$0xff]
                  %1724 = vst [vmem:[%s1374 + $0x570] sm:$0xff] %v1723
                  %v1725 = vld [vmem:[%s1373 + $0x878] sm:$0xff]
                  %1726 = vst [vmem:[%s1374 + $0x578] sm:$0xff] %v1725
                  %v1727 = vld [vmem:[%s1373 + $0x880] sm:$0xff]
                  %1728 = vst [vmem:[%s1374 + $0x580] sm:$0xff] %v1727
                  %v1729 = vld [vmem:[%s1373 + $0x888] sm:$0xff]
                  %1730 = vst [vmem:[%s1374 + $0x588] sm:$0xff] %v1729
                  %v1731 = vld [vmem:[%s1373 + $0x890] sm:$0xff]
                  %1732 = vst [vmem:[%s1374 + $0x590] sm:$0xff] %v1731
                  %v1733 = vld [vmem:[%s1373 + $0x898] sm:$0xff]
                  %1734 = vst [vmem:[%s1374 + $0x598] sm:$0xff] %v1733
                  %v1735 = vld [vmem:[%s1373 + $0x8a0] sm:$0xff]
                  %1736 = vst [vmem:[%s1374 + $0x5a0] sm:$0xff] %v1735
                  %v1737 = vld [vmem:[%s1373 + $0x8a8] sm:$0xff]
                  %1738 = vst [vmem:[%s1374 + $0x5a8] sm:$0xff] %v1737
                  %v1739 = vld [vmem:[%s1373 + $0x8b0] sm:$0xff]
                  %1740 = vst [vmem:[%s1374 + $0x5b0] sm:$0xff] %v1739
                  %v1741 = vld [vmem:[%s1373 + $0x8b8] sm:$0xff]
                  %1742 = vst [vmem:[%s1374 + $0x5b8] sm:$0xff] %v1741
                  %v1743 = vld [vmem:[%s1373 + $0x8c0] sm:$0xff]
                  %1744 = vst [vmem:[%s1374 + $0x5c0] sm:$0xff] %v1743
                  %v1745 = vld [vmem:[%s1373 + $0x8c8] sm:$0xff]
                  %1746 = vst [vmem:[%s1374 + $0x5c8] sm:$0xff] %v1745
                  %v1747 = vld [vmem:[%s1373 + $0x8d0] sm:$0xff]
                  %1748 = vst [vmem:[%s1374 + $0x5d0] sm:$0xff] %v1747
                  %v1749 = vld [vmem:[%s1373 + $0x8d8] sm:$0xff]
                  %1750 = vst [vmem:[%s1374 + $0x5d8] sm:$0xff] %v1749
                  %v1751 = vld [vmem:[%s1373 + $0x8e0] sm:$0xff]
                  %1752 = vst [vmem:[%s1374 + $0x5e0] sm:$0xff] %v1751
                  %v1753 = vld [vmem:[%s1373 + $0x8e8] sm:$0xff]
                  %1754 = vst [vmem:[%s1374 + $0x5e8] sm:$0xff] %v1753
                  %v1755 = vld [vmem:[%s1373 + $0x8f0] sm:$0xff]
                  %1756 = vst [vmem:[%s1374 + $0x5f0] sm:$0xff] %v1755
                  %v1757 = vld [vmem:[%s1373 + $0x8f8] sm:$0xff]
                  %1758 = vst [vmem:[%s1374 + $0x5f8] sm:$0xff] %v1757
                $region90: #{svm_forward.1} parent=84 // loop_footer
                  %s1372 = sadd.s32 1, %s1368
                $region91: #{svm_forward.1} parent=84 // loop_footer_branch
                  %1367 = sbr.rel target = $region87
                $region92: #{svm_forward.1} parent=84 // loop_exit
                  _
              $region85: #{svm_forward.1} parent=69 // pred_fallthru
                _
              // Predicated region
              $region93: #{svm_forward.1} parent=69 // pred_check
                _
              $region94: #{svm_forward.1} parent=69 // pred_check_branch
                %1760 = sbr.rel target = $region96
              $region95: #{svm_forward.1} parent=69 // pred_region
                _
              $region96: #{svm_forward.1} parent=69 // pred_fallthru
                _
            $region70: #{svm_forward.1} parent=65 // pred_fallthru
              _
            // Predicated region
            $region71: #{svm_forward.1} parent=65 // pred_check
              _
            $region72: #{svm_forward.1} parent=65 // pred_check_branch
              %970 = sbr.rel target = $region74
            $region73: #{svm_forward.1} parent=65 // pred_region
              %s972 = ssub.s32 256, 1
              loop: start=0, step=1, limit=1
              $region75: #{svm_forward.1} parent=73 // loop_pre_header
                _
              $region76: #{svm_forward.1} parent=73 // loop_header
                %s974 = sphi 0, %s978
                %p975 = scmp.ge.s32.totalorder %s974, 1
                %s979 = sphi %s964, %s964
                %s980 = sphi %s960, %s960
              $region77: #{svm_forward.1} parent=73 // loop_header_branch
                %977 = sbr.rel (%p975) target = $region81
              $region78: #{svm_forward.1} parent=73 // loop_body
                %v981 = vld [vmem:[%s979] sm:%s972]
                %982 = vst [vmem:[%s980] sm:%s972] %v981
                %v983 = vld [vmem:[%s979 + $0x8] sm:%s972]
                %984 = vst [vmem:[%s980 + $0x8] sm:%s972] %v983
                %v985 = vld [vmem:[%s979 + $0x10] sm:%s972]
                %986 = vst [vmem:[%s980 + $0x10] sm:%s972] %v985
                %v987 = vld [vmem:[%s979 + $0x18] sm:%s972]
                %988 = vst [vmem:[%s980 + $0x18] sm:%s972] %v987
                %v989 = vld [vmem:[%s979 + $0x20] sm:%s972]
                %990 = vst [vmem:[%s980 + $0x20] sm:%s972] %v989
                %v991 = vld [vmem:[%s979 + $0x28] sm:%s972]
                %992 = vst [vmem:[%s980 + $0x28] sm:%s972] %v991
                %v993 = vld [vmem:[%s979 + $0x30] sm:%s972]
                %994 = vst [vmem:[%s980 + $0x30] sm:%s972] %v993
                %v995 = vld [vmem:[%s979 + $0x38] sm:%s972]
                %996 = vst [vmem:[%s980 + $0x38] sm:%s972] %v995
                %v997 = vld [vmem:[%s979 + $0x40] sm:%s972]
                %998 = vst [vmem:[%s980 + $0x40] sm:%s972] %v997
                %v999 = vld [vmem:[%s979 + $0x48] sm:%s972]
                %1000 = vst [vmem:[%s980 + $0x48] sm:%s972] %v999
                %v1001 = vld [vmem:[%s979 + $0x50] sm:%s972]
                %1002 = vst [vmem:[%s980 + $0x50] sm:%s972] %v1001
                %v1003 = vld [vmem:[%s979 + $0x58] sm:%s972]
                %1004 = vst [vmem:[%s980 + $0x58] sm:%s972] %v1003
                %v1005 = vld [vmem:[%s979 + $0x60] sm:%s972]
                %1006 = vst [vmem:[%s980 + $0x60] sm:%s972] %v1005
                %v1007 = vld [vmem:[%s979 + $0x68] sm:%s972]
                %1008 = vst [vmem:[%s980 + $0x68] sm:%s972] %v1007
                %v1009 = vld [vmem:[%s979 + $0x70] sm:%s972]
                %1010 = vst [vmem:[%s980 + $0x70] sm:%s972] %v1009
                %v1011 = vld [vmem:[%s979 + $0x78] sm:%s972]
                %1012 = vst [vmem:[%s980 + $0x78] sm:%s972] %v1011
                %v1013 = vld [vmem:[%s979 + $0x80] sm:%s972]
                %1014 = vst [vmem:[%s980 + $0x80] sm:%s972] %v1013
                %v1015 = vld [vmem:[%s979 + $0x88] sm:%s972]
                %1016 = vst [vmem:[%s980 + $0x88] sm:%s972] %v1015
                %v1017 = vld [vmem:[%s979 + $0x90] sm:%s972]
                %1018 = vst [vmem:[%s980 + $0x90] sm:%s972] %v1017
                %v1019 = vld [vmem:[%s979 + $0x98] sm:%s972]
                %1020 = vst [vmem:[%s980 + $0x98] sm:%s972] %v1019
                %v1021 = vld [vmem:[%s979 + $0xa0] sm:%s972]
                %1022 = vst [vmem:[%s980 + $0xa0] sm:%s972] %v1021
                %v1023 = vld [vmem:[%s979 + $0xa8] sm:%s972]
                %1024 = vst [vmem:[%s980 + $0xa8] sm:%s972] %v1023
                %v1025 = vld [vmem:[%s979 + $0xb0] sm:%s972]
                %1026 = vst [vmem:[%s980 + $0xb0] sm:%s972] %v1025
                %v1027 = vld [vmem:[%s979 + $0xb8] sm:%s972]
                %1028 = vst [vmem:[%s980 + $0xb8] sm:%s972] %v1027
                %v1029 = vld [vmem:[%s979 + $0xc0] sm:%s972]
                %1030 = vst [vmem:[%s980 + $0xc0] sm:%s972] %v1029
                %v1031 = vld [vmem:[%s979 + $0xc8] sm:%s972]
                %1032 = vst [vmem:[%s980 + $0xc8] sm:%s972] %v1031
                %v1033 = vld [vmem:[%s979 + $0xd0] sm:%s972]
                %1034 = vst [vmem:[%s980 + $0xd0] sm:%s972] %v1033
                %v1035 = vld [vmem:[%s979 + $0xd8] sm:%s972]
                %1036 = vst [vmem:[%s980 + $0xd8] sm:%s972] %v1035
                %v1037 = vld [vmem:[%s979 + $0xe0] sm:%s972]
                %1038 = vst [vmem:[%s980 + $0xe0] sm:%s972] %v1037
                %v1039 = vld [vmem:[%s979 + $0xe8] sm:%s972]
                %1040 = vst [vmem:[%s980 + $0xe8] sm:%s972] %v1039
                %v1041 = vld [vmem:[%s979 + $0xf0] sm:%s972]
                %1042 = vst [vmem:[%s980 + $0xf0] sm:%s972] %v1041
                %v1043 = vld [vmem:[%s979 + $0xf8] sm:%s972]
                %1044 = vst [vmem:[%s980 + $0xf8] sm:%s972] %v1043
                %v1045 = vld [vmem:[%s979 + $0x100] sm:%s972]
                %1046 = vst [vmem:[%s980 + $0x100] sm:%s972] %v1045
                %v1047 = vld [vmem:[%s979 + $0x108] sm:%s972]
                %1048 = vst [vmem:[%s980 + $0x108] sm:%s972] %v1047
                %v1049 = vld [vmem:[%s979 + $0x110] sm:%s972]
                %1050 = vst [vmem:[%s980 + $0x110] sm:%s972] %v1049
                %v1051 = vld [vmem:[%s979 + $0x118] sm:%s972]
                %1052 = vst [vmem:[%s980 + $0x118] sm:%s972] %v1051
                %v1053 = vld [vmem:[%s979 + $0x120] sm:%s972]
                %1054 = vst [vmem:[%s980 + $0x120] sm:%s972] %v1053
                %v1055 = vld [vmem:[%s979 + $0x128] sm:%s972]
                %1056 = vst [vmem:[%s980 + $0x128] sm:%s972] %v1055
                %v1057 = vld [vmem:[%s979 + $0x130] sm:%s972]
                %1058 = vst [vmem:[%s980 + $0x130] sm:%s972] %v1057
                %v1059 = vld [vmem:[%s979 + $0x138] sm:%s972]
                %1060 = vst [vmem:[%s980 + $0x138] sm:%s972] %v1059
                %v1061 = vld [vmem:[%s979 + $0x140] sm:%s972]
                %1062 = vst [vmem:[%s980 + $0x140] sm:%s972] %v1061
                %v1063 = vld [vmem:[%s979 + $0x148] sm:%s972]
                %1064 = vst [vmem:[%s980 + $0x148] sm:%s972] %v1063
                %v1065 = vld [vmem:[%s979 + $0x150] sm:%s972]
                %1066 = vst [vmem:[%s980 + $0x150] sm:%s972] %v1065
                %v1067 = vld [vmem:[%s979 + $0x158] sm:%s972]
                %1068 = vst [vmem:[%s980 + $0x158] sm:%s972] %v1067
                %v1069 = vld [vmem:[%s979 + $0x160] sm:%s972]
                %1070 = vst [vmem:[%s980 + $0x160] sm:%s972] %v1069
                %v1071 = vld [vmem:[%s979 + $0x168] sm:%s972]
                %1072 = vst [vmem:[%s980 + $0x168] sm:%s972] %v1071
                %v1073 = vld [vmem:[%s979 + $0x170] sm:%s972]
                %1074 = vst [vmem:[%s980 + $0x170] sm:%s972] %v1073
                %v1075 = vld [vmem:[%s979 + $0x178] sm:%s972]
                %1076 = vst [vmem:[%s980 + $0x178] sm:%s972] %v1075
                %v1077 = vld [vmem:[%s979 + $0x180] sm:%s972]
                %1078 = vst [vmem:[%s980 + $0x180] sm:%s972] %v1077
                %v1079 = vld [vmem:[%s979 + $0x188] sm:%s972]
                %1080 = vst [vmem:[%s980 + $0x188] sm:%s972] %v1079
                %v1081 = vld [vmem:[%s979 + $0x190] sm:%s972]
                %1082 = vst [vmem:[%s980 + $0x190] sm:%s972] %v1081
                %v1083 = vld [vmem:[%s979 + $0x198] sm:%s972]
                %1084 = vst [vmem:[%s980 + $0x198] sm:%s972] %v1083
                %v1085 = vld [vmem:[%s979 + $0x1a0] sm:%s972]
                %1086 = vst [vmem:[%s980 + $0x1a0] sm:%s972] %v1085
                %v1087 = vld [vmem:[%s979 + $0x1a8] sm:%s972]
                %1088 = vst [vmem:[%s980 + $0x1a8] sm:%s972] %v1087
                %v1089 = vld [vmem:[%s979 + $0x1b0] sm:%s972]
                %1090 = vst [vmem:[%s980 + $0x1b0] sm:%s972] %v1089
                %v1091 = vld [vmem:[%s979 + $0x1b8] sm:%s972]
                %1092 = vst [vmem:[%s980 + $0x1b8] sm:%s972] %v1091
                %v1093 = vld [vmem:[%s979 + $0x1c0] sm:%s972]
                %1094 = vst [vmem:[%s980 + $0x1c0] sm:%s972] %v1093
                %v1095 = vld [vmem:[%s979 + $0x1c8] sm:%s972]
                %1096 = vst [vmem:[%s980 + $0x1c8] sm:%s972] %v1095
                %v1097 = vld [vmem:[%s979 + $0x1d0] sm:%s972]
                %1098 = vst [vmem:[%s980 + $0x1d0] sm:%s972] %v1097
                %v1099 = vld [vmem:[%s979 + $0x1d8] sm:%s972]
                %1100 = vst [vmem:[%s980 + $0x1d8] sm:%s972] %v1099
                %v1101 = vld [vmem:[%s979 + $0x1e0] sm:%s972]
                %1102 = vst [vmem:[%s980 + $0x1e0] sm:%s972] %v1101
                %v1103 = vld [vmem:[%s979 + $0x1e8] sm:%s972]
                %1104 = vst [vmem:[%s980 + $0x1e8] sm:%s972] %v1103
                %v1105 = vld [vmem:[%s979 + $0x1f0] sm:%s972]
                %1106 = vst [vmem:[%s980 + $0x1f0] sm:%s972] %v1105
                %v1107 = vld [vmem:[%s979 + $0x1f8] sm:%s972]
                %1108 = vst [vmem:[%s980 + $0x1f8] sm:%s972] %v1107
                %v1109 = vld [vmem:[%s979 + $0x200] sm:%s972]
                %1110 = vst [vmem:[%s980 + $0x200] sm:%s972] %v1109
                %v1111 = vld [vmem:[%s979 + $0x208] sm:%s972]
                %1112 = vst [vmem:[%s980 + $0x208] sm:%s972] %v1111
                %v1113 = vld [vmem:[%s979 + $0x210] sm:%s972]
                %1114 = vst [vmem:[%s980 + $0x210] sm:%s972] %v1113
                %v1115 = vld [vmem:[%s979 + $0x218] sm:%s972]
                %1116 = vst [vmem:[%s980 + $0x218] sm:%s972] %v1115
                %v1117 = vld [vmem:[%s979 + $0x220] sm:%s972]
                %1118 = vst [vmem:[%s980 + $0x220] sm:%s972] %v1117
                %v1119 = vld [vmem:[%s979 + $0x228] sm:%s972]
                %1120 = vst [vmem:[%s980 + $0x228] sm:%s972] %v1119
                %v1121 = vld [vmem:[%s979 + $0x230] sm:%s972]
                %1122 = vst [vmem:[%s980 + $0x230] sm:%s972] %v1121
                %v1123 = vld [vmem:[%s979 + $0x238] sm:%s972]
                %1124 = vst [vmem:[%s980 + $0x238] sm:%s972] %v1123
                %v1125 = vld [vmem:[%s979 + $0x240] sm:%s972]
                %1126 = vst [vmem:[%s980 + $0x240] sm:%s972] %v1125
                %v1127 = vld [vmem:[%s979 + $0x248] sm:%s972]
                %1128 = vst [vmem:[%s980 + $0x248] sm:%s972] %v1127
                %v1129 = vld [vmem:[%s979 + $0x250] sm:%s972]
                %1130 = vst [vmem:[%s980 + $0x250] sm:%s972] %v1129
                %v1131 = vld [vmem:[%s979 + $0x258] sm:%s972]
                %1132 = vst [vmem:[%s980 + $0x258] sm:%s972] %v1131
                %v1133 = vld [vmem:[%s979 + $0x260] sm:%s972]
                %1134 = vst [vmem:[%s980 + $0x260] sm:%s972] %v1133
                %v1135 = vld [vmem:[%s979 + $0x268] sm:%s972]
                %1136 = vst [vmem:[%s980 + $0x268] sm:%s972] %v1135
                %v1137 = vld [vmem:[%s979 + $0x270] sm:%s972]
                %1138 = vst [vmem:[%s980 + $0x270] sm:%s972] %v1137
                %v1139 = vld [vmem:[%s979 + $0x278] sm:%s972]
                %1140 = vst [vmem:[%s980 + $0x278] sm:%s972] %v1139
                %v1141 = vld [vmem:[%s979 + $0x280] sm:%s972]
                %1142 = vst [vmem:[%s980 + $0x280] sm:%s972] %v1141
                %v1143 = vld [vmem:[%s979 + $0x288] sm:%s972]
                %1144 = vst [vmem:[%s980 + $0x288] sm:%s972] %v1143
                %v1145 = vld [vmem:[%s979 + $0x290] sm:%s972]
                %1146 = vst [vmem:[%s980 + $0x290] sm:%s972] %v1145
                %v1147 = vld [vmem:[%s979 + $0x298] sm:%s972]
                %1148 = vst [vmem:[%s980 + $0x298] sm:%s972] %v1147
                %v1149 = vld [vmem:[%s979 + $0x2a0] sm:%s972]
                %1150 = vst [vmem:[%s980 + $0x2a0] sm:%s972] %v1149
                %v1151 = vld [vmem:[%s979 + $0x2a8] sm:%s972]
                %1152 = vst [vmem:[%s980 + $0x2a8] sm:%s972] %v1151
                %v1153 = vld [vmem:[%s979 + $0x2b0] sm:%s972]
                %1154 = vst [vmem:[%s980 + $0x2b0] sm:%s972] %v1153
                %v1155 = vld [vmem:[%s979 + $0x2b8] sm:%s972]
                %1156 = vst [vmem:[%s980 + $0x2b8] sm:%s972] %v1155
                %v1157 = vld [vmem:[%s979 + $0x2c0] sm:%s972]
                %1158 = vst [vmem:[%s980 + $0x2c0] sm:%s972] %v1157
                %v1159 = vld [vmem:[%s979 + $0x2c8] sm:%s972]
                %1160 = vst [vmem:[%s980 + $0x2c8] sm:%s972] %v1159
                %v1161 = vld [vmem:[%s979 + $0x2d0] sm:%s972]
                %1162 = vst [vmem:[%s980 + $0x2d0] sm:%s972] %v1161
                %v1163 = vld [vmem:[%s979 + $0x2d8] sm:%s972]
                %1164 = vst [vmem:[%s980 + $0x2d8] sm:%s972] %v1163
                %v1165 = vld [vmem:[%s979 + $0x2e0] sm:%s972]
                %1166 = vst [vmem:[%s980 + $0x2e0] sm:%s972] %v1165
                %v1167 = vld [vmem:[%s979 + $0x2e8] sm:%s972]
                %1168 = vst [vmem:[%s980 + $0x2e8] sm:%s972] %v1167
                %v1169 = vld [vmem:[%s979 + $0x2f0] sm:%s972]
                %1170 = vst [vmem:[%s980 + $0x2f0] sm:%s972] %v1169
                %v1171 = vld [vmem:[%s979 + $0x2f8] sm:%s972]
                %1172 = vst [vmem:[%s980 + $0x2f8] sm:%s972] %v1171
                %v1173 = vld [vmem:[%s979 + $0x600] sm:%s972]
                %1174 = vst [vmem:[%s980 + $0x300] sm:%s972] %v1173
                %v1175 = vld [vmem:[%s979 + $0x608] sm:%s972]
                %1176 = vst [vmem:[%s980 + $0x308] sm:%s972] %v1175
                %v1177 = vld [vmem:[%s979 + $0x610] sm:%s972]
                %1178 = vst [vmem:[%s980 + $0x310] sm:%s972] %v1177
                %v1179 = vld [vmem:[%s979 + $0x618] sm:%s972]
                %1180 = vst [vmem:[%s980 + $0x318] sm:%s972] %v1179
                %v1181 = vld [vmem:[%s979 + $0x620] sm:%s972]
                %1182 = vst [vmem:[%s980 + $0x320] sm:%s972] %v1181
                %v1183 = vld [vmem:[%s979 + $0x628] sm:%s972]
                %1184 = vst [vmem:[%s980 + $0x328] sm:%s972] %v1183
                %v1185 = vld [vmem:[%s979 + $0x630] sm:%s972]
                %1186 = vst [vmem:[%s980 + $0x330] sm:%s972] %v1185
                %v1187 = vld [vmem:[%s979 + $0x638] sm:%s972]
                %1188 = vst [vmem:[%s980 + $0x338] sm:%s972] %v1187
                %v1189 = vld [vmem:[%s979 + $0x640] sm:%s972]
                %1190 = vst [vmem:[%s980 + $0x340] sm:%s972] %v1189
                %v1191 = vld [vmem:[%s979 + $0x648] sm:%s972]
                %1192 = vst [vmem:[%s980 + $0x348] sm:%s972] %v1191
                %v1193 = vld [vmem:[%s979 + $0x650] sm:%s972]
                %1194 = vst [vmem:[%s980 + $0x350] sm:%s972] %v1193
                %v1195 = vld [vmem:[%s979 + $0x658] sm:%s972]
                %1196 = vst [vmem:[%s980 + $0x358] sm:%s972] %v1195
                %v1197 = vld [vmem:[%s979 + $0x660] sm:%s972]
                %1198 = vst [vmem:[%s980 + $0x360] sm:%s972] %v1197
                %v1199 = vld [vmem:[%s979 + $0x668] sm:%s972]
                %1200 = vst [vmem:[%s980 + $0x368] sm:%s972] %v1199
                %v1201 = vld [vmem:[%s979 + $0x670] sm:%s972]
                %1202 = vst [vmem:[%s980 + $0x370] sm:%s972] %v1201
                %v1203 = vld [vmem:[%s979 + $0x678] sm:%s972]
                %1204 = vst [vmem:[%s980 + $0x378] sm:%s972] %v1203
                %v1205 = vld [vmem:[%s979 + $0x680] sm:%s972]
                %1206 = vst [vmem:[%s980 + $0x380] sm:%s972] %v1205
                %v1207 = vld [vmem:[%s979 + $0x688] sm:%s972]
                %1208 = vst [vmem:[%s980 + $0x388] sm:%s972] %v1207
                %v1209 = vld [vmem:[%s979 + $0x690] sm:%s972]
                %1210 = vst [vmem:[%s980 + $0x390] sm:%s972] %v1209
                %v1211 = vld [vmem:[%s979 + $0x698] sm:%s972]
                %1212 = vst [vmem:[%s980 + $0x398] sm:%s972] %v1211
                %v1213 = vld [vmem:[%s979 + $0x6a0] sm:%s972]
                %1214 = vst [vmem:[%s980 + $0x3a0] sm:%s972] %v1213
                %v1215 = vld [vmem:[%s979 + $0x6a8] sm:%s972]
                %1216 = vst [vmem:[%s980 + $0x3a8] sm:%s972] %v1215
                %v1217 = vld [vmem:[%s979 + $0x6b0] sm:%s972]
                %1218 = vst [vmem:[%s980 + $0x3b0] sm:%s972] %v1217
                %v1219 = vld [vmem:[%s979 + $0x6b8] sm:%s972]
                %1220 = vst [vmem:[%s980 + $0x3b8] sm:%s972] %v1219
                %v1221 = vld [vmem:[%s979 + $0x6c0] sm:%s972]
                %1222 = vst [vmem:[%s980 + $0x3c0] sm:%s972] %v1221
                %v1223 = vld [vmem:[%s979 + $0x6c8] sm:%s972]
                %1224 = vst [vmem:[%s980 + $0x3c8] sm:%s972] %v1223
                %v1225 = vld [vmem:[%s979 + $0x6d0] sm:%s972]
                %1226 = vst [vmem:[%s980 + $0x3d0] sm:%s972] %v1225
                %v1227 = vld [vmem:[%s979 + $0x6d8] sm:%s972]
                %1228 = vst [vmem:[%s980 + $0x3d8] sm:%s972] %v1227
                %v1229 = vld [vmem:[%s979 + $0x6e0] sm:%s972]
                %1230 = vst [vmem:[%s980 + $0x3e0] sm:%s972] %v1229
                %v1231 = vld [vmem:[%s979 + $0x6e8] sm:%s972]
                %1232 = vst [vmem:[%s980 + $0x3e8] sm:%s972] %v1231
                %v1233 = vld [vmem:[%s979 + $0x6f0] sm:%s972]
                %1234 = vst [vmem:[%s980 + $0x3f0] sm:%s972] %v1233
                %v1235 = vld [vmem:[%s979 + $0x6f8] sm:%s972]
                %1236 = vst [vmem:[%s980 + $0x3f8] sm:%s972] %v1235
                %v1237 = vld [vmem:[%s979 + $0x700] sm:%s972]
                %1238 = vst [vmem:[%s980 + $0x400] sm:%s972] %v1237
                %v1239 = vld [vmem:[%s979 + $0x708] sm:%s972]
                %1240 = vst [vmem:[%s980 + $0x408] sm:%s972] %v1239
                %v1241 = vld [vmem:[%s979 + $0x710] sm:%s972]
                %1242 = vst [vmem:[%s980 + $0x410] sm:%s972] %v1241
                %v1243 = vld [vmem:[%s979 + $0x718] sm:%s972]
                %1244 = vst [vmem:[%s980 + $0x418] sm:%s972] %v1243
                %v1245 = vld [vmem:[%s979 + $0x720] sm:%s972]
                %1246 = vst [vmem:[%s980 + $0x420] sm:%s972] %v1245
                %v1247 = vld [vmem:[%s979 + $0x728] sm:%s972]
                %1248 = vst [vmem:[%s980 + $0x428] sm:%s972] %v1247
                %v1249 = vld [vmem:[%s979 + $0x730] sm:%s972]
                %1250 = vst [vmem:[%s980 + $0x430] sm:%s972] %v1249
                %v1251 = vld [vmem:[%s979 + $0x738] sm:%s972]
                %1252 = vst [vmem:[%s980 + $0x438] sm:%s972] %v1251
                %v1253 = vld [vmem:[%s979 + $0x740] sm:%s972]
                %1254 = vst [vmem:[%s980 + $0x440] sm:%s972] %v1253
                %v1255 = vld [vmem:[%s979 + $0x748] sm:%s972]
                %1256 = vst [vmem:[%s980 + $0x448] sm:%s972] %v1255
                %v1257 = vld [vmem:[%s979 + $0x750] sm:%s972]
                %1258 = vst [vmem:[%s980 + $0x450] sm:%s972] %v1257
                %v1259 = vld [vmem:[%s979 + $0x758] sm:%s972]
                %1260 = vst [vmem:[%s980 + $0x458] sm:%s972] %v1259
                %v1261 = vld [vmem:[%s979 + $0x760] sm:%s972]
                %1262 = vst [vmem:[%s980 + $0x460] sm:%s972] %v1261
                %v1263 = vld [vmem:[%s979 + $0x768] sm:%s972]
                %1264 = vst [vmem:[%s980 + $0x468] sm:%s972] %v1263
                %v1265 = vld [vmem:[%s979 + $0x770] sm:%s972]
                %1266 = vst [vmem:[%s980 + $0x470] sm:%s972] %v1265
                %v1267 = vld [vmem:[%s979 + $0x778] sm:%s972]
                %1268 = vst [vmem:[%s980 + $0x478] sm:%s972] %v1267
                %v1269 = vld [vmem:[%s979 + $0x780] sm:%s972]
                %1270 = vst [vmem:[%s980 + $0x480] sm:%s972] %v1269
                %v1271 = vld [vmem:[%s979 + $0x788] sm:%s972]
                %1272 = vst [vmem:[%s980 + $0x488] sm:%s972] %v1271
                %v1273 = vld [vmem:[%s979 + $0x790] sm:%s972]
                %1274 = vst [vmem:[%s980 + $0x490] sm:%s972] %v1273
                %v1275 = vld [vmem:[%s979 + $0x798] sm:%s972]
                %1276 = vst [vmem:[%s980 + $0x498] sm:%s972] %v1275
                %v1277 = vld [vmem:[%s979 + $0x7a0] sm:%s972]
                %1278 = vst [vmem:[%s980 + $0x4a0] sm:%s972] %v1277
                %v1279 = vld [vmem:[%s979 + $0x7a8] sm:%s972]
                %1280 = vst [vmem:[%s980 + $0x4a8] sm:%s972] %v1279
                %v1281 = vld [vmem:[%s979 + $0x7b0] sm:%s972]
                %1282 = vst [vmem:[%s980 + $0x4b0] sm:%s972] %v1281
                %v1283 = vld [vmem:[%s979 + $0x7b8] sm:%s972]
                %1284 = vst [vmem:[%s980 + $0x4b8] sm:%s972] %v1283
                %v1285 = vld [vmem:[%s979 + $0x7c0] sm:%s972]
                %1286 = vst [vmem:[%s980 + $0x4c0] sm:%s972] %v1285
                %v1287 = vld [vmem:[%s979 + $0x7c8] sm:%s972]
                %1288 = vst [vmem:[%s980 + $0x4c8] sm:%s972] %v1287
                %v1289 = vld [vmem:[%s979 + $0x7d0] sm:%s972]
                %1290 = vst [vmem:[%s980 + $0x4d0] sm:%s972] %v1289
                %v1291 = vld [vmem:[%s979 + $0x7d8] sm:%s972]
                %1292 = vst [vmem:[%s980 + $0x4d8] sm:%s972] %v1291
                %v1293 = vld [vmem:[%s979 + $0x7e0] sm:%s972]
                %1294 = vst [vmem:[%s980 + $0x4e0] sm:%s972] %v1293
                %v1295 = vld [vmem:[%s979 + $0x7e8] sm:%s972]
                %1296 = vst [vmem:[%s980 + $0x4e8] sm:%s972] %v1295
                %v1297 = vld [vmem:[%s979 + $0x7f0] sm:%s972]
                %1298 = vst [vmem:[%s980 + $0x4f0] sm:%s972] %v1297
                %v1299 = vld [vmem:[%s979 + $0x7f8] sm:%s972]
                %1300 = vst [vmem:[%s980 + $0x4f8] sm:%s972] %v1299
                %v1301 = vld [vmem:[%s979 + $0x800] sm:%s972]
                %1302 = vst [vmem:[%s980 + $0x500] sm:%s972] %v1301
                %v1303 = vld [vmem:[%s979 + $0x808] sm:%s972]
                %1304 = vst [vmem:[%s980 + $0x508] sm:%s972] %v1303
                %v1305 = vld [vmem:[%s979 + $0x810] sm:%s972]
                %1306 = vst [vmem:[%s980 + $0x510] sm:%s972] %v1305
                %v1307 = vld [vmem:[%s979 + $0x818] sm:%s972]
                %1308 = vst [vmem:[%s980 + $0x518] sm:%s972] %v1307
                %v1309 = vld [vmem:[%s979 + $0x820] sm:%s972]
                %1310 = vst [vmem:[%s980 + $0x520] sm:%s972] %v1309
                %v1311 = vld [vmem:[%s979 + $0x828] sm:%s972]
                %1312 = vst [vmem:[%s980 + $0x528] sm:%s972] %v1311
                %v1313 = vld [vmem:[%s979 + $0x830] sm:%s972]
                %1314 = vst [vmem:[%s980 + $0x530] sm:%s972] %v1313
                %v1315 = vld [vmem:[%s979 + $0x838] sm:%s972]
                %1316 = vst [vmem:[%s980 + $0x538] sm:%s972] %v1315
                %v1317 = vld [vmem:[%s979 + $0x840] sm:%s972]
                %1318 = vst [vmem:[%s980 + $0x540] sm:%s972] %v1317
                %v1319 = vld [vmem:[%s979 + $0x848] sm:%s972]
                %1320 = vst [vmem:[%s980 + $0x548] sm:%s972] %v1319
                %v1321 = vld [vmem:[%s979 + $0x850] sm:%s972]
                %1322 = vst [vmem:[%s980 + $0x550] sm:%s972] %v1321
                %v1323 = vld [vmem:[%s979 + $0x858] sm:%s972]
                %1324 = vst [vmem:[%s980 + $0x558] sm:%s972] %v1323
                %v1325 = vld [vmem:[%s979 + $0x860] sm:%s972]
                %1326 = vst [vmem:[%s980 + $0x560] sm:%s972] %v1325
                %v1327 = vld [vmem:[%s979 + $0x868] sm:%s972]
                %1328 = vst [vmem:[%s980 + $0x568] sm:%s972] %v1327
                %v1329 = vld [vmem:[%s979 + $0x870] sm:%s972]
                %1330 = vst [vmem:[%s980 + $0x570] sm:%s972] %v1329
                %v1331 = vld [vmem:[%s979 + $0x878] sm:%s972]
                %1332 = vst [vmem:[%s980 + $0x578] sm:%s972] %v1331
                %v1333 = vld [vmem:[%s979 + $0x880] sm:%s972]
                %1334 = vst [vmem:[%s980 + $0x580] sm:%s972] %v1333
                %v1335 = vld [vmem:[%s979 + $0x888] sm:%s972]
                %1336 = vst [vmem:[%s980 + $0x588] sm:%s972] %v1335
                %v1337 = vld [vmem:[%s979 + $0x890] sm:%s972]
                %1338 = vst [vmem:[%s980 + $0x590] sm:%s972] %v1337
                %v1339 = vld [vmem:[%s979 + $0x898] sm:%s972]
                %1340 = vst [vmem:[%s980 + $0x598] sm:%s972] %v1339
                %v1341 = vld [vmem:[%s979 + $0x8a0] sm:%s972]
                %1342 = vst [vmem:[%s980 + $0x5a0] sm:%s972] %v1341
                %v1343 = vld [vmem:[%s979 + $0x8a8] sm:%s972]
                %1344 = vst [vmem:[%s980 + $0x5a8] sm:%s972] %v1343
                %v1345 = vld [vmem:[%s979 + $0x8b0] sm:%s972]
                %1346 = vst [vmem:[%s980 + $0x5b0] sm:%s972] %v1345
                %v1347 = vld [vmem:[%s979 + $0x8b8] sm:%s972]
                %1348 = vst [vmem:[%s980 + $0x5b8] sm:%s972] %v1347
                %v1349 = vld [vmem:[%s979 + $0x8c0] sm:%s972]
                %1350 = vst [vmem:[%s980 + $0x5c0] sm:%s972] %v1349
                %v1351 = vld [vmem:[%s979 + $0x8c8] sm:%s972]
                %1352 = vst [vmem:[%s980 + $0x5c8] sm:%s972] %v1351
                %v1353 = vld [vmem:[%s979 + $0x8d0] sm:%s972]
                %1354 = vst [vmem:[%s980 + $0x5d0] sm:%s972] %v1353
                %v1355 = vld [vmem:[%s979 + $0x8d8] sm:%s972]
                %1356 = vst [vmem:[%s980 + $0x5d8] sm:%s972] %v1355
                %v1357 = vld [vmem:[%s979 + $0x8e0] sm:%s972]
                %1358 = vst [vmem:[%s980 + $0x5e0] sm:%s972] %v1357
                %v1359 = vld [vmem:[%s979 + $0x8e8] sm:%s972]
                %1360 = vst [vmem:[%s980 + $0x5e8] sm:%s972] %v1359
                %v1361 = vld [vmem:[%s979 + $0x8f0] sm:%s972]
                %1362 = vst [vmem:[%s980 + $0x5f0] sm:%s972] %v1361
                %v1363 = vld [vmem:[%s979 + $0x8f8] sm:%s972]
                %1364 = vst [vmem:[%s980 + $0x5f8] sm:%s972] %v1363
              $region79: #{svm_forward.1} parent=73 // loop_footer
                %s978 = sadd.s32 1, %s974
              $region80: #{svm_forward.1} parent=73 // loop_footer_branch
                %973 = sbr.rel target = $region76
              $region81: #{svm_forward.1} parent=73 // loop_exit
                _
            $region74: #{svm_forward.1} parent=65 // pred_fallthru
              _
          $region66: #{svm_forward.1} parent=61 // pred_fallthru
            _
          %1761 = vnop
        $region62: #{svm_forward.1} parent=19 // pred_fallthru
          _
      $region20: #{svm_forward.1} parent=5 // pred_fallthru
        _
      %p1762 = scmp.le.s32.totalorder 1, %s9
      %p1763 = scmp.lt.s32.totalorder %s9, 3
      %p1764 = pnand %p1762, %p1763
      %p1765 = pneg %p1764
      // Predicated region
      $region97: #{svm_forward.1} parent=5 // pred_check
        _
      $region98: #{svm_forward.1} parent=5 // pred_check_branch
        %1767 = sbr.rel (%p1764) target = $region100
      $region99: #{svm_forward.1} parent=5 // pred_region
        %s1768 = ssub.s32 %s9, 1
        %s1769 = sand.u32 %s36, 1
        %s1770 = sand.u32 %s36, 1
        %s1771 = smul.addr %s1770, 1536
        %s1772 = scalar_lea.vmem [#allocation3], %s1771
        // Predicated region
        $region101: #{svm_forward.1} parent=99 // pred_check
          %p1773 = pneg %p49
        $region102: #{svm_forward.1} parent=99 // pred_check_branch
          %1775 = sbr.rel (%p1773) target = $region104
        $region103: #{svm_forward.1} parent=99 // pred_region
          _
        $region104: #{svm_forward.1} parent=99 // pred_fallthru
          _
        %s1776 = sand.u32 %s64, 1
        %s1777 = sand.u32 %s64, 1
        %s1778 = smul.addr %s1777, 1536
        %s1779 = scalar_lea.vmem [#allocation4], %s1778
        // Predicated region
        $region105: #{svm_forward.1} parent=99 // pred_check
          %p1780 = pneg %p77
        $region106: #{svm_forward.1} parent=99 // pred_check_branch
          %1782 = sbr.rel (%p1780) target = $region108
        $region107: #{svm_forward.1} parent=99 // pred_region
          _
        $region108: #{svm_forward.1} parent=99 // pred_fallthru
          _
        %s1783 = sand.u32 %s36, 1
        %s1784 = sand.u32 %s36, 1
        %s1785 = smul.addr %s1784, 1536
        %s1786 = scalar_lea.vmem [#allocation3], %s1785
        %p1787 = pneg %p49
        %p1788 = pneg %p46
        %s1789 = sand.u32 %s64, 1
        %s1790 = sand.u32 %s64, 1
        %s1791 = smul.addr %s1790, 1536
        %s1792 = scalar_lea.vmem [#allocation4], %s1791
        %p1793 = pneg %p77
        %p1794 = pneg %p74
        %p1795 = pneg %p98
        %p1796 = pneg %p95
        %p1797 = pneg %p124
        %p1798 = pneg %p121
        %p1799 = scmp.lt.s32.totalorder %s18, 1
        %s1800 = scalar_select %p1799, %s18, 1
        %s1801 = smul.addr %s1800, 2
        %s1802 = scalar_lea.vmem %s3, %s1801
        %s1803 = sadd.s32 %s18, %s19
        %s1804 = smul.u32 96, %s1803
        %s1805 = sadd.s32 %s18, %s19
        %s1806 = smul.u32 96, %s1805
        %p1807 = scmp.lt.s32.totalorder %s18, 1
        %s1808 = scalar_select %p1807, %s18, 1
        %s1809 = smul.addr %s1808, 2
        %s1810 = scalar_lea.vmem %s3, %s1809
        %p1811 = scmp.eq.s32.totalorder %s19, 0
        // Predicated region
        $region109: #{svm_forward.1} parent=99 // pred_check
          %p1812 = pneg %p1811
        $region110: #{svm_forward.1} parent=99 // pred_check_branch
          %1814 = sbr.rel (%p1812) target = $region112
        $region111: #{svm_forward.1} parent=99 // pred_region
          %1815 = vst [vmem:[#allocation2] sm:$0xff] 0.0
          %1816 = vst [vmem:[#allocation2 + $0x8] sm:$0xff] 0.0
          %1817 = vst [vmem:[#allocation2 + $0x10] sm:$0xff] 0.0
          %1818 = vst [vmem:[#allocation2 + $0x18] sm:$0xff] 0.0
        $region112: #{svm_forward.1} parent=99 // pred_fallthru
          _
        %v1819 = vld [vmem:[%s1772] sm:$0xff]
        %v1820 = vld [vmem:[%s1772 + $0x8] sm:$0xff]
        %v1821 = vld [vmem:[%s1772 + $0x10] sm:$0xff]
        %v1822 = vld [vmem:[%s1772 + $0x18] sm:$0xff]
        %v1823 = vld [vmem:[%s1772 + $0x20] sm:$0xff]
        %v1824 = vld [vmem:[%s1772 + $0x28] sm:$0xff]
        %v1825 = vld [vmem:[%s1772 + $0x30] sm:$0xff]
        %v1826 = vld [vmem:[%s1772 + $0x38] sm:$0xff]
        %v1827 = vld [vmem:[%s1772 + $0x40] sm:$0xff]
        %v1828 = vld [vmem:[%s1772 + $0x48] sm:$0xff]
        %v1829 = vld [vmem:[%s1772 + $0x50] sm:$0xff]
        %v1830 = vld [vmem:[%s1772 + $0x58] sm:$0xff]
        %v1831 = vld [vmem:[%s1772 + $0x60] sm:$0xff]
        %v1832 = vld [vmem:[%s1772 + $0x68] sm:$0xff]
        %v1833 = vld [vmem:[%s1772 + $0x70] sm:$0xff]
        %v1834 = vld [vmem:[%s1772 + $0x78] sm:$0xff]
        %v1835 = vld [vmem:[%s1772 + $0x80] sm:$0xff]
        %v1836 = vld [vmem:[%s1772 + $0x88] sm:$0xff]
        %v1837 = vld [vmem:[%s1772 + $0x90] sm:$0xff]
        %v1838 = vld [vmem:[%s1772 + $0x98] sm:$0xff]
        %v1839 = vld [vmem:[%s1772 + $0xa0] sm:$0xff]
        %v1840 = vld [vmem:[%s1772 + $0xa8] sm:$0xff]
        %v1841 = vld [vmem:[%s1772 + $0xb0] sm:$0xff]
        %v1842 = vld [vmem:[%s1772 + $0xb8] sm:$0xff]
        %v1843 = vld [vmem:[%s1772 + $0xc0] sm:$0xff]
        %v1844 = vld [vmem:[%s1772 + $0xc8] sm:$0xff]
        %v1845 = vld [vmem:[%s1772 + $0xd0] sm:$0xff]
        %v1846 = vld [vmem:[%s1772 + $0xd8] sm:$0xff]
        %v1847 = vld [vmem:[%s1772 + $0xe0] sm:$0xff]
        %v1848 = vld [vmem:[%s1772 + $0xe8] sm:$0xff]
        %v1849 = vld [vmem:[%s1772 + $0xf0] sm:$0xff]
        %v1850 = vld [vmem:[%s1772 + $0xf8] sm:$0xff]
        %v1851 = vld [vmem:[%s1772 + $0x100] sm:$0xff]
        %v1852 = vld [vmem:[%s1772 + $0x108] sm:$0xff]
        %v1853 = vld [vmem:[%s1772 + $0x110] sm:$0xff]
        %v1854 = vld [vmem:[%s1772 + $0x118] sm:$0xff]
        %v1855 = vld [vmem:[%s1772 + $0x120] sm:$0xff]
        %v1856 = vld [vmem:[%s1772 + $0x128] sm:$0xff]
        %v1857 = vld [vmem:[%s1772 + $0x130] sm:$0xff]
        %v1858 = vld [vmem:[%s1772 + $0x138] sm:$0xff]
        %v1859 = vld [vmem:[%s1772 + $0x140] sm:$0xff]
        %v1860 = vld [vmem:[%s1772 + $0x148] sm:$0xff]
        %v1861 = vld [vmem:[%s1772 + $0x150] sm:$0xff]
        %v1862 = vld [vmem:[%s1772 + $0x158] sm:$0xff]
        %v1863 = vld [vmem:[%s1772 + $0x160] sm:$0xff]
        %v1864 = vld [vmem:[%s1772 + $0x168] sm:$0xff]
        %v1865 = vld [vmem:[%s1772 + $0x170] sm:$0xff]
        %v1866 = vld [vmem:[%s1772 + $0x178] sm:$0xff]
        %v1867 = vld [vmem:[%s1772 + $0x180] sm:$0xff]
        %v1868 = vld [vmem:[%s1772 + $0x188] sm:$0xff]
        %v1869 = vld [vmem:[%s1772 + $0x190] sm:$0xff]
        %v1870 = vld [vmem:[%s1772 + $0x198] sm:$0xff]
        %v1871 = vld [vmem:[%s1772 + $0x1a0] sm:$0xff]
        %v1872 = vld [vmem:[%s1772 + $0x1a8] sm:$0xff]
        %v1873 = vld [vmem:[%s1772 + $0x1b0] sm:$0xff]
        %v1874 = vld [vmem:[%s1772 + $0x1b8] sm:$0xff]
        %v1875 = vld [vmem:[%s1772 + $0x1c0] sm:$0xff]
        %v1876 = vld [vmem:[%s1772 + $0x1c8] sm:$0xff]
        %v1877 = vld [vmem:[%s1772 + $0x1d0] sm:$0xff]
        %v1878 = vld [vmem:[%s1772 + $0x1d8] sm:$0xff]
        %v1879 = vld [vmem:[%s1772 + $0x1e0] sm:$0xff]
        %v1880 = vld [vmem:[%s1772 + $0x1e8] sm:$0xff]
        %v1881 = vld [vmem:[%s1772 + $0x1f0] sm:$0xff]
        %v1882 = vld [vmem:[%s1772 + $0x1f8] sm:$0xff]
        %v1883 = vld [vmem:[%s1772 + $0x200] sm:$0xff]
        %v1884 = vld [vmem:[%s1772 + $0x208] sm:$0xff]
        %v1885 = vld [vmem:[%s1772 + $0x210] sm:$0xff]
        %v1886 = vld [vmem:[%s1772 + $0x218] sm:$0xff]
        %v1887 = vld [vmem:[%s1772 + $0x220] sm:$0xff]
        %v1888 = vld [vmem:[%s1772 + $0x228] sm:$0xff]
        %v1889 = vld [vmem:[%s1772 + $0x230] sm:$0xff]
        %v1890 = vld [vmem:[%s1772 + $0x238] sm:$0xff]
        %v1891 = vld [vmem:[%s1772 + $0x240] sm:$0xff]
        %v1892 = vld [vmem:[%s1772 + $0x248] sm:$0xff]
        %v1893 = vld [vmem:[%s1772 + $0x250] sm:$0xff]
        %v1894 = vld [vmem:[%s1772 + $0x258] sm:$0xff]
        %v1895 = vld [vmem:[%s1772 + $0x260] sm:$0xff]
        %v1896 = vld [vmem:[%s1772 + $0x268] sm:$0xff]
        %v1897 = vld [vmem:[%s1772 + $0x270] sm:$0xff]
        %v1898 = vld [vmem:[%s1772 + $0x278] sm:$0xff]
        %v1899 = vld [vmem:[%s1772 + $0x280] sm:$0xff]
        %v1900 = vld [vmem:[%s1772 + $0x288] sm:$0xff]
        %v1901 = vld [vmem:[%s1772 + $0x290] sm:$0xff]
        %v1902 = vld [vmem:[%s1772 + $0x298] sm:$0xff]
        %v1903 = vld [vmem:[%s1772 + $0x2a0] sm:$0xff]
        %v1904 = vld [vmem:[%s1772 + $0x2a8] sm:$0xff]
        %v1905 = vld [vmem:[%s1772 + $0x2b0] sm:$0xff]
        %v1906 = vld [vmem:[%s1772 + $0x2b8] sm:$0xff]
        %v1907 = vld [vmem:[%s1772 + $0x2c0] sm:$0xff]
        %v1908 = vld [vmem:[%s1772 + $0x2c8] sm:$0xff]
        %v1909 = vld [vmem:[%s1772 + $0x2d0] sm:$0xff]
        %v1910 = vld [vmem:[%s1772 + $0x2d8] sm:$0xff]
        %v1911 = vld [vmem:[%s1772 + $0x2e0] sm:$0xff]
        %v1912 = vld [vmem:[%s1772 + $0x2e8] sm:$0xff]
        %v1913 = vld [vmem:[%s1772 + $0x2f0] sm:$0xff]
        %v1914 = vld [vmem:[%s1772 + $0x2f8] sm:$0xff]
        %v1915 = vld [vmem:[#allocation2] sm:$0xff]
        %v1916 = vld [vmem:[%s1779] sm:$0xff]
        %v1917 = vld [vmem:[%s1779 + $0x8] sm:$0xff]
        %v1918 = vld [vmem:[%s1779 + $0x10] sm:$0xff]
        %v1919 = vld [vmem:[%s1779 + $0x18] sm:$0xff]
        %v1920 = vld [vmem:[%s1779 + $0x20] sm:$0xff]
        %v1921 = vld [vmem:[%s1779 + $0x28] sm:$0xff]
        %v1922 = vld [vmem:[%s1779 + $0x30] sm:$0xff]
        %v1923 = vld [vmem:[%s1779 + $0x38] sm:$0xff]
        %v1924 = vld [vmem:[%s1779 + $0x40] sm:$0xff]
        %v1925 = vld [vmem:[%s1779 + $0x48] sm:$0xff]
        %v1926 = vld [vmem:[%s1779 + $0x50] sm:$0xff]
        %v1927 = vld [vmem:[%s1779 + $0x58] sm:$0xff]
        %v1928 = vld [vmem:[%s1779 + $0x60] sm:$0xff]
        %v1929 = vld [vmem:[%s1779 + $0x68] sm:$0xff]
        %v1930 = vld [vmem:[%s1779 + $0x70] sm:$0xff]
        %v1931 = vld [vmem:[%s1779 + $0x78] sm:$0xff]
        %v1932 = vld [vmem:[%s1779 + $0x80] sm:$0xff]
        %v1933 = vld [vmem:[%s1779 + $0x88] sm:$0xff]
        %v1934 = vld [vmem:[%s1779 + $0x90] sm:$0xff]
        %v1935 = vld [vmem:[%s1779 + $0x98] sm:$0xff]
        %v1936 = vld [vmem:[%s1779 + $0xa0] sm:$0xff]
        %v1937 = vld [vmem:[%s1779 + $0xa8] sm:$0xff]
        %v1938 = vld [vmem:[%s1779 + $0xb0] sm:$0xff]
        %v1939 = vld [vmem:[%s1779 + $0xb8] sm:$0xff]
        %v1940 = vld [vmem:[%s1779 + $0xc0] sm:$0xff]
        %v1941 = vld [vmem:[%s1779 + $0xc8] sm:$0xff]
        %v1942 = vld [vmem:[%s1779 + $0xd0] sm:$0xff]
        %v1943 = vld [vmem:[%s1779 + $0xd8] sm:$0xff]
        %v1944 = vld [vmem:[%s1779 + $0xe0] sm:$0xff]
        %v1945 = vld [vmem:[%s1779 + $0xe8] sm:$0xff]
        %v1946 = vld [vmem:[%s1779 + $0xf0] sm:$0xff]
        %v1947 = vld [vmem:[%s1779 + $0xf8] sm:$0xff]
        %v1948 = vld [vmem:[%s1779 + $0x100] sm:$0xff]
        %v1949 = vld [vmem:[%s1779 + $0x108] sm:$0xff]
        %v1950 = vld [vmem:[%s1779 + $0x110] sm:$0xff]
        %v1951 = vld [vmem:[%s1779 + $0x118] sm:$0xff]
        %v1952 = vld [vmem:[%s1779 + $0x120] sm:$0xff]
        %v1953 = vld [vmem:[%s1779 + $0x128] sm:$0xff]
        %v1954 = vld [vmem:[%s1779 + $0x130] sm:$0xff]
        %v1955 = vld [vmem:[%s1779 + $0x138] sm:$0xff]
        %v1956 = vld [vmem:[%s1779 + $0x140] sm:$0xff]
        %v1957 = vld [vmem:[%s1779 + $0x148] sm:$0xff]
        %v1958 = vld [vmem:[%s1779 + $0x150] sm:$0xff]
        %v1959 = vld [vmem:[%s1779 + $0x158] sm:$0xff]
        %v1960 = vld [vmem:[%s1779 + $0x160] sm:$0xff]
        %v1961 = vld [vmem:[%s1779 + $0x168] sm:$0xff]
        %v1962 = vld [vmem:[%s1779 + $0x170] sm:$0xff]
        %v1963 = vld [vmem:[%s1779 + $0x178] sm:$0xff]
        %v1964 = vld [vmem:[%s1779 + $0x180] sm:$0xff]
        %v1965 = vld [vmem:[%s1779 + $0x188] sm:$0xff]
        %v1966 = vld [vmem:[%s1779 + $0x190] sm:$0xff]
        %v1967 = vld [vmem:[%s1779 + $0x198] sm:$0xff]
        %v1968 = vld [vmem:[%s1779 + $0x1a0] sm:$0xff]
        %v1969 = vld [vmem:[%s1779 + $0x1a8] sm:$0xff]
        %v1970 = vld [vmem:[%s1779 + $0x1b0] sm:$0xff]
        %v1971 = vld [vmem:[%s1779 + $0x1b8] sm:$0xff]
        %v1972 = vld [vmem:[%s1779 + $0x1c0] sm:$0xff]
        %v1973 = vld [vmem:[%s1779 + $0x1c8] sm:$0xff]
        %v1974 = vld [vmem:[%s1779 + $0x1d0] sm:$0xff]
        %v1975 = vld [vmem:[%s1779 + $0x1d8] sm:$0xff]
        %v1976 = vld [vmem:[%s1779 + $0x1e0] sm:$0xff]
        %v1977 = vld [vmem:[%s1779 + $0x1e8] sm:$0xff]
        %v1978 = vld [vmem:[%s1779 + $0x1f0] sm:$0xff]
        %v1979 = vld [vmem:[%s1779 + $0x1f8] sm:$0xff]
        %v1980 = vld [vmem:[%s1779 + $0x200] sm:$0xff]
        %v1981 = vld [vmem:[%s1779 + $0x208] sm:$0xff]
        %v1982 = vld [vmem:[%s1779 + $0x210] sm:$0xff]
        %v1983 = vld [vmem:[%s1779 + $0x218] sm:$0xff]
        %v1984 = vld [vmem:[%s1779 + $0x220] sm:$0xff]
        %v1985 = vld [vmem:[%s1779 + $0x228] sm:$0xff]
        %v1986 = vld [vmem:[%s1779 + $0x230] sm:$0xff]
        %v1987 = vld [vmem:[%s1779 + $0x238] sm:$0xff]
        %v1988 = vld [vmem:[%s1779 + $0x240] sm:$0xff]
        %v1989 = vld [vmem:[%s1779 + $0x248] sm:$0xff]
        %v1990 = vld [vmem:[%s1779 + $0x250] sm:$0xff]
        %v1991 = vld [vmem:[%s1779 + $0x258] sm:$0xff]
        %v1992 = vld [vmem:[%s1779 + $0x260] sm:$0xff]
        %v1993 = vld [vmem:[%s1779 + $0x268] sm:$0xff]
        %v1994 = vld [vmem:[%s1779 + $0x270] sm:$0xff]
        %v1995 = vld [vmem:[%s1779 + $0x278] sm:$0xff]
        %v1996 = vld [vmem:[%s1779 + $0x280] sm:$0xff]
        %v1997 = vld [vmem:[%s1779 + $0x288] sm:$0xff]
        %v1998 = vld [vmem:[%s1779 + $0x290] sm:$0xff]
        %v1999 = vld [vmem:[%s1779 + $0x298] sm:$0xff]
        %v2000 = vld [vmem:[%s1779 + $0x2a0] sm:$0xff]
        %v2001 = vld [vmem:[%s1779 + $0x2a8] sm:$0xff]
        %v2002 = vld [vmem:[%s1779 + $0x2b0] sm:$0xff]
        %v2003 = vld [vmem:[%s1779 + $0x2b8] sm:$0xff]
        %v2004 = vld [vmem:[%s1779 + $0x2c0] sm:$0xff]
        %v2005 = vld [vmem:[%s1779 + $0x2c8] sm:$0xff]
        %v2006 = vld [vmem:[%s1779 + $0x2d0] sm:$0xff]
        %v2007 = vld [vmem:[%s1779 + $0x2d8] sm:$0xff]
        %v2008 = vld [vmem:[%s1779 + $0x2e0] sm:$0xff]
        %v2009 = vld [vmem:[%s1779 + $0x2e8] sm:$0xff]
        %v2010 = vld [vmem:[%s1779 + $0x2f0] sm:$0xff]
        %v2011 = vld [vmem:[%s1779 + $0x2f8] sm:$0xff]
        %v2012 = vmul.f32 %v1819, %v1916
        %v2013 = vmul.f32 %v1820, %v1917
        %v2014 = vmul.f32 %v1821, %v1918
        %v2015 = vmul.f32 %v1822, %v1919
        %v2016 = vmul.f32 %v1823, %v1920
        %v2017 = vmul.f32 %v1824, %v1921
        %v2018 = vmul.f32 %v1825, %v1922
        %v2019 = vmul.f32 %v1826, %v1923
        %v2020 = vmul.f32 %v1827, %v1924
        %v2021 = vmul.f32 %v1828, %v1925
        %v2022 = vmul.f32 %v1829, %v1926
        %v2023 = vmul.f32 %v1830, %v1927
        %v2024 = vmul.f32 %v1831, %v1928
        %v2025 = vmul.f32 %v1832, %v1929
        %v2026 = vmul.f32 %v1833, %v1930
        %v2027 = vmul.f32 %v1834, %v1931
        %v2028 = vmul.f32 %v1835, %v1932
        %v2029 = vmul.f32 %v1836, %v1933
        %v2030 = vmul.f32 %v1837, %v1934
        %v2031 = vmul.f32 %v1838, %v1935
        %v2032 = vmul.f32 %v1839, %v1936
        %v2033 = vmul.f32 %v1840, %v1937
        %v2034 = vmul.f32 %v1841, %v1938
        %v2035 = vmul.f32 %v1842, %v1939
        %v2036 = vmul.f32 %v1843, %v1940
        %v2037 = vmul.f32 %v1844, %v1941
        %v2038 = vmul.f32 %v1845, %v1942
        %v2039 = vmul.f32 %v1846, %v1943
        %v2040 = vmul.f32 %v1847, %v1944
        %v2041 = vmul.f32 %v1848, %v1945
        %v2042 = vmul.f32 %v1849, %v1946
        %v2043 = vmul.f32 %v1850, %v1947
        %v2044 = vmul.f32 %v1851, %v1948
        %v2045 = vmul.f32 %v1852, %v1949
        %v2046 = vmul.f32 %v1853, %v1950
        %v2047 = vmul.f32 %v1854, %v1951
        %v2048 = vmul.f32 %v1855, %v1952
        %v2049 = vmul.f32 %v1856, %v1953
        %v2050 = vmul.f32 %v1857, %v1954
        %v2051 = vmul.f32 %v1858, %v1955
        %v2052 = vmul.f32 %v1859, %v1956
        %v2053 = vmul.f32 %v1860, %v1957
        %v2054 = vmul.f32 %v1861, %v1958
        %v2055 = vmul.f32 %v1862, %v1959
        %v2056 = vmul.f32 %v1863, %v1960
        %v2057 = vmul.f32 %v1864, %v1961
        %v2058 = vmul.f32 %v1865, %v1962
        %v2059 = vmul.f32 %v1866, %v1963
        %v2060 = vmul.f32 %v1867, %v1964
        %v2061 = vmul.f32 %v1868, %v1965
        %v2062 = vmul.f32 %v1869, %v1966
        %v2063 = vmul.f32 %v1870, %v1967
        %v2064 = vmul.f32 %v1871, %v1968
        %v2065 = vmul.f32 %v1872, %v1969
        %v2066 = vmul.f32 %v1873, %v1970
        %v2067 = vmul.f32 %v1874, %v1971
        %v2068 = vmul.f32 %v1875, %v1972
        %v2069 = vmul.f32 %v1876, %v1973
        %v2070 = vmul.f32 %v1877, %v1974
        %v2071 = vmul.f32 %v1878, %v1975
        %v2072 = vmul.f32 %v1879, %v1976
        %v2073 = vmul.f32 %v1880, %v1977
        %v2074 = vmul.f32 %v1881, %v1978
        %v2075 = vmul.f32 %v1882, %v1979
        %v2076 = vmul.f32 %v1883, %v1980
        %v2077 = vmul.f32 %v1884, %v1981
        %v2078 = vmul.f32 %v1885, %v1982
        %v2079 = vmul.f32 %v1886, %v1983
        %v2080 = vmul.f32 %v1887, %v1984
        %v2081 = vmul.f32 %v1888, %v1985
        %v2082 = vmul.f32 %v1889, %v1986
        %v2083 = vmul.f32 %v1890, %v1987
        %v2084 = vmul.f32 %v1891, %v1988
        %v2085 = vmul.f32 %v1892, %v1989
        %v2086 = vmul.f32 %v1893, %v1990
        %v2087 = vmul.f32 %v1894, %v1991
        %v2088 = vmul.f32 %v1895, %v1992
        %v2089 = vmul.f32 %v1896, %v1993
        %v2090 = vmul.f32 %v1897, %v1994
        %v2091 = vmul.f32 %v1898, %v1995
        %v2092 = vmul.f32 %v1899, %v1996
        %v2093 = vmul.f32 %v1900, %v1997
        %v2094 = vmul.f32 %v1901, %v1998
        %v2095 = vmul.f32 %v1902, %v1999
        %v2096 = vmul.f32 %v1903, %v2000
        %v2097 = vmul.f32 %v1904, %v2001
        %v2098 = vmul.f32 %v1905, %v2002
        %v2099 = vmul.f32 %v1906, %v2003
        %v2100 = vmul.f32 %v1907, %v2004
        %v2101 = vmul.f32 %v1908, %v2005
        %v2102 = vmul.f32 %v1909, %v2006
        %v2103 = vmul.f32 %v1910, %v2007
        %v2104 = vmul.f32 %v1911, %v2008
        %v2105 = vmul.f32 %v1912, %v2009
        %v2106 = vmul.f32 %v1913, %v2010
        %v2107 = vmul.f32 %v1914, %v2011
        %v2108 = vadd.f32 %v2012, %v2013
        %v2109 = vadd.f32 %v2108, %v2014
        %v2110 = vadd.f32 %v2109, %v2015
        %v2111 = vadd.f32 %v2110, %v2016
        %v2112 = vadd.f32 %v2111, %v2017
        %v2113 = vadd.f32 %v2112, %v2018
        %v2114 = vadd.f32 %v2113, %v2019
        %v2115 = vadd.f32 %v2114, %v2020
        %v2116 = vadd.f32 %v2115, %v2021
        %v2117 = vadd.f32 %v2116, %v2022
        %v2118 = vadd.f32 %v2117, %v2023
        %v2119 = vadd.f32 %v2118, %v2024
        %v2120 = vadd.f32 %v2119, %v2025
        %v2121 = vadd.f32 %v2120, %v2026
        %v2122 = vadd.f32 %v2121, %v2027
        %v2123 = vadd.f32 %v2122, %v2028
        %v2124 = vadd.f32 %v2123, %v2029
        %v2125 = vadd.f32 %v2124, %v2030
        %v2126 = vadd.f32 %v2125, %v2031
        %v2127 = vadd.f32 %v2126, %v2032
        %v2128 = vadd.f32 %v2127, %v2033
        %v2129 = vadd.f32 %v2128, %v2034
        %v2130 = vadd.f32 %v2129, %v2035
        %v2131 = vadd.f32 %v2130, %v2036
        %v2132 = vadd.f32 %v2131, %v2037
        %v2133 = vadd.f32 %v2132, %v2038
        %v2134 = vadd.f32 %v2133, %v2039
        %v2135 = vadd.f32 %v2134, %v2040
        %v2136 = vadd.f32 %v2135, %v2041
        %v2137 = vadd.f32 %v2136, %v2042
        %v2138 = vadd.f32 %v2137, %v2043
        %v2139 = vadd.f32 %v2138, %v2044
        %v2140 = vadd.f32 %v2139, %v2045
        %v2141 = vadd.f32 %v2140, %v2046
        %v2142 = vadd.f32 %v2141, %v2047
        %v2143 = vadd.f32 %v2142, %v2048
        %v2144 = vadd.f32 %v2143, %v2049
        %v2145 = vadd.f32 %v2144, %v2050
        %v2146 = vadd.f32 %v2145, %v2051
        %v2147 = vadd.f32 %v2146, %v2052
        %v2148 = vadd.f32 %v2147, %v2053
        %v2149 = vadd.f32 %v2148, %v2054
        %v2150 = vadd.f32 %v2149, %v2055
        %v2151 = vadd.f32 %v2150, %v2056
        %v2152 = vadd.f32 %v2151, %v2057
        %v2153 = vadd.f32 %v2152, %v2058
        %v2154 = vadd.f32 %v2153, %v2059
        %v2155 = vadd.f32 %v2154, %v2060
        %v2156 = vadd.f32 %v2155, %v2061
        %v2157 = vadd.f32 %v2156, %v2062
        %v2158 = vadd.f32 %v2157, %v2063
        %v2159 = vadd.f32 %v2158, %v2064
        %v2160 = vadd.f32 %v2159, %v2065
        %v2161 = vadd.f32 %v2160, %v2066
        %v2162 = vadd.f32 %v2161, %v2067
        %v2163 = vadd.f32 %v2162, %v2068
        %v2164 = vadd.f32 %v2163, %v2069
        %v2165 = vadd.f32 %v2164, %v2070
        %v2166 = vadd.f32 %v2165, %v2071
        %v2167 = vadd.f32 %v2166, %v2072
        %v2168 = vadd.f32 %v2167, %v2073
        %v2169 = vadd.f32 %v2168, %v2074
        %v2170 = vadd.f32 %v2169, %v2075
        %v2171 = vadd.f32 %v2170, %v2076
        %v2172 = vadd.f32 %v2171, %v2077
        %v2173 = vadd.f32 %v2172, %v2078
        %v2174 = vadd.f32 %v2173, %v2079
        %v2175 = vadd.f32 %v2174, %v2080
        %v2176 = vadd.f32 %v2175, %v2081
        %v2177 = vadd.f32 %v2176, %v2082
        %v2178 = vadd.f32 %v2177, %v2083
        %v2179 = vadd.f32 %v2178, %v2084
        %v2180 = vadd.f32 %v2179, %v2085
        %v2181 = vadd.f32 %v2180, %v2086
        %v2182 = vadd.f32 %v2181, %v2087
        %v2183 = vadd.f32 %v2182, %v2088
        %v2184 = vadd.f32 %v2183, %v2089
        %v2185 = vadd.f32 %v2184, %v2090
        %v2186 = vadd.f32 %v2185, %v2091
        %v2187 = vadd.f32 %v2186, %v2092
        %v2188 = vadd.f32 %v2187, %v2093
        %v2189 = vadd.f32 %v2188, %v2094
        %v2190 = vadd.f32 %v2189, %v2095
        %v2191 = vadd.f32 %v2190, %v2096
        %v2192 = vadd.f32 %v2191, %v2097
        %v2193 = vadd.f32 %v2192, %v2098
        %v2194 = vadd.f32 %v2193, %v2099
        %v2195 = vadd.f32 %v2194, %v2100
        %v2196 = vadd.f32 %v2195, %v2101
        %v2197 = vadd.f32 %v2196, %v2102
        %v2198 = vadd.f32 %v2197, %v2103
        %v2199 = vadd.f32 %v2198, %v2104
        %v2200 = vadd.f32 %v2199, %v2105
        %v2201 = vadd.f32 %v2200, %v2106
        %v2202 = vadd.f32 %v2201, %v2107
        %v2203 = vadd.f32 %v1915, %v2202
        %2204 = vst [vmem:[#allocation2] sm:$0xff] %v2203
        %s2205 = scalar_lea.vmem [#allocation2], 8
        %v2206 = vld [vmem:[%s2205] sm:$0xff]
        %s2207 = scalar_lea.vmem %s1779, 768 [#allocation4]
        %v2208 = vld [vmem:[%s2207] sm:$0xff]
        %v2209 = vld [vmem:[%s2207 + $0x8] sm:$0xff]
        %v2210 = vld [vmem:[%s2207 + $0x10] sm:$0xff]
        %v2211 = vld [vmem:[%s2207 + $0x18] sm:$0xff]
        %v2212 = vld [vmem:[%s2207 + $0x20] sm:$0xff]
        %v2213 = vld [vmem:[%s2207 + $0x28] sm:$0xff]
        %v2214 = vld [vmem:[%s2207 + $0x30] sm:$0xff]
        %v2215 = vld [vmem:[%s2207 + $0x38] sm:$0xff]
        %v2216 = vld [vmem:[%s2207 + $0x40] sm:$0xff]
        %v2217 = vld [vmem:[%s2207 + $0x48] sm:$0xff]
        %v2218 = vld [vmem:[%s2207 + $0x50] sm:$0xff]
        %v2219 = vld [vmem:[%s2207 + $0x58] sm:$0xff]
        %v2220 = vld [vmem:[%s2207 + $0x60] sm:$0xff]
        %v2221 = vld [vmem:[%s2207 + $0x68] sm:$0xff]
        %v2222 = vld [vmem:[%s2207 + $0x70] sm:$0xff]
        %v2223 = vld [vmem:[%s2207 + $0x78] sm:$0xff]
        %v2224 = vld [vmem:[%s2207 + $0x80] sm:$0xff]
        %v2225 = vld [vmem:[%s2207 + $0x88] sm:$0xff]
        %v2226 = vld [vmem:[%s2207 + $0x90] sm:$0xff]
        %v2227 = vld [vmem:[%s2207 + $0x98] sm:$0xff]
        %v2228 = vld [vmem:[%s2207 + $0xa0] sm:$0xff]
        %v2229 = vld [vmem:[%s2207 + $0xa8] sm:$0xff]
        %v2230 = vld [vmem:[%s2207 + $0xb0] sm:$0xff]
        %v2231 = vld [vmem:[%s2207 + $0xb8] sm:$0xff]
        %v2232 = vld [vmem:[%s2207 + $0xc0] sm:$0xff]
        %v2233 = vld [vmem:[%s2207 + $0xc8] sm:$0xff]
        %v2234 = vld [vmem:[%s2207 + $0xd0] sm:$0xff]
        %v2235 = vld [vmem:[%s2207 + $0xd8] sm:$0xff]
        %v2236 = vld [vmem:[%s2207 + $0xe0] sm:$0xff]
        %v2237 = vld [vmem:[%s2207 + $0xe8] sm:$0xff]
        %v2238 = vld [vmem:[%s2207 + $0xf0] sm:$0xff]
        %v2239 = vld [vmem:[%s2207 + $0xf8] sm:$0xff]
        %v2240 = vld [vmem:[%s2207 + $0x100] sm:$0xff]
        %v2241 = vld [vmem:[%s2207 + $0x108] sm:$0xff]
        %v2242 = vld [vmem:[%s2207 + $0x110] sm:$0xff]
        %v2243 = vld [vmem:[%s2207 + $0x118] sm:$0xff]
        %v2244 = vld [vmem:[%s2207 + $0x120] sm:$0xff]
        %v2245 = vld [vmem:[%s2207 + $0x128] sm:$0xff]
        %v2246 = vld [vmem:[%s2207 + $0x130] sm:$0xff]
        %v2247 = vld [vmem:[%s2207 + $0x138] sm:$0xff]
        %v2248 = vld [vmem:[%s2207 + $0x140] sm:$0xff]
        %v2249 = vld [vmem:[%s2207 + $0x148] sm:$0xff]
        %v2250 = vld [vmem:[%s2207 + $0x150] sm:$0xff]
        %v2251 = vld [vmem:[%s2207 + $0x158] sm:$0xff]
        %v2252 = vld [vmem:[%s2207 + $0x160] sm:$0xff]
        %v2253 = vld [vmem:[%s2207 + $0x168] sm:$0xff]
        %v2254 = vld [vmem:[%s2207 + $0x170] sm:$0xff]
        %v2255 = vld [vmem:[%s2207 + $0x178] sm:$0xff]
        %v2256 = vld [vmem:[%s2207 + $0x180] sm:$0xff]
        %v2257 = vld [vmem:[%s2207 + $0x188] sm:$0xff]
        %v2258 = vld [vmem:[%s2207 + $0x190] sm:$0xff]
        %v2259 = vld [vmem:[%s2207 + $0x198] sm:$0xff]
        %v2260 = vld [vmem:[%s2207 + $0x1a0] sm:$0xff]
        %v2261 = vld [vmem:[%s2207 + $0x1a8] sm:$0xff]
        %v2262 = vld [vmem:[%s2207 + $0x1b0] sm:$0xff]
        %v2263 = vld [vmem:[%s2207 + $0x1b8] sm:$0xff]
        %v2264 = vld [vmem:[%s2207 + $0x1c0] sm:$0xff]
        %v2265 = vld [vmem:[%s2207 + $0x1c8] sm:$0xff]
        %v2266 = vld [vmem:[%s2207 + $0x1d0] sm:$0xff]
        %v2267 = vld [vmem:[%s2207 + $0x1d8] sm:$0xff]
        %v2268 = vld [vmem:[%s2207 + $0x1e0] sm:$0xff]
        %v2269 = vld [vmem:[%s2207 + $0x1e8] sm:$0xff]
        %v2270 = vld [vmem:[%s2207 + $0x1f0] sm:$0xff]
        %v2271 = vld [vmem:[%s2207 + $0x1f8] sm:$0xff]
        %v2272 = vld [vmem:[%s2207 + $0x200] sm:$0xff]
        %v2273 = vld [vmem:[%s2207 + $0x208] sm:$0xff]
        %v2274 = vld [vmem:[%s2207 + $0x210] sm:$0xff]
        %v2275 = vld [vmem:[%s2207 + $0x218] sm:$0xff]
        %v2276 = vld [vmem:[%s2207 + $0x220] sm:$0xff]
        %v2277 = vld [vmem:[%s2207 + $0x228] sm:$0xff]
        %v2278 = vld [vmem:[%s2207 + $0x230] sm:$0xff]
        %v2279 = vld [vmem:[%s2207 + $0x238] sm:$0xff]
        %v2280 = vld [vmem:[%s2207 + $0x240] sm:$0xff]
        %v2281 = vld [vmem:[%s2207 + $0x248] sm:$0xff]
        %v2282 = vld [vmem:[%s2207 + $0x250] sm:$0xff]
        %v2283 = vld [vmem:[%s2207 + $0x258] sm:$0xff]
        %v2284 = vld [vmem:[%s2207 + $0x260] sm:$0xff]
        %v2285 = vld [vmem:[%s2207 + $0x268] sm:$0xff]
        %v2286 = vld [vmem:[%s2207 + $0x270] sm:$0xff]
        %v2287 = vld [vmem:[%s2207 + $0x278] sm:$0xff]
        %v2288 = vld [vmem:[%s2207 + $0x280] sm:$0xff]
        %v2289 = vld [vmem:[%s2207 + $0x288] sm:$0xff]
        %v2290 = vld [vmem:[%s2207 + $0x290] sm:$0xff]
        %v2291 = vld [vmem:[%s2207 + $0x298] sm:$0xff]
        %v2292 = vld [vmem:[%s2207 + $0x2a0] sm:$0xff]
        %v2293 = vld [vmem:[%s2207 + $0x2a8] sm:$0xff]
        %v2294 = vld [vmem:[%s2207 + $0x2b0] sm:$0xff]
        %v2295 = vld [vmem:[%s2207 + $0x2b8] sm:$0xff]
        %v2296 = vld [vmem:[%s2207 + $0x2c0] sm:$0xff]
        %v2297 = vld [vmem:[%s2207 + $0x2c8] sm:$0xff]
        %v2298 = vld [vmem:[%s2207 + $0x2d0] sm:$0xff]
        %v2299 = vld [vmem:[%s2207 + $0x2d8] sm:$0xff]
        %v2300 = vld [vmem:[%s2207 + $0x2e0] sm:$0xff]
        %v2301 = vld [vmem:[%s2207 + $0x2e8] sm:$0xff]
        %v2302 = vld [vmem:[%s2207 + $0x2f0] sm:$0xff]
        %v2303 = vld [vmem:[%s2207 + $0x2f8] sm:$0xff]
        %v2304 = vmul.f32 %v1819, %v2208
        %v2305 = vmul.f32 %v1820, %v2209
        %v2306 = vmul.f32 %v1821, %v2210
        %v2307 = vmul.f32 %v1822, %v2211
        %v2308 = vmul.f32 %v1823, %v2212
        %v2309 = vmul.f32 %v1824, %v2213
        %v2310 = vmul.f32 %v1825, %v2214
        %v2311 = vmul.f32 %v1826, %v2215
        %v2312 = vmul.f32 %v1827, %v2216
        %v2313 = vmul.f32 %v1828, %v2217
        %v2314 = vmul.f32 %v1829, %v2218
        %v2315 = vmul.f32 %v1830, %v2219
        %v2316 = vmul.f32 %v1831, %v2220
        %v2317 = vmul.f32 %v1832, %v2221
        %v2318 = vmul.f32 %v1833, %v2222
        %v2319 = vmul.f32 %v1834, %v2223
        %v2320 = vmul.f32 %v1835, %v2224
        %v2321 = vmul.f32 %v1836, %v2225
        %v2322 = vmul.f32 %v1837, %v2226
        %v2323 = vmul.f32 %v1838, %v2227
        %v2324 = vmul.f32 %v1839, %v2228
        %v2325 = vmul.f32 %v1840, %v2229
        %v2326 = vmul.f32 %v1841, %v2230
        %v2327 = vmul.f32 %v1842, %v2231
        %v2328 = vmul.f32 %v1843, %v2232
        %v2329 = vmul.f32 %v1844, %v2233
        %v2330 = vmul.f32 %v1845, %v2234
        %v2331 = vmul.f32 %v1846, %v2235
        %v2332 = vmul.f32 %v1847, %v2236
        %v2333 = vmul.f32 %v1848, %v2237
        %v2334 = vmul.f32 %v1849, %v2238
        %v2335 = vmul.f32 %v1850, %v2239
        %v2336 = vmul.f32 %v1851, %v2240
        %v2337 = vmul.f32 %v1852, %v2241
        %v2338 = vmul.f32 %v1853, %v2242
        %v2339 = vmul.f32 %v1854, %v2243
        %v2340 = vmul.f32 %v1855, %v2244
        %v2341 = vmul.f32 %v1856, %v2245
        %v2342 = vmul.f32 %v1857, %v2246
        %v2343 = vmul.f32 %v1858, %v2247
        %v2344 = vmul.f32 %v1859, %v2248
        %v2345 = vmul.f32 %v1860, %v2249
        %v2346 = vmul.f32 %v1861, %v2250
        %v2347 = vmul.f32 %v1862, %v2251
        %v2348 = vmul.f32 %v1863, %v2252
        %v2349 = vmul.f32 %v1864, %v2253
        %v2350 = vmul.f32 %v1865, %v2254
        %v2351 = vmul.f32 %v1866, %v2255
        %v2352 = vmul.f32 %v1867, %v2256
        %v2353 = vmul.f32 %v1868, %v2257
        %v2354 = vmul.f32 %v1869, %v2258
        %v2355 = vmul.f32 %v1870, %v2259
        %v2356 = vmul.f32 %v1871, %v2260
        %v2357 = vmul.f32 %v1872, %v2261
        %v2358 = vmul.f32 %v1873, %v2262
        %v2359 = vmul.f32 %v1874, %v2263
        %v2360 = vmul.f32 %v1875, %v2264
        %v2361 = vmul.f32 %v1876, %v2265
        %v2362 = vmul.f32 %v1877, %v2266
        %v2363 = vmul.f32 %v1878, %v2267
        %v2364 = vmul.f32 %v1879, %v2268
        %v2365 = vmul.f32 %v1880, %v2269
        %v2366 = vmul.f32 %v1881, %v2270
        %v2367 = vmul.f32 %v1882, %v2271
        %v2368 = vmul.f32 %v1883, %v2272
        %v2369 = vmul.f32 %v1884, %v2273
        %v2370 = vmul.f32 %v1885, %v2274
        %v2371 = vmul.f32 %v1886, %v2275
        %v2372 = vmul.f32 %v1887, %v2276
        %v2373 = vmul.f32 %v1888, %v2277
        %v2374 = vmul.f32 %v1889, %v2278
        %v2375 = vmul.f32 %v1890, %v2279
        %v2376 = vmul.f32 %v1891, %v2280
        %v2377 = vmul.f32 %v1892, %v2281
        %v2378 = vmul.f32 %v1893, %v2282
        %v2379 = vmul.f32 %v1894, %v2283
        %v2380 = vmul.f32 %v1895, %v2284
        %v2381 = vmul.f32 %v1896, %v2285
        %v2382 = vmul.f32 %v1897, %v2286
        %v2383 = vmul.f32 %v1898, %v2287
        %v2384 = vmul.f32 %v1899, %v2288
        %v2385 = vmul.f32 %v1900, %v2289
        %v2386 = vmul.f32 %v1901, %v2290
        %v2387 = vmul.f32 %v1902, %v2291
        %v2388 = vmul.f32 %v1903, %v2292
        %v2389 = vmul.f32 %v1904, %v2293
        %v2390 = vmul.f32 %v1905, %v2294
        %v2391 = vmul.f32 %v1906, %v2295
        %v2392 = vmul.f32 %v1907, %v2296
        %v2393 = vmul.f32 %v1908, %v2297
        %v2394 = vmul.f32 %v1909, %v2298
        %v2395 = vmul.f32 %v1910, %v2299
        %v2396 = vmul.f32 %v1911, %v2300
        %v2397 = vmul.f32 %v1912, %v2301
        %v2398 = vmul.f32 %v1913, %v2302
        %v2399 = vmul.f32 %v1914, %v2303
        %v2400 = vadd.f32 %v2304, %v2305
        %v2401 = vadd.f32 %v2400, %v2306
        %v2402 = vadd.f32 %v2401, %v2307
        %v2403 = vadd.f32 %v2402, %v2308
        %v2404 = vadd.f32 %v2403, %v2309
        %v2405 = vadd.f32 %v2404, %v2310
        %v2406 = vadd.f32 %v2405, %v2311
        %v2407 = vadd.f32 %v2406, %v2312
        %v2408 = vadd.f32 %v2407, %v2313
        %v2409 = vadd.f32 %v2408, %v2314
        %v2410 = vadd.f32 %v2409, %v2315
        %v2411 = vadd.f32 %v2410, %v2316
        %v2412 = vadd.f32 %v2411, %v2317
        %v2413 = vadd.f32 %v2412, %v2318
        %v2414 = vadd.f32 %v2413, %v2319
        %v2415 = vadd.f32 %v2414, %v2320
        %v2416 = vadd.f32 %v2415, %v2321
        %v2417 = vadd.f32 %v2416, %v2322
        %v2418 = vadd.f32 %v2417, %v2323
        %v2419 = vadd.f32 %v2418, %v2324
        %v2420 = vadd.f32 %v2419, %v2325
        %v2421 = vadd.f32 %v2420, %v2326
        %v2422 = vadd.f32 %v2421, %v2327
        %v2423 = vadd.f32 %v2422, %v2328
        %v2424 = vadd.f32 %v2423, %v2329
        %v2425 = vadd.f32 %v2424, %v2330
        %v2426 = vadd.f32 %v2425, %v2331
        %v2427 = vadd.f32 %v2426, %v2332
        %v2428 = vadd.f32 %v2427, %v2333
        %v2429 = vadd.f32 %v2428, %v2334
        %v2430 = vadd.f32 %v2429, %v2335
        %v2431 = vadd.f32 %v2430, %v2336
        %v2432 = vadd.f32 %v2431, %v2337
        %v2433 = vadd.f32 %v2432, %v2338
        %v2434 = vadd.f32 %v2433, %v2339
        %v2435 = vadd.f32 %v2434, %v2340
        %v2436 = vadd.f32 %v2435, %v2341
        %v2437 = vadd.f32 %v2436, %v2342
        %v2438 = vadd.f32 %v2437, %v2343
        %v2439 = vadd.f32 %v2438, %v2344
        %v2440 = vadd.f32 %v2439, %v2345
        %v2441 = vadd.f32 %v2440, %v2346
        %v2442 = vadd.f32 %v2441, %v2347
        %v2443 = vadd.f32 %v2442, %v2348
        %v2444 = vadd.f32 %v2443, %v2349
        %v2445 = vadd.f32 %v2444, %v2350
        %v2446 = vadd.f32 %v2445, %v2351
        %v2447 = vadd.f32 %v2446, %v2352
        %v2448 = vadd.f32 %v2447, %v2353
        %v2449 = vadd.f32 %v2448, %v2354
        %v2450 = vadd.f32 %v2449, %v2355
        %v2451 = vadd.f32 %v2450, %v2356
        %v2452 = vadd.f32 %v2451, %v2357
        %v2453 = vadd.f32 %v2452, %v2358
        %v2454 = vadd.f32 %v2453, %v2359
        %v2455 = vadd.f32 %v2454, %v2360
        %v2456 = vadd.f32 %v2455, %v2361
        %v2457 = vadd.f32 %v2456, %v2362
        %v2458 = vadd.f32 %v2457, %v2363
        %v2459 = vadd.f32 %v2458, %v2364
        %v2460 = vadd.f32 %v2459, %v2365
        %v2461 = vadd.f32 %v2460, %v2366
        %v2462 = vadd.f32 %v2461, %v2367
        %v2463 = vadd.f32 %v2462, %v2368
        %v2464 = vadd.f32 %v2463, %v2369
        %v2465 = vadd.f32 %v2464, %v2370
        %v2466 = vadd.f32 %v2465, %v2371
        %v2467 = vadd.f32 %v2466, %v2372
        %v2468 = vadd.f32 %v2467, %v2373
        %v2469 = vadd.f32 %v2468, %v2374
        %v2470 = vadd.f32 %v2469, %v2375
        %v2471 = vadd.f32 %v2470, %v2376
        %v2472 = vadd.f32 %v2471, %v2377
        %v2473 = vadd.f32 %v2472, %v2378
        %v2474 = vadd.f32 %v2473, %v2379
        %v2475 = vadd.f32 %v2474, %v2380
        %v2476 = vadd.f32 %v2475, %v2381
        %v2477 = vadd.f32 %v2476, %v2382
        %v2478 = vadd.f32 %v2477, %v2383
        %v2479 = vadd.f32 %v2478, %v2384
        %v2480 = vadd.f32 %v2479, %v2385
        %v2481 = vadd.f32 %v2480, %v2386
        %v2482 = vadd.f32 %v2481, %v2387
        %v2483 = vadd.f32 %v2482, %v2388
        %v2484 = vadd.f32 %v2483, %v2389
        %v2485 = vadd.f32 %v2484, %v2390
        %v2486 = vadd.f32 %v2485, %v2391
        %v2487 = vadd.f32 %v2486, %v2392
        %v2488 = vadd.f32 %v2487, %v2393
        %v2489 = vadd.f32 %v2488, %v2394
        %v2490 = vadd.f32 %v2489, %v2395
        %v2491 = vadd.f32 %v2490, %v2396
        %v2492 = vadd.f32 %v2491, %v2397
        %v2493 = vadd.f32 %v2492, %v2398
        %v2494 = vadd.f32 %v2493, %v2399
        %v2495 = vadd.f32 %v2206, %v2494
        %2496 = vst [vmem:[%s2205] sm:$0xff] %v2495
        %s2497 = scalar_lea.vmem %s1772, 768 [#allocation3]
        %v2498 = vld [vmem:[%s2497] sm:$0xff]
        %v2499 = vld [vmem:[%s2497 + $0x8] sm:$0xff]
        %v2500 = vld [vmem:[%s2497 + $0x10] sm:$0xff]
        %v2501 = vld [vmem:[%s2497 + $0x18] sm:$0xff]
        %v2502 = vld [vmem:[%s2497 + $0x20] sm:$0xff]
        %v2503 = vld [vmem:[%s2497 + $0x28] sm:$0xff]
        %v2504 = vld [vmem:[%s2497 + $0x30] sm:$0xff]
        %v2505 = vld [vmem:[%s2497 + $0x38] sm:$0xff]
        %v2506 = vld [vmem:[%s2497 + $0x40] sm:$0xff]
        %v2507 = vld [vmem:[%s2497 + $0x48] sm:$0xff]
        %v2508 = vld [vmem:[%s2497 + $0x50] sm:$0xff]
        %v2509 = vld [vmem:[%s2497 + $0x58] sm:$0xff]
        %v2510 = vld [vmem:[%s2497 + $0x60] sm:$0xff]
        %v2511 = vld [vmem:[%s2497 + $0x68] sm:$0xff]
        %v2512 = vld [vmem:[%s2497 + $0x70] sm:$0xff]
        %v2513 = vld [vmem:[%s2497 + $0x78] sm:$0xff]
        %v2514 = vld [vmem:[%s2497 + $0x80] sm:$0xff]
        %v2515 = vld [vmem:[%s2497 + $0x88] sm:$0xff]
        %v2516 = vld [vmem:[%s2497 + $0x90] sm:$0xff]
        %v2517 = vld [vmem:[%s2497 + $0x98] sm:$0xff]
        %v2518 = vld [vmem:[%s2497 + $0xa0] sm:$0xff]
        %v2519 = vld [vmem:[%s2497 + $0xa8] sm:$0xff]
        %v2520 = vld [vmem:[%s2497 + $0xb0] sm:$0xff]
        %v2521 = vld [vmem:[%s2497 + $0xb8] sm:$0xff]
        %v2522 = vld [vmem:[%s2497 + $0xc0] sm:$0xff]
        %v2523 = vld [vmem:[%s2497 + $0xc8] sm:$0xff]
        %v2524 = vld [vmem:[%s2497 + $0xd0] sm:$0xff]
        %v2525 = vld [vmem:[%s2497 + $0xd8] sm:$0xff]
        %v2526 = vld [vmem:[%s2497 + $0xe0] sm:$0xff]
        %v2527 = vld [vmem:[%s2497 + $0xe8] sm:$0xff]
        %v2528 = vld [vmem:[%s2497 + $0xf0] sm:$0xff]
        %v2529 = vld [vmem:[%s2497 + $0xf8] sm:$0xff]
        %v2530 = vld [vmem:[%s2497 + $0x100] sm:$0xff]
        %v2531 = vld [vmem:[%s2497 + $0x108] sm:$0xff]
        %v2532 = vld [vmem:[%s2497 + $0x110] sm:$0xff]
        %v2533 = vld [vmem:[%s2497 + $0x118] sm:$0xff]
        %v2534 = vld [vmem:[%s2497 + $0x120] sm:$0xff]
        %v2535 = vld [vmem:[%s2497 + $0x128] sm:$0xff]
        %v2536 = vld [vmem:[%s2497 + $0x130] sm:$0xff]
        %v2537 = vld [vmem:[%s2497 + $0x138] sm:$0xff]
        %v2538 = vld [vmem:[%s2497 + $0x140] sm:$0xff]
        %v2539 = vld [vmem:[%s2497 + $0x148] sm:$0xff]
        %v2540 = vld [vmem:[%s2497 + $0x150] sm:$0xff]
        %v2541 = vld [vmem:[%s2497 + $0x158] sm:$0xff]
        %v2542 = vld [vmem:[%s2497 + $0x160] sm:$0xff]
        %v2543 = vld [vmem:[%s2497 + $0x168] sm:$0xff]
        %v2544 = vld [vmem:[%s2497 + $0x170] sm:$0xff]
        %v2545 = vld [vmem:[%s2497 + $0x178] sm:$0xff]
        %v2546 = vld [vmem:[%s2497 + $0x180] sm:$0xff]
        %v2547 = vld [vmem:[%s2497 + $0x188] sm:$0xff]
        %v2548 = vld [vmem:[%s2497 + $0x190] sm:$0xff]
        %v2549 = vld [vmem:[%s2497 + $0x198] sm:$0xff]
        %v2550 = vld [vmem:[%s2497 + $0x1a0] sm:$0xff]
        %v2551 = vld [vmem:[%s2497 + $0x1a8] sm:$0xff]
        %v2552 = vld [vmem:[%s2497 + $0x1b0] sm:$0xff]
        %v2553 = vld [vmem:[%s2497 + $0x1b8] sm:$0xff]
        %v2554 = vld [vmem:[%s2497 + $0x1c0] sm:$0xff]
        %v2555 = vld [vmem:[%s2497 + $0x1c8] sm:$0xff]
        %v2556 = vld [vmem:[%s2497 + $0x1d0] sm:$0xff]
        %v2557 = vld [vmem:[%s2497 + $0x1d8] sm:$0xff]
        %v2558 = vld [vmem:[%s2497 + $0x1e0] sm:$0xff]
        %v2559 = vld [vmem:[%s2497 + $0x1e8] sm:$0xff]
        %v2560 = vld [vmem:[%s2497 + $0x1f0] sm:$0xff]
        %v2561 = vld [vmem:[%s2497 + $0x1f8] sm:$0xff]
        %v2562 = vld [vmem:[%s2497 + $0x200] sm:$0xff]
        %v2563 = vld [vmem:[%s2497 + $0x208] sm:$0xff]
        %v2564 = vld [vmem:[%s2497 + $0x210] sm:$0xff]
        %v2565 = vld [vmem:[%s2497 + $0x218] sm:$0xff]
        %v2566 = vld [vmem:[%s2497 + $0x220] sm:$0xff]
        %v2567 = vld [vmem:[%s2497 + $0x228] sm:$0xff]
        %v2568 = vld [vmem:[%s2497 + $0x230] sm:$0xff]
        %v2569 = vld [vmem:[%s2497 + $0x238] sm:$0xff]
        %v2570 = vld [vmem:[%s2497 + $0x240] sm:$0xff]
        %v2571 = vld [vmem:[%s2497 + $0x248] sm:$0xff]
        %v2572 = vld [vmem:[%s2497 + $0x250] sm:$0xff]
        %v2573 = vld [vmem:[%s2497 + $0x258] sm:$0xff]
        %v2574 = vld [vmem:[%s2497 + $0x260] sm:$0xff]
        %v2575 = vld [vmem:[%s2497 + $0x268] sm:$0xff]
        %v2576 = vld [vmem:[%s2497 + $0x270] sm:$0xff]
        %v2577 = vld [vmem:[%s2497 + $0x278] sm:$0xff]
        %v2578 = vld [vmem:[%s2497 + $0x280] sm:$0xff]
        %v2579 = vld [vmem:[%s2497 + $0x288] sm:$0xff]
        %v2580 = vld [vmem:[%s2497 + $0x290] sm:$0xff]
        %v2581 = vld [vmem:[%s2497 + $0x298] sm:$0xff]
        %v2582 = vld [vmem:[%s2497 + $0x2a0] sm:$0xff]
        %v2583 = vld [vmem:[%s2497 + $0x2a8] sm:$0xff]
        %v2584 = vld [vmem:[%s2497 + $0x2b0] sm:$0xff]
        %v2585 = vld [vmem:[%s2497 + $0x2b8] sm:$0xff]
        %v2586 = vld [vmem:[%s2497 + $0x2c0] sm:$0xff]
        %v2587 = vld [vmem:[%s2497 + $0x2c8] sm:$0xff]
        %v2588 = vld [vmem:[%s2497 + $0x2d0] sm:$0xff]
        %v2589 = vld [vmem:[%s2497 + $0x2d8] sm:$0xff]
        %v2590 = vld [vmem:[%s2497 + $0x2e0] sm:$0xff]
        %v2591 = vld [vmem:[%s2497 + $0x2e8] sm:$0xff]
        %v2592 = vld [vmem:[%s2497 + $0x2f0] sm:$0xff]
        %v2593 = vld [vmem:[%s2497 + $0x2f8] sm:$0xff]
        %s2594 = scalar_lea.vmem [#allocation2], 16
        %v2595 = vld [vmem:[%s2594] sm:$0xff]
        %v2596 = vld [vmem:[%s1779] sm:$0xff]
        %v2597 = vld [vmem:[%s1779 + $0x8] sm:$0xff]
        %v2598 = vld [vmem:[%s1779 + $0x10] sm:$0xff]
        %v2599 = vld [vmem:[%s1779 + $0x18] sm:$0xff]
        %v2600 = vld [vmem:[%s1779 + $0x20] sm:$0xff]
        %v2601 = vld [vmem:[%s1779 + $0x28] sm:$0xff]
        %v2602 = vld [vmem:[%s1779 + $0x30] sm:$0xff]
        %v2603 = vld [vmem:[%s1779 + $0x38] sm:$0xff]
        %v2604 = vld [vmem:[%s1779 + $0x40] sm:$0xff]
        %v2605 = vld [vmem:[%s1779 + $0x48] sm:$0xff]
        %v2606 = vld [vmem:[%s1779 + $0x50] sm:$0xff]
        %v2607 = vld [vmem:[%s1779 + $0x58] sm:$0xff]
        %v2608 = vld [vmem:[%s1779 + $0x60] sm:$0xff]
        %v2609 = vld [vmem:[%s1779 + $0x68] sm:$0xff]
        %v2610 = vld [vmem:[%s1779 + $0x70] sm:$0xff]
        %v2611 = vld [vmem:[%s1779 + $0x78] sm:$0xff]
        %v2612 = vld [vmem:[%s1779 + $0x80] sm:$0xff]
        %v2613 = vld [vmem:[%s1779 + $0x88] sm:$0xff]
        %v2614 = vld [vmem:[%s1779 + $0x90] sm:$0xff]
        %v2615 = vld [vmem:[%s1779 + $0x98] sm:$0xff]
        %v2616 = vld [vmem:[%s1779 + $0xa0] sm:$0xff]
        %v2617 = vld [vmem:[%s1779 + $0xa8] sm:$0xff]
        %v2618 = vld [vmem:[%s1779 + $0xb0] sm:$0xff]
        %v2619 = vld [vmem:[%s1779 + $0xb8] sm:$0xff]
        %v2620 = vld [vmem:[%s1779 + $0xc0] sm:$0xff]
        %v2621 = vld [vmem:[%s1779 + $0xc8] sm:$0xff]
        %v2622 = vld [vmem:[%s1779 + $0xd0] sm:$0xff]
        %v2623 = vld [vmem:[%s1779 + $0xd8] sm:$0xff]
        %v2624 = vld [vmem:[%s1779 + $0xe0] sm:$0xff]
        %v2625 = vld [vmem:[%s1779 + $0xe8] sm:$0xff]
        %v2626 = vld [vmem:[%s1779 + $0xf0] sm:$0xff]
        %v2627 = vld [vmem:[%s1779 + $0xf8] sm:$0xff]
        %v2628 = vld [vmem:[%s1779 + $0x100] sm:$0xff]
        %v2629 = vld [vmem:[%s1779 + $0x108] sm:$0xff]
        %v2630 = vld [vmem:[%s1779 + $0x110] sm:$0xff]
        %v2631 = vld [vmem:[%s1779 + $0x118] sm:$0xff]
        %v2632 = vld [vmem:[%s1779 + $0x120] sm:$0xff]
        %v2633 = vld [vmem:[%s1779 + $0x128] sm:$0xff]
        %v2634 = vld [vmem:[%s1779 + $0x130] sm:$0xff]
        %v2635 = vld [vmem:[%s1779 + $0x138] sm:$0xff]
        %v2636 = vld [vmem:[%s1779 + $0x140] sm:$0xff]
        %v2637 = vld [vmem:[%s1779 + $0x148] sm:$0xff]
        %v2638 = vld [vmem:[%s1779 + $0x150] sm:$0xff]
        %v2639 = vld [vmem:[%s1779 + $0x158] sm:$0xff]
        %v2640 = vld [vmem:[%s1779 + $0x160] sm:$0xff]
        %v2641 = vld [vmem:[%s1779 + $0x168] sm:$0xff]
        %v2642 = vld [vmem:[%s1779 + $0x170] sm:$0xff]
        %v2643 = vld [vmem:[%s1779 + $0x178] sm:$0xff]
        %v2644 = vld [vmem:[%s1779 + $0x180] sm:$0xff]
        %v2645 = vld [vmem:[%s1779 + $0x188] sm:$0xff]
        %v2646 = vld [vmem:[%s1779 + $0x190] sm:$0xff]
        %v2647 = vld [vmem:[%s1779 + $0x198] sm:$0xff]
        %v2648 = vld [vmem:[%s1779 + $0x1a0] sm:$0xff]
        %v2649 = vld [vmem:[%s1779 + $0x1a8] sm:$0xff]
        %v2650 = vld [vmem:[%s1779 + $0x1b0] sm:$0xff]
        %v2651 = vld [vmem:[%s1779 + $0x1b8] sm:$0xff]
        %v2652 = vld [vmem:[%s1779 + $0x1c0] sm:$0xff]
        %v2653 = vld [vmem:[%s1779 + $0x1c8] sm:$0xff]
        %v2654 = vld [vmem:[%s1779 + $0x1d0] sm:$0xff]
        %v2655 = vld [vmem:[%s1779 + $0x1d8] sm:$0xff]
        %v2656 = vld [vmem:[%s1779 + $0x1e0] sm:$0xff]
        %v2657 = vld [vmem:[%s1779 + $0x1e8] sm:$0xff]
        %v2658 = vld [vmem:[%s1779 + $0x1f0] sm:$0xff]
        %v2659 = vld [vmem:[%s1779 + $0x1f8] sm:$0xff]
        %v2660 = vld [vmem:[%s1779 + $0x200] sm:$0xff]
        %v2661 = vld [vmem:[%s1779 + $0x208] sm:$0xff]
        %v2662 = vld [vmem:[%s1779 + $0x210] sm:$0xff]
        %v2663 = vld [vmem:[%s1779 + $0x218] sm:$0xff]
        %v2664 = vld [vmem:[%s1779 + $0x220] sm:$0xff]
        %v2665 = vld [vmem:[%s1779 + $0x228] sm:$0xff]
        %v2666 = vld [vmem:[%s1779 + $0x230] sm:$0xff]
        %v2667 = vld [vmem:[%s1779 + $0x238] sm:$0xff]
        %v2668 = vld [vmem:[%s1779 + $0x240] sm:$0xff]
        %v2669 = vld [vmem:[%s1779 + $0x248] sm:$0xff]
        %v2670 = vld [vmem:[%s1779 + $0x250] sm:$0xff]
        %v2671 = vld [vmem:[%s1779 + $0x258] sm:$0xff]
        %v2672 = vld [vmem:[%s1779 + $0x260] sm:$0xff]
        %v2673 = vld [vmem:[%s1779 + $0x268] sm:$0xff]
        %v2674 = vld [vmem:[%s1779 + $0x270] sm:$0xff]
        %v2675 = vld [vmem:[%s1779 + $0x278] sm:$0xff]
        %v2676 = vld [vmem:[%s1779 + $0x280] sm:$0xff]
        %v2677 = vld [vmem:[%s1779 + $0x288] sm:$0xff]
        %v2678 = vld [vmem:[%s1779 + $0x290] sm:$0xff]
        %v2679 = vld [vmem:[%s1779 + $0x298] sm:$0xff]
        %v2680 = vld [vmem:[%s1779 + $0x2a0] sm:$0xff]
        %v2681 = vld [vmem:[%s1779 + $0x2a8] sm:$0xff]
        %v2682 = vld [vmem:[%s1779 + $0x2b0] sm:$0xff]
        %v2683 = vld [vmem:[%s1779 + $0x2b8] sm:$0xff]
        %v2684 = vld [vmem:[%s1779 + $0x2c0] sm:$0xff]
        %v2685 = vld [vmem:[%s1779 + $0x2c8] sm:$0xff]
        %v2686 = vld [vmem:[%s1779 + $0x2d0] sm:$0xff]
        %v2687 = vld [vmem:[%s1779 + $0x2d8] sm:$0xff]
        %v2688 = vld [vmem:[%s1779 + $0x2e0] sm:$0xff]
        %v2689 = vld [vmem:[%s1779 + $0x2e8] sm:$0xff]
        %v2690 = vld [vmem:[%s1779 + $0x2f0] sm:$0xff]
        %v2691 = vld [vmem:[%s1779 + $0x2f8] sm:$0xff]
        %v2692 = vmul.f32 %v2498, %v2596
        %v2693 = vmul.f32 %v2499, %v2597
        %v2694 = vmul.f32 %v2500, %v2598
        %v2695 = vmul.f32 %v2501, %v2599
        %v2696 = vmul.f32 %v2502, %v2600
        %v2697 = vmul.f32 %v2503, %v2601
        %v2698 = vmul.f32 %v2504, %v2602
        %v2699 = vmul.f32 %v2505, %v2603
        %v2700 = vmul.f32 %v2506, %v2604
        %v2701 = vmul.f32 %v2507, %v2605
        %v2702 = vmul.f32 %v2508, %v2606
        %v2703 = vmul.f32 %v2509, %v2607
        %v2704 = vmul.f32 %v2510, %v2608
        %v2705 = vmul.f32 %v2511, %v2609
        %v2706 = vmul.f32 %v2512, %v2610
        %v2707 = vmul.f32 %v2513, %v2611
        %v2708 = vmul.f32 %v2514, %v2612
        %v2709 = vmul.f32 %v2515, %v2613
        %v2710 = vmul.f32 %v2516, %v2614
        %v2711 = vmul.f32 %v2517, %v2615
        %v2712 = vmul.f32 %v2518, %v2616
        %v2713 = vmul.f32 %v2519, %v2617
        %v2714 = vmul.f32 %v2520, %v2618
        %v2715 = vmul.f32 %v2521, %v2619
        %v2716 = vmul.f32 %v2522, %v2620
        %v2717 = vmul.f32 %v2523, %v2621
        %v2718 = vmul.f32 %v2524, %v2622
        %v2719 = vmul.f32 %v2525, %v2623
        %v2720 = vmul.f32 %v2526, %v2624
        %v2721 = vmul.f32 %v2527, %v2625
        %v2722 = vmul.f32 %v2528, %v2626
        %v2723 = vmul.f32 %v2529, %v2627
        %v2724 = vmul.f32 %v2530, %v2628
        %v2725 = vmul.f32 %v2531, %v2629
        %v2726 = vmul.f32 %v2532, %v2630
        %v2727 = vmul.f32 %v2533, %v2631
        %v2728 = vmul.f32 %v2534, %v2632
        %v2729 = vmul.f32 %v2535, %v2633
        %v2730 = vmul.f32 %v2536, %v2634
        %v2731 = vmul.f32 %v2537, %v2635
        %v2732 = vmul.f32 %v2538, %v2636
        %v2733 = vmul.f32 %v2539, %v2637
        %v2734 = vmul.f32 %v2540, %v2638
        %v2735 = vmul.f32 %v2541, %v2639
        %v2736 = vmul.f32 %v2542, %v2640
        %v2737 = vmul.f32 %v2543, %v2641
        %v2738 = vmul.f32 %v2544, %v2642
        %v2739 = vmul.f32 %v2545, %v2643
        %v2740 = vmul.f32 %v2546, %v2644
        %v2741 = vmul.f32 %v2547, %v2645
        %v2742 = vmul.f32 %v2548, %v2646
        %v2743 = vmul.f32 %v2549, %v2647
        %v2744 = vmul.f32 %v2550, %v2648
        %v2745 = vmul.f32 %v2551, %v2649
        %v2746 = vmul.f32 %v2552, %v2650
        %v2747 = vmul.f32 %v2553, %v2651
        %v2748 = vmul.f32 %v2554, %v2652
        %v2749 = vmul.f32 %v2555, %v2653
        %v2750 = vmul.f32 %v2556, %v2654
        %v2751 = vmul.f32 %v2557, %v2655
        %v2752 = vmul.f32 %v2558, %v2656
        %v2753 = vmul.f32 %v2559, %v2657
        %v2754 = vmul.f32 %v2560, %v2658
        %v2755 = vmul.f32 %v2561, %v2659
        %v2756 = vmul.f32 %v2562, %v2660
        %v2757 = vmul.f32 %v2563, %v2661
        %v2758 = vmul.f32 %v2564, %v2662
        %v2759 = vmul.f32 %v2565, %v2663
        %v2760 = vmul.f32 %v2566, %v2664
        %v2761 = vmul.f32 %v2567, %v2665
        %v2762 = vmul.f32 %v2568, %v2666
        %v2763 = vmul.f32 %v2569, %v2667
        %v2764 = vmul.f32 %v2570, %v2668
        %v2765 = vmul.f32 %v2571, %v2669
        %v2766 = vmul.f32 %v2572, %v2670
        %v2767 = vmul.f32 %v2573, %v2671
        %v2768 = vmul.f32 %v2574, %v2672
        %v2769 = vmul.f32 %v2575, %v2673
        %v2770 = vmul.f32 %v2576, %v2674
        %v2771 = vmul.f32 %v2577, %v2675
        %v2772 = vmul.f32 %v2578, %v2676
        %v2773 = vmul.f32 %v2579, %v2677
        %v2774 = vmul.f32 %v2580, %v2678
        %v2775 = vmul.f32 %v2581, %v2679
        %v2776 = vmul.f32 %v2582, %v2680
        %v2777 = vmul.f32 %v2583, %v2681
        %v2778 = vmul.f32 %v2584, %v2682
        %v2779 = vmul.f32 %v2585, %v2683
        %v2780 = vmul.f32 %v2586, %v2684
        %v2781 = vmul.f32 %v2587, %v2685
        %v2782 = vmul.f32 %v2588, %v2686
        %v2783 = vmul.f32 %v2589, %v2687
        %v2784 = vmul.f32 %v2590, %v2688
        %v2785 = vmul.f32 %v2591, %v2689
        %v2786 = vmul.f32 %v2592, %v2690
        %v2787 = vmul.f32 %v2593, %v2691
        %v2788 = vadd.f32 %v2692, %v2693
        %v2789 = vadd.f32 %v2788, %v2694
        %v2790 = vadd.f32 %v2789, %v2695
        %v2791 = vadd.f32 %v2790, %v2696
        %v2792 = vadd.f32 %v2791, %v2697
        %v2793 = vadd.f32 %v2792, %v2698
        %v2794 = vadd.f32 %v2793, %v2699
        %v2795 = vadd.f32 %v2794, %v2700
        %v2796 = vadd.f32 %v2795, %v2701
        %v2797 = vadd.f32 %v2796, %v2702
        %v2798 = vadd.f32 %v2797, %v2703
        %v2799 = vadd.f32 %v2798, %v2704
        %v2800 = vadd.f32 %v2799, %v2705
        %v2801 = vadd.f32 %v2800, %v2706
        %v2802 = vadd.f32 %v2801, %v2707
        %v2803 = vadd.f32 %v2802, %v2708
        %v2804 = vadd.f32 %v2803, %v2709
        %v2805 = vadd.f32 %v2804, %v2710
        %v2806 = vadd.f32 %v2805, %v2711
        %v2807 = vadd.f32 %v2806, %v2712
        %v2808 = vadd.f32 %v2807, %v2713
        %v2809 = vadd.f32 %v2808, %v2714
        %v2810 = vadd.f32 %v2809, %v2715
        %v2811 = vadd.f32 %v2810, %v2716
        %v2812 = vadd.f32 %v2811, %v2717
        %v2813 = vadd.f32 %v2812, %v2718
        %v2814 = vadd.f32 %v2813, %v2719
        %v2815 = vadd.f32 %v2814, %v2720
        %v2816 = vadd.f32 %v2815, %v2721
        %v2817 = vadd.f32 %v2816, %v2722
        %v2818 = vadd.f32 %v2817, %v2723
        %v2819 = vadd.f32 %v2818, %v2724
        %v2820 = vadd.f32 %v2819, %v2725
        %v2821 = vadd.f32 %v2820, %v2726
        %v2822 = vadd.f32 %v2821, %v2727
        %v2823 = vadd.f32 %v2822, %v2728
        %v2824 = vadd.f32 %v2823, %v2729
        %v2825 = vadd.f32 %v2824, %v2730
        %v2826 = vadd.f32 %v2825, %v2731
        %v2827 = vadd.f32 %v2826, %v2732
        %v2828 = vadd.f32 %v2827, %v2733
        %v2829 = vadd.f32 %v2828, %v2734
        %v2830 = vadd.f32 %v2829, %v2735
        %v2831 = vadd.f32 %v2830, %v2736
        %v2832 = vadd.f32 %v2831, %v2737
        %v2833 = vadd.f32 %v2832, %v2738
        %v2834 = vadd.f32 %v2833, %v2739
        %v2835 = vadd.f32 %v2834, %v2740
        %v2836 = vadd.f32 %v2835, %v2741
        %v2837 = vadd.f32 %v2836, %v2742
        %v2838 = vadd.f32 %v2837, %v2743
        %v2839 = vadd.f32 %v2838, %v2744
        %v2840 = vadd.f32 %v2839, %v2745
        %v2841 = vadd.f32 %v2840, %v2746
        %v2842 = vadd.f32 %v2841, %v2747
        %v2843 = vadd.f32 %v2842, %v2748
        %v2844 = vadd.f32 %v2843, %v2749
        %v2845 = vadd.f32 %v2844, %v2750
        %v2846 = vadd.f32 %v2845, %v2751
        %v2847 = vadd.f32 %v2846, %v2752
        %v2848 = vadd.f32 %v2847, %v2753
        %v2849 = vadd.f32 %v2848, %v2754
        %v2850 = vadd.f32 %v2849, %v2755
        %v2851 = vadd.f32 %v2850, %v2756
        %v2852 = vadd.f32 %v2851, %v2757
        %v2853 = vadd.f32 %v2852, %v2758
        %v2854 = vadd.f32 %v2853, %v2759
        %v2855 = vadd.f32 %v2854, %v2760
        %v2856 = vadd.f32 %v2855, %v2761
        %v2857 = vadd.f32 %v2856, %v2762
        %v2858 = vadd.f32 %v2857, %v2763
        %v2859 = vadd.f32 %v2858, %v2764
        %v2860 = vadd.f32 %v2859, %v2765
        %v2861 = vadd.f32 %v2860, %v2766
        %v2862 = vadd.f32 %v2861, %v2767
        %v2863 = vadd.f32 %v2862, %v2768
        %v2864 = vadd.f32 %v2863, %v2769
        %v2865 = vadd.f32 %v2864, %v2770
        %v2866 = vadd.f32 %v2865, %v2771
        %v2867 = vadd.f32 %v2866, %v2772
        %v2868 = vadd.f32 %v2867, %v2773
        %v2869 = vadd.f32 %v2868, %v2774
        %v2870 = vadd.f32 %v2869, %v2775
        %v2871 = vadd.f32 %v2870, %v2776
        %v2872 = vadd.f32 %v2871, %v2777
        %v2873 = vadd.f32 %v2872, %v2778
        %v2874 = vadd.f32 %v2873, %v2779
        %v2875 = vadd.f32 %v2874, %v2780
        %v2876 = vadd.f32 %v2875, %v2781
        %v2877 = vadd.f32 %v2876, %v2782
        %v2878 = vadd.f32 %v2877, %v2783
        %v2879 = vadd.f32 %v2878, %v2784
        %v2880 = vadd.f32 %v2879, %v2785
        %v2881 = vadd.f32 %v2880, %v2786
        %v2882 = vadd.f32 %v2881, %v2787
        %v2883 = vadd.f32 %v2595, %v2882
        %2884 = vst [vmem:[%s2594] sm:$0xff] %v2883
        %s2885 = scalar_lea.vmem [#allocation2], 24
        %v2886 = vld [vmem:[%s2885] sm:$0xff]
        %v2887 = vld [vmem:[%s2207] sm:$0xff]
        %v2888 = vld [vmem:[%s2207 + $0x8] sm:$0xff]
        %v2889 = vld [vmem:[%s2207 + $0x10] sm:$0xff]
        %v2890 = vld [vmem:[%s2207 + $0x18] sm:$0xff]
        %v2891 = vld [vmem:[%s2207 + $0x20] sm:$0xff]
        %v2892 = vld [vmem:[%s2207 + $0x28] sm:$0xff]
        %v2893 = vld [vmem:[%s2207 + $0x30] sm:$0xff]
        %v2894 = vld [vmem:[%s2207 + $0x38] sm:$0xff]
        %v2895 = vld [vmem:[%s2207 + $0x40] sm:$0xff]
        %v2896 = vld [vmem:[%s2207 + $0x48] sm:$0xff]
        %v2897 = vld [vmem:[%s2207 + $0x50] sm:$0xff]
        %v2898 = vld [vmem:[%s2207 + $0x58] sm:$0xff]
        %v2899 = vld [vmem:[%s2207 + $0x60] sm:$0xff]
        %v2900 = vld [vmem:[%s2207 + $0x68] sm:$0xff]
        %v2901 = vld [vmem:[%s2207 + $0x70] sm:$0xff]
        %v2902 = vld [vmem:[%s2207 + $0x78] sm:$0xff]
        %v2903 = vld [vmem:[%s2207 + $0x80] sm:$0xff]
        %v2904 = vld [vmem:[%s2207 + $0x88] sm:$0xff]
        %v2905 = vld [vmem:[%s2207 + $0x90] sm:$0xff]
        %v2906 = vld [vmem:[%s2207 + $0x98] sm:$0xff]
        %v2907 = vld [vmem:[%s2207 + $0xa0] sm:$0xff]
        %v2908 = vld [vmem:[%s2207 + $0xa8] sm:$0xff]
        %v2909 = vld [vmem:[%s2207 + $0xb0] sm:$0xff]
        %v2910 = vld [vmem:[%s2207 + $0xb8] sm:$0xff]
        %v2911 = vld [vmem:[%s2207 + $0xc0] sm:$0xff]
        %v2912 = vld [vmem:[%s2207 + $0xc8] sm:$0xff]
        %v2913 = vld [vmem:[%s2207 + $0xd0] sm:$0xff]
        %v2914 = vld [vmem:[%s2207 + $0xd8] sm:$0xff]
        %v2915 = vld [vmem:[%s2207 + $0xe0] sm:$0xff]
        %v2916 = vld [vmem:[%s2207 + $0xe8] sm:$0xff]
        %v2917 = vld [vmem:[%s2207 + $0xf0] sm:$0xff]
        %v2918 = vld [vmem:[%s2207 + $0xf8] sm:$0xff]
        %v2919 = vld [vmem:[%s2207 + $0x100] sm:$0xff]
        %v2920 = vld [vmem:[%s2207 + $0x108] sm:$0xff]
        %v2921 = vld [vmem:[%s2207 + $0x110] sm:$0xff]
        %v2922 = vld [vmem:[%s2207 + $0x118] sm:$0xff]
        %v2923 = vld [vmem:[%s2207 + $0x120] sm:$0xff]
        %v2924 = vld [vmem:[%s2207 + $0x128] sm:$0xff]
        %v2925 = vld [vmem:[%s2207 + $0x130] sm:$0xff]
        %v2926 = vld [vmem:[%s2207 + $0x138] sm:$0xff]
        %v2927 = vld [vmem:[%s2207 + $0x140] sm:$0xff]
        %v2928 = vld [vmem:[%s2207 + $0x148] sm:$0xff]
        %v2929 = vld [vmem:[%s2207 + $0x150] sm:$0xff]
        %v2930 = vld [vmem:[%s2207 + $0x158] sm:$0xff]
        %v2931 = vld [vmem:[%s2207 + $0x160] sm:$0xff]
        %v2932 = vld [vmem:[%s2207 + $0x168] sm:$0xff]
        %v2933 = vld [vmem:[%s2207 + $0x170] sm:$0xff]
        %v2934 = vld [vmem:[%s2207 + $0x178] sm:$0xff]
        %v2935 = vld [vmem:[%s2207 + $0x180] sm:$0xff]
        %v2936 = vld [vmem:[%s2207 + $0x188] sm:$0xff]
        %v2937 = vld [vmem:[%s2207 + $0x190] sm:$0xff]
        %v2938 = vld [vmem:[%s2207 + $0x198] sm:$0xff]
        %v2939 = vld [vmem:[%s2207 + $0x1a0] sm:$0xff]
        %v2940 = vld [vmem:[%s2207 + $0x1a8] sm:$0xff]
        %v2941 = vld [vmem:[%s2207 + $0x1b0] sm:$0xff]
        %v2942 = vld [vmem:[%s2207 + $0x1b8] sm:$0xff]
        %v2943 = vld [vmem:[%s2207 + $0x1c0] sm:$0xff]
        %v2944 = vld [vmem:[%s2207 + $0x1c8] sm:$0xff]
        %v2945 = vld [vmem:[%s2207 + $0x1d0] sm:$0xff]
        %v2946 = vld [vmem:[%s2207 + $0x1d8] sm:$0xff]
        %v2947 = vld [vmem:[%s2207 + $0x1e0] sm:$0xff]
        %v2948 = vld [vmem:[%s2207 + $0x1e8] sm:$0xff]
        %v2949 = vld [vmem:[%s2207 + $0x1f0] sm:$0xff]
        %v2950 = vld [vmem:[%s2207 + $0x1f8] sm:$0xff]
        %v2951 = vld [vmem:[%s2207 + $0x200] sm:$0xff]
        %v2952 = vld [vmem:[%s2207 + $0x208] sm:$0xff]
        %v2953 = vld [vmem:[%s2207 + $0x210] sm:$0xff]
        %v2954 = vld [vmem:[%s2207 + $0x218] sm:$0xff]
        %v2955 = vld [vmem:[%s2207 + $0x220] sm:$0xff]
        %v2956 = vld [vmem:[%s2207 + $0x228] sm:$0xff]
        %v2957 = vld [vmem:[%s2207 + $0x230] sm:$0xff]
        %v2958 = vld [vmem:[%s2207 + $0x238] sm:$0xff]
        %v2959 = vld [vmem:[%s2207 + $0x240] sm:$0xff]
        %v2960 = vld [vmem:[%s2207 + $0x248] sm:$0xff]
        %v2961 = vld [vmem:[%s2207 + $0x250] sm:$0xff]
        %v2962 = vld [vmem:[%s2207 + $0x258] sm:$0xff]
        %v2963 = vld [vmem:[%s2207 + $0x260] sm:$0xff]
        %v2964 = vld [vmem:[%s2207 + $0x268] sm:$0xff]
        %v2965 = vld [vmem:[%s2207 + $0x270] sm:$0xff]
        %v2966 = vld [vmem:[%s2207 + $0x278] sm:$0xff]
        %v2967 = vld [vmem:[%s2207 + $0x280] sm:$0xff]
        %v2968 = vld [vmem:[%s2207 + $0x288] sm:$0xff]
        %v2969 = vld [vmem:[%s2207 + $0x290] sm:$0xff]
        %v2970 = vld [vmem:[%s2207 + $0x298] sm:$0xff]
        %v2971 = vld [vmem:[%s2207 + $0x2a0] sm:$0xff]
        %v2972 = vld [vmem:[%s2207 + $0x2a8] sm:$0xff]
        %v2973 = vld [vmem:[%s2207 + $0x2b0] sm:$0xff]
        %v2974 = vld [vmem:[%s2207 + $0x2b8] sm:$0xff]
        %v2975 = vld [vmem:[%s2207 + $0x2c0] sm:$0xff]
        %v2976 = vld [vmem:[%s2207 + $0x2c8] sm:$0xff]
        %v2977 = vld [vmem:[%s2207 + $0x2d0] sm:$0xff]
        %v2978 = vld [vmem:[%s2207 + $0x2d8] sm:$0xff]
        %v2979 = vld [vmem:[%s2207 + $0x2e0] sm:$0xff]
        %v2980 = vld [vmem:[%s2207 + $0x2e8] sm:$0xff]
        %v2981 = vld [vmem:[%s2207 + $0x2f0] sm:$0xff]
        %v2982 = vld [vmem:[%s2207 + $0x2f8] sm:$0xff]
        %v2983 = vmul.f32 %v2498, %v2887
        %v2984 = vmul.f32 %v2499, %v2888
        %v2985 = vmul.f32 %v2500, %v2889
        %v2986 = vmul.f32 %v2501, %v2890
        %v2987 = vmul.f32 %v2502, %v2891
        %v2988 = vmul.f32 %v2503, %v2892
        %v2989 = vmul.f32 %v2504, %v2893
        %v2990 = vmul.f32 %v2505, %v2894
        %v2991 = vmul.f32 %v2506, %v2895
        %v2992 = vmul.f32 %v2507, %v2896
        %v2993 = vmul.f32 %v2508, %v2897
        %v2994 = vmul.f32 %v2509, %v2898
        %v2995 = vmul.f32 %v2510, %v2899
        %v2996 = vmul.f32 %v2511, %v2900
        %v2997 = vmul.f32 %v2512, %v2901
        %v2998 = vmul.f32 %v2513, %v2902
        %v2999 = vmul.f32 %v2514, %v2903
        %v3000 = vmul.f32 %v2515, %v2904
        %v3001 = vmul.f32 %v2516, %v2905
        %v3002 = vmul.f32 %v2517, %v2906
        %v3003 = vmul.f32 %v2518, %v2907
        %v3004 = vmul.f32 %v2519, %v2908
        %v3005 = vmul.f32 %v2520, %v2909
        %v3006 = vmul.f32 %v2521, %v2910
        %v3007 = vmul.f32 %v2522, %v2911
        %v3008 = vmul.f32 %v2523, %v2912
        %v3009 = vmul.f32 %v2524, %v2913
        %v3010 = vmul.f32 %v2525, %v2914
        %v3011 = vmul.f32 %v2526, %v2915
        %v3012 = vmul.f32 %v2527, %v2916
        %v3013 = vmul.f32 %v2528, %v2917
        %v3014 = vmul.f32 %v2529, %v2918
        %v3015 = vmul.f32 %v2530, %v2919
        %v3016 = vmul.f32 %v2531, %v2920
        %v3017 = vmul.f32 %v2532, %v2921
        %v3018 = vmul.f32 %v2533, %v2922
        %v3019 = vmul.f32 %v2534, %v2923
        %v3020 = vmul.f32 %v2535, %v2924
        %v3021 = vmul.f32 %v2536, %v2925
        %v3022 = vmul.f32 %v2537, %v2926
        %v3023 = vmul.f32 %v2538, %v2927
        %v3024 = vmul.f32 %v2539, %v2928
        %v3025 = vmul.f32 %v2540, %v2929
        %v3026 = vmul.f32 %v2541, %v2930
        %v3027 = vmul.f32 %v2542, %v2931
        %v3028 = vmul.f32 %v2543, %v2932
        %v3029 = vmul.f32 %v2544, %v2933
        %v3030 = vmul.f32 %v2545, %v2934
        %v3031 = vmul.f32 %v2546, %v2935
        %v3032 = vmul.f32 %v2547, %v2936
        %v3033 = vmul.f32 %v2548, %v2937
        %v3034 = vmul.f32 %v2549, %v2938
        %v3035 = vmul.f32 %v2550, %v2939
        %v3036 = vmul.f32 %v2551, %v2940
        %v3037 = vmul.f32 %v2552, %v2941
        %v3038 = vmul.f32 %v2553, %v2942
        %v3039 = vmul.f32 %v2554, %v2943
        %v3040 = vmul.f32 %v2555, %v2944
        %v3041 = vmul.f32 %v2556, %v2945
        %v3042 = vmul.f32 %v2557, %v2946
        %v3043 = vmul.f32 %v2558, %v2947
        %v3044 = vmul.f32 %v2559, %v2948
        %v3045 = vmul.f32 %v2560, %v2949
        %v3046 = vmul.f32 %v2561, %v2950
        %v3047 = vmul.f32 %v2562, %v2951
        %v3048 = vmul.f32 %v2563, %v2952
        %v3049 = vmul.f32 %v2564, %v2953
        %v3050 = vmul.f32 %v2565, %v2954
        %v3051 = vmul.f32 %v2566, %v2955
        %v3052 = vmul.f32 %v2567, %v2956
        %v3053 = vmul.f32 %v2568, %v2957
        %v3054 = vmul.f32 %v2569, %v2958
        %v3055 = vmul.f32 %v2570, %v2959
        %v3056 = vmul.f32 %v2571, %v2960
        %v3057 = vmul.f32 %v2572, %v2961
        %v3058 = vmul.f32 %v2573, %v2962
        %v3059 = vmul.f32 %v2574, %v2963
        %v3060 = vmul.f32 %v2575, %v2964
        %v3061 = vmul.f32 %v2576, %v2965
        %v3062 = vmul.f32 %v2577, %v2966
        %v3063 = vmul.f32 %v2578, %v2967
        %v3064 = vmul.f32 %v2579, %v2968
        %v3065 = vmul.f32 %v2580, %v2969
        %v3066 = vmul.f32 %v2581, %v2970
        %v3067 = vmul.f32 %v2582, %v2971
        %v3068 = vmul.f32 %v2583, %v2972
        %v3069 = vmul.f32 %v2584, %v2973
        %v3070 = vmul.f32 %v2585, %v2974
        %v3071 = vmul.f32 %v2586, %v2975
        %v3072 = vmul.f32 %v2587, %v2976
        %v3073 = vmul.f32 %v2588, %v2977
        %v3074 = vmul.f32 %v2589, %v2978
        %v3075 = vmul.f32 %v2590, %v2979
        %v3076 = vmul.f32 %v2591, %v2980
        %v3077 = vmul.f32 %v2592, %v2981
        %v3078 = vmul.f32 %v2593, %v2982
        %v3079 = vadd.f32 %v2983, %v2984
        %v3080 = vadd.f32 %v3079, %v2985
        %v3081 = vadd.f32 %v3080, %v2986
        %v3082 = vadd.f32 %v3081, %v2987
        %v3083 = vadd.f32 %v3082, %v2988
        %v3084 = vadd.f32 %v3083, %v2989
        %v3085 = vadd.f32 %v3084, %v2990
        %v3086 = vadd.f32 %v3085, %v2991
        %v3087 = vadd.f32 %v3086, %v2992
        %v3088 = vadd.f32 %v3087, %v2993
        %v3089 = vadd.f32 %v3088, %v2994
        %v3090 = vadd.f32 %v3089, %v2995
        %v3091 = vadd.f32 %v3090, %v2996
        %v3092 = vadd.f32 %v3091, %v2997
        %v3093 = vadd.f32 %v3092, %v2998
        %v3094 = vadd.f32 %v3093, %v2999
        %v3095 = vadd.f32 %v3094, %v3000
        %v3096 = vadd.f32 %v3095, %v3001
        %v3097 = vadd.f32 %v3096, %v3002
        %v3098 = vadd.f32 %v3097, %v3003
        %v3099 = vadd.f32 %v3098, %v3004
        %v3100 = vadd.f32 %v3099, %v3005
        %v3101 = vadd.f32 %v3100, %v3006
        %v3102 = vadd.f32 %v3101, %v3007
        %v3103 = vadd.f32 %v3102, %v3008
        %v3104 = vadd.f32 %v3103, %v3009
        %v3105 = vadd.f32 %v3104, %v3010
        %v3106 = vadd.f32 %v3105, %v3011
        %v3107 = vadd.f32 %v3106, %v3012
        %v3108 = vadd.f32 %v3107, %v3013
        %v3109 = vadd.f32 %v3108, %v3014
        %v3110 = vadd.f32 %v3109, %v3015
        %v3111 = vadd.f32 %v3110, %v3016
        %v3112 = vadd.f32 %v3111, %v3017
        %v3113 = vadd.f32 %v3112, %v3018
        %v3114 = vadd.f32 %v3113, %v3019
        %v3115 = vadd.f32 %v3114, %v3020
        %v3116 = vadd.f32 %v3115, %v3021
        %v3117 = vadd.f32 %v3116, %v3022
        %v3118 = vadd.f32 %v3117, %v3023
        %v3119 = vadd.f32 %v3118, %v3024
        %v3120 = vadd.f32 %v3119, %v3025
        %v3121 = vadd.f32 %v3120, %v3026
        %v3122 = vadd.f32 %v3121, %v3027
        %v3123 = vadd.f32 %v3122, %v3028
        %v3124 = vadd.f32 %v3123, %v3029
        %v3125 = vadd.f32 %v3124, %v3030
        %v3126 = vadd.f32 %v3125, %v3031
        %v3127 = vadd.f32 %v3126, %v3032
        %v3128 = vadd.f32 %v3127, %v3033
        %v3129 = vadd.f32 %v3128, %v3034
        %v3130 = vadd.f32 %v3129, %v3035
        %v3131 = vadd.f32 %v3130, %v3036
        %v3132 = vadd.f32 %v3131, %v3037
        %v3133 = vadd.f32 %v3132, %v3038
        %v3134 = vadd.f32 %v3133, %v3039
        %v3135 = vadd.f32 %v3134, %v3040
        %v3136 = vadd.f32 %v3135, %v3041
        %v3137 = vadd.f32 %v3136, %v3042
        %v3138 = vadd.f32 %v3137, %v3043
        %v3139 = vadd.f32 %v3138, %v3044
        %v3140 = vadd.f32 %v3139, %v3045
        %v3141 = vadd.f32 %v3140, %v3046
        %v3142 = vadd.f32 %v3141, %v3047
        %v3143 = vadd.f32 %v3142, %v3048
        %v3144 = vadd.f32 %v3143, %v3049
        %v3145 = vadd.f32 %v3144, %v3050
        %v3146 = vadd.f32 %v3145, %v3051
        %v3147 = vadd.f32 %v3146, %v3052
        %v3148 = vadd.f32 %v3147, %v3053
        %v3149 = vadd.f32 %v3148, %v3054
        %v3150 = vadd.f32 %v3149, %v3055
        %v3151 = vadd.f32 %v3150, %v3056
        %v3152 = vadd.f32 %v3151, %v3057
        %v3153 = vadd.f32 %v3152, %v3058
        %v3154 = vadd.f32 %v3153, %v3059
        %v3155 = vadd.f32 %v3154, %v3060
        %v3156 = vadd.f32 %v3155, %v3061
        %v3157 = vadd.f32 %v3156, %v3062
        %v3158 = vadd.f32 %v3157, %v3063
        %v3159 = vadd.f32 %v3158, %v3064
        %v3160 = vadd.f32 %v3159, %v3065
        %v3161 = vadd.f32 %v3160, %v3066
        %v3162 = vadd.f32 %v3161, %v3067
        %v3163 = vadd.f32 %v3162, %v3068
        %v3164 = vadd.f32 %v3163, %v3069
        %v3165 = vadd.f32 %v3164, %v3070
        %v3166 = vadd.f32 %v3165, %v3071
        %v3167 = vadd.f32 %v3166, %v3072
        %v3168 = vadd.f32 %v3167, %v3073
        %v3169 = vadd.f32 %v3168, %v3074
        %v3170 = vadd.f32 %v3169, %v3075
        %v3171 = vadd.f32 %v3170, %v3076
        %v3172 = vadd.f32 %v3171, %v3077
        %v3173 = vadd.f32 %v3172, %v3078
        %v3174 = vadd.f32 %v2886, %v3173
        %3175 = vst [vmem:[%s2885] sm:$0xff] %v3174
        // Predicated region
        $region113: #{svm_forward.1} parent=99 // pred_check
          %p3176 = pneg %p1811
        $region114: #{svm_forward.1} parent=99 // pred_check_branch
          %3178 = sbr.rel (%p3176) target = $region116
        $region115: #{svm_forward.1} parent=99 // pred_region
          %v3179 = vld [vmem:[#allocation2] sm:$0xff]
          %v3180 = vld [vmem:[#allocation2 + $0x8] sm:$0xff]
          %v3181 = vld [vmem:[#allocation2 + $0x10] sm:$0xff]
          %v3182 = vld [vmem:[#allocation2 + $0x18] sm:$0xff]
          %3183 = vadd.xlane.f32.xlu0 %v3179
          %v3184 = vpop.xlane.xlu0 %3183
          %3185 = vadd.xlane.f32.xlu0 %v3180
          %v3186 = vpop.xlane.xlu0 %3185
          %3187 = vadd.xlane.f32.xlu0 %v3181
          %v3188 = vpop.xlane.xlu0 %3187
          %3189 = vadd.xlane.f32.xlu0 %v3182
          %v3190 = vpop.xlane.xlu0 %3189
          %v3195 = vlaneseq
          %v3196 = vand.u32 %v3195, 127
          %v3197 = vperm.slane %v3184, %v3196
          %v3198 = vperm.slane %v3186, %v3196
          %v3199 = vperm.slane %v3188, %v3196
          %v3200 = vperm.slane %v3190, %v3196
          %vm3201 = vcmask 1041409
          %v3202 = vsel %vm3201, %v3198, %v3197
          %v3203 = vsel %vm3201, %v3200, %v3199
          %vm3206 = vcmask 58368
          %v3207 = vsel %vm3206, %v3202, 0.0
          %3208 = vadd.xlane.f32.xlu0 %v3207
          %v3209 = vpop.xlane.xlu0 %3208
          %v3210 = vsel %vm3206, %v3203, 0.0
          %3211 = vadd.xlane.f32.xlu0 %v3210
          %v3212 = vpop.xlane.xlu0 %3211
          %p3213 = scmp.eq.s32.totalorder %s18, 0
          %v3214 = vld [vmem:[%s2] sm:$0x1]
          %s3215 = scalar_select %p3213, 1, 0
          %v3216 = vstv %s3215
          %vm3217 = vcmp.eq.s32.totalorder %v3216, 1
          %v3218 = vsel %vm3217, %v3214, 0.0
          %v3220 = vperm.slane %v3218, 0
          %v3221 = vlaneseq
          %v3222 = vshrl.u32 %v3221, 7
          %3224 = vset.pattern.permute.xlu0 %v3222
          %3225 = vperm.xlu0 %3224, %v3220
          %v3226 = vpop.permute.xlu0 %3225
          %v3228 = vadd.f32 %v3209, %v3226
          %v3229 = vadd.f32 %v3212, %v3226
          %3232 = vset.pattern.permute.xlu0 0
          %3233 = vperm.xlu0 %3232, %v3228
          %v3234 = vpop.permute.xlu0 %3233
          %3235 = vset.pattern.permute.xlu0 0
          %3236 = vperm.xlu0 %3235, %v3229
          %v3237 = vpop.permute.xlu0 %3236
          %v3238 = vperm.slane %v3234, %v3196
          %v3239 = vperm.slane %v3237, %v3196
          %v3240 = vsel %vm3201, %v3239, %v3238
          %vm3242 = vcmask 9216
          %3243 = vst.msk [vmem:[%s1810] sm:$0x3] %vm3242, %v3240
        $region116: #{svm_forward.1} parent=99 // pred_fallthru
          _
        %p3244 = scmp.lt.s32.totalorder %s18, 1
        %s3245 = scalar_select %p3244, %s18, 1
        %s3246 = smul.addr %s3245, 2
        %s3247 = scalar_lea.vmem %s3, %s3246
        // Predicated region
        $region117: #{svm_forward.1} parent=99 // pred_check
          %p3248 = pneg %p121
        $region118: #{svm_forward.1} parent=99 // pred_check_branch
          %3250 = sbr.rel (%p3248) target = $region120
        $region119: #{svm_forward.1} parent=99 // pred_region
          _
        $region120: #{svm_forward.1} parent=99 // pred_fallthru
          _
      $region100: #{svm_forward.1} parent=5 // pred_fallthru
        _
      %p3251 = scmp.le.s32.totalorder 2, %s9
      // Predicated region
      $region121: #{svm_forward.1} parent=5 // pred_check
        %p3252 = pneg %p3251
      $region122: #{svm_forward.1} parent=5 // pred_check_branch
        %3254 = sbr.rel (%p3252) target = $region124
      $region123: #{svm_forward.1} parent=5 // pred_region
        %s3255 = ssub.s32 %s9, 2
        // Predicated region
        $region125: #{svm_forward.1} parent=123 // pred_check
          %p3256 = pneg %p127
        $region126: #{svm_forward.1} parent=123 // pred_check_branch
          %3258 = sbr.rel (%p3256) target = $region128
        $region127: #{svm_forward.1} parent=123 // pred_region
          %p3259 = scmp.lt.s32.totalorder %s20, 1
          %s3260 = scalar_select %p3259, %s20, 1
          %s3261 = smul.addr %s3260, 2
          %s3262 = scalar_lea.vmem %s3, %s3261
        $region128: #{svm_forward.1} parent=123 // pred_fallthru
          _
      $region124: #{svm_forward.1} parent=5 // pred_fallthru
        _
    $region6: #{svm_forward.1} parent=1 // loop_footer
      %s13 = sadd.s32 1, %s9
    $region7: #{svm_forward.1} parent=1 // loop_footer_branch
      %8 = sbr.rel target = $region3
    $region8: #{svm_forward.1} parent=1 // loop_exit
      _

</llo_original>
